<compile_context>
chip_gen: v5e
topology: v5e:2x2
jax: 0.10.0
libtpu: 0.0.40
codegen_flags: <defaults>
</compile_context>

<pallas_src>
import jax
import jax.numpy as jnp
from jax.experimental import pallas as pl
from jax.experimental.pallas import tpu as pltpu


def _round_up(v, m):
    return ((v + m - 1) // m) * m


def _disc_kernel(x_ref, w1_ref, b1_ref, w2_ref, b2_ref, w3_ref, b3_ref, out_ref):
    x = x_ref[...]                                          # (TB, 896) bf16

    # --- Linear(784 -> 512) + LeakyReLU(0.2) ---  (Dropout = identity, eval)
    h1 = jnp.dot(x, w1_ref[...], preferred_element_type=jnp.float32) + b1_ref[...]
    h1 = jnp.maximum(h1, 0.2 * h1)

    # --- Linear(512 -> 256) with folded BatchNorm + LeakyReLU(0.2) ---
    h2 = jnp.dot(h1.astype(jnp.bfloat16), w2_ref[...],
                 preferred_element_type=jnp.float32) + b2_ref[...]
    h2 = jnp.maximum(h2, 0.2 * h2)

    # --- Linear(256 -> 1) + Sigmoid, packed lane-dense ---
    # w3 column is replicated across all 128 MXU lanes, so
    # logits[r, c] == logit(row r) for every lane c.
    logits = jnp.dot(h2.astype(jnp.bfloat16), w3_ref[...],
                     preferred_element_type=jnp.float32) + b3_ref[...]   # (TB, 128)

    # Pack: packed[a, c] = logit(row a*128 + c).  Split only the sublane dim
    # (layout-preserving reshape), mask the diagonal of each 128x128 block,
    # and reduce over sublanes (VALU/XLU filler slots, tiny vs MXU work).
    tb = logits.shape[0]
    g = tb // 128
    l3 = logits.reshape(g, 128, 128)
    rows = jax.lax.broadcasted_iota(jnp.int32, (128, 128), 0)
    cols = jax.lax.broadcasted_iota(jnp.int32, (128, 128), 1)
    diag = rows == cols
    packed = jnp.sum(jnp.where(diag[None, :, :], l3, 0.0), axis=1)       # (g, 128)

    # Sigmoid only on the packed block (128x less EUP work than a padded slab).
    out_ref[...] = jax.nn.sigmoid(packed)


def discriminator_forward(img, params, *, tb_cap=2048):
    """img: (B, 1, 28, 28) float32 (NCHW). Returns (B, 1) validity in [0, 1]."""
    B = img.shape[0]
    x_flat = img.reshape(B, -1)                    # == img.view(B, -1)
    d_in = x_flat.shape[1]

    (w1, b1, w2, b2, gamma, beta, run_mean, run_var, w3, b3) = params
    out_dim = w3.shape[1]
    assert out_dim == 1, "packed-output path assumes the Discriminator's single logit"

    # Fold eval-mode BatchNorm1d (running stats, eps=1e-5) into Linear #2.
    s = gamma * jax.lax.rsqrt(run_var + 1e-5)      # (1, 256)
    w2f = (w2 * s).astype(jnp.bfloat16)
    b2f = (b2 - run_mean) * s + beta               # (1, 256) f32

    # Layer-1: pad the input-feature dim 784 -> 896 (lane-dense loads).
    d_pad = _round_up(d_in, 128)
    w1p = jnp.pad(w1, ((0, d_pad - d_in), (0, 0))).astype(jnp.bfloat16)

    # Layer-3: replicate the single output column across 128 lanes so the
    # kernel can pack the output lane-dense.
    w3p = jnp.tile(w3, (1, 128)).astype(jnp.bfloat16)       # (256, 128)
    b3p = jnp.tile(b3, (1, 128)).astype(jnp.float32)        # (1, 128)

    # Batch tile: multiple of 128 (for the packed-output reshape), >= 2 grid
    # steps whenever B > 128 so both v7x TensorCores get work, capped so the
    # per-step VMEM footprint stays inside the default scoped window.
    tb = min(tb_cap, max(128, _round_up(-(-B // 2), 128)))
    b_pad = _round_up(B, tb)

    # Cast to bf16 BEFORE a single merged pad: one cheap pass over the input.
    x = jnp.pad(x_flat.astype(jnp.bfloat16),
                ((0, b_pad - B), (0, d_pad - d_in)))

    def _const(arr):
        # Resident weights/biases: full-array block, constant index_map.
        return pl.BlockSpec(arr.shape, lambda i: (0, 0))

    flops = 2 * b_pad * (d_pad * 512 + 512 * 256 + 256 * 128)
    bytes_accessed = (x.size * 2 + (w1p.size + w2f.size + w3p.size) * 2
                      + (b1.size + b2f.size + b3p.size) * 4 + b_pad * 4)

    out = pl.pallas_call(
        _disc_kernel,
        out_shape=jax.ShapeDtypeStruct((b_pad // tb, tb // 128, 128), jnp.float32),
        grid=(b_pad // tb,),
        in_specs=[
            pl.BlockSpec((tb, d_pad), lambda i: (i, 0)),    # streamed x tile
            _const(w1p), _const(b1),
            _const(w2f), _const(b2f),
            _const(w3p), _const(b3p),
        ],
        out_specs=pl.BlockSpec((None, tb // 128, 128), lambda i: (i, 0, 0)),
        compiler_params=pltpu.CompilerParams(
            dimension_semantics=("parallel",)),
        cost_estimate=pl.CostEstimate(
            flops=flops, bytes_accessed=bytes_accessed, transcendentals=b_pad),
    )(x, w1p, b1, w2f, b2f, w3p, b3p)

    # Packed (b_pad//tb, tb//128, 128) probabilities -> (B, 1); a row-major
    # flatten recovers batch order exactly; padded rows are sliced off.
    return out.reshape(b_pad)[:B].reshape(B, out_dim)


def _reference_forward(img, params):
    """Pure-JAX f32 reference of the eval-mode PyTorch forward."""
    (w1, b1, w2, b2, gamma, beta, run_mean, run_var, w3, b3) = params
    x = img.reshape(img.shape[0], -1).astype(jnp.float32)
    h1 = x @ w1 + b1
    h1 = jnp.where(h1 >= 0, h1, 0.2 * h1)
    h2 = h1 @ w2 + b2
    h2 = (h2 - run_mean) * (gamma * jax.lax.rsqrt(run_var + 1e-5)) + beta
    h2 = jnp.where(h2 >= 0, h2, 0.2 * h2)
    return jax.nn.sigmoid(h2 @ w3 + b3)


def init_params(key, img_size=28, output_dim=1):
    """Deterministic init mirroring PyTorch nn.Linear / nn.BatchNorm1d defaults.

    Linear weights are stored already transposed as (in, out)."""
    d_in = img_size * img_size

    def linear(key, fan_in, fan_out):
        k_w, k_b = jax.random.split(key)
        bound = 1.0 / jnp.sqrt(fan_in)
        w = jax.random.uniform(k_w, (fan_in, fan_out), jnp.float32, -bound, bound)
        b = jax.random.uniform(k_b, (1, fan_out), jnp.float32, -bound, bound)
        return w, b

    k1, k2, k3 = jax.random.split(key, 3)
    w1, b1 = linear(k1, d_in, 512)
    w2, b2 = linear(k2, 512, 256)
    w3, b3 = linear(k3, 256, output_dim)

    gamma = jnp.ones((1, 256), jnp.float32)
    beta = jnp.zeros((1, 256), jnp.float32)
    run_mean = jnp.zeros((1, 256), jnp.float32)
    run_var = jnp.ones((1, 256), jnp.float32)

    return (w1, b1, w2, b2, gamma, beta, run_mean, run_var, w3, b3)


if __name__ == "__main__":
    key = jax.random.PRNGKey(0)
    k_img, k_params = jax.random.split(key)

    B, C, H, W = 8, 1, 28, 28
    img = jax.random.normal(k_img, (B, C, H, W), jnp.float32)

    params = init_params(k_params, img_size=H, output_dim=1)

    validity = discriminator_forward(img, params)
    validity = jax.block_until_ready(validity)

    assert validity.shape == (B, 1)
    assert bool(jnp.all((validity >= 0.0) & (validity <= 1.0)))

    ref = _reference_forward(img, params)
    assert bool(jnp.allclose(validity, ref, atol=2e-2)), \
        f"max abs diff {float(jnp.max(jnp.abs(validity - ref)))}"

    print("KERNEL_OK")
</pallas_src>

<mosaic_0001>
module attributes {stable_mosaic.version = 11 : i64} {
  func.func @_disc_kernel(%arg0: i32, %arg1: memref<128x896xbf16, #tpu.memory_space<vmem>>, %arg2: memref<896x512xbf16, #tpu.memory_space<vmem>>, %arg3: memref<1x512xf32, #tpu.memory_space<vmem>>, %arg4: memref<512x256xbf16, #tpu.memory_space<vmem>>, %arg5: memref<1x256xf32, #tpu.memory_space<vmem>>, %arg6: memref<256x128xbf16, #tpu.memory_space<vmem>>, %arg7: memref<1x128xf32, #tpu.memory_space<vmem>>, %arg8: memref<1x1x128xf32, #tpu.memory_space<vmem>>) attributes {dimension_semantics = [#tpu.dimension_semantics<parallel>], iteration_bounds = array<i64: 1>, scalar_prefetch = 0 : i64, scratch_operands = 0 : i64, tpu.core_type = #tpu.core_type<tc>, window_params = [{transform_indices = @transform_0, window_bounds = array<i64: 128, 896>}, {pipeline_mode = #tpu.pipeline_mode<synchronous>, transform_indices = @transform_1, window_bounds = array<i64: 896, 512>}, {pipeline_mode = #tpu.pipeline_mode<synchronous>, transform_indices = @transform_2, window_bounds = array<i64: 1, 512>}, {pipeline_mode = #tpu.pipeline_mode<synchronous>, transform_indices = @transform_3, window_bounds = array<i64: 512, 256>}, {pipeline_mode = #tpu.pipeline_mode<synchronous>, transform_indices = @transform_4, window_bounds = array<i64: 1, 256>}, {pipeline_mode = #tpu.pipeline_mode<synchronous>, transform_indices = @transform_5, window_bounds = array<i64: 256, 128>}, {pipeline_mode = #tpu.pipeline_mode<synchronous>, transform_indices = @transform_6, window_bounds = array<i64: 1, 128>}, {transform_indices = @transform_7, window_bounds = array<i64: 1, 1, 128>}]} {
    %c0 = arith.constant 0 : index
    %c0_0 = arith.constant 0 : index
    %0 = vector.load %arg1[%c0, %c0_0] : memref<128x896xbf16, #tpu.memory_space<vmem>>, vector<128x896xbf16>
    %c0_1 = arith.constant 0 : index
    %c0_2 = arith.constant 0 : index
    %1 = vector.load %arg2[%c0_1, %c0_2] : memref<896x512xbf16, #tpu.memory_space<vmem>>, vector<896x512xbf16>
    %cst = arith.constant dense<0.000000e+00> : vector<128x512xf32>
    %2 = tpu.matmul %0, %1, %cst {dimension_numbers = #tpu.dot_dimension_numbers<[1], [0], [0], [1], [0, 0, 1, 1], [], []>} : vector<128x896xbf16>, vector<896x512xbf16>, vector<128x512xf32> -> vector<128x512xf32>
    %c0_3 = arith.constant 0 : index
    %c0_4 = arith.constant 0 : index
    %3 = vector.load %arg3[%c0_3, %c0_4] : memref<1x512xf32, #tpu.memory_space<vmem>>, vector<1x512xf32>
    %4 = vector.broadcast %3 : vector<1x512xf32> to vector<128x512xf32>
    %5 = arith.addf %2, %4 : vector<128x512xf32>
    %cst_5 = arith.constant 2.000000e-01 : f32
    %6 = vector.broadcast %cst_5 : f32 to vector<128x512xf32>
    %7 = arith.mulf %6, %5 : vector<128x512xf32>
    %8 = arith.maximumf %5, %7 : vector<128x512xf32>
    %9 = arith.truncf %8 : vector<128x512xf32> to vector<128x512xbf16>
    %c0_6 = arith.constant 0 : index
    %c0_7 = arith.constant 0 : index
    %10 = vector.load %arg4[%c0_6, %c0_7] : memref<512x256xbf16, #tpu.memory_space<vmem>>, vector<512x256xbf16>
    %cst_8 = arith.constant dense<0.000000e+00> : vector<128x256xf32>
    %11 = tpu.matmul %9, %10, %cst_8 {dimension_numbers = #tpu.dot_dimension_numbers<[1], [0], [0], [1], [0, 0, 1, 1], [], []>} : vector<128x512xbf16>, vector<512x256xbf16>, vector<128x256xf32> -> vector<128x256xf32>
    %c0_9 = arith.constant 0 : index
    %c0_10 = arith.constant 0 : index
    %12 = vector.load %arg5[%c0_9, %c0_10] : memref<1x256xf32, #tpu.memory_space<vmem>>, vector<1x256xf32>
    %13 = vector.broadcast %12 : vector<1x256xf32> to vector<128x256xf32>
    %14 = arith.addf %11, %13 : vector<128x256xf32>
    %cst_11 = arith.constant 2.000000e-01 : f32
    %15 = vector.broadcast %cst_11 : f32 to vector<128x256xf32>
    %16 = arith.mulf %15, %14 : vector<128x256xf32>
    %17 = arith.maximumf %14, %16 : vector<128x256xf32>
    %18 = arith.truncf %17 : vector<128x256xf32> to vector<128x256xbf16>
    %c0_12 = arith.constant 0 : index
    %c0_13 = arith.constant 0 : index
    %19 = vector.load %arg6[%c0_12, %c0_13] : memref<256x128xbf16, #tpu.memory_space<vmem>>, vector<256x128xbf16>
    %cst_14 = arith.constant dense<0.000000e+00> : vector<128x128xf32>
    %20 = tpu.matmul %18, %19, %cst_14 {dimension_numbers = #tpu.dot_dimension_numbers<[1], [0], [0], [1], [0, 0, 1, 1], [], []>} : vector<128x256xbf16>, vector<256x128xbf16>, vector<128x128xf32> -> vector<128x128xf32>
    %c0_15 = arith.constant 0 : index
    %c0_16 = arith.constant 0 : index
    %21 = vector.load %arg7[%c0_15, %c0_16] : memref<1x128xf32, #tpu.memory_space<vmem>>, vector<1x128xf32>
    %22 = vector.broadcast %21 : vector<1x128xf32> to vector<128x128xf32>
    %23 = arith.addf %20, %22 : vector<128x128xf32>
    %24 = vector.shape_cast %23 : vector<128x128xf32> to vector<1x128x128xf32>
    %25 = tpu.iota {dimensions = array<i32: 0>} : vector<128x128xi32>
    %26 = tpu.iota {dimensions = array<i32: 1>} : vector<128x128xi32>
    %27 = arith.cmpi eq, %25, %26 : vector<128x128xi32>
    %28 = vector.shape_cast %27 : vector<128x128xi1> to vector<1x128x128xi1>
    %cst_17 = arith.constant 0.000000e+00 : f32
    %29 = vector.broadcast %cst_17 : f32 to vector<1x128x128xf32>
    %30 = arith.select %28, %24, %29 : vector<1x128x128xi1>, vector<1x128x128xf32>
    %cst_18 = arith.constant dense<0.000000e+00> : vector<1x128xf32>
    %31 = vector.multi_reduction <add>, %30, %cst_18 [1] : vector<1x128x128xf32> to vector<1x128xf32>
    %32 = arith.negf %31 : vector<1x128xf32>
    %33 = math.exp %32 : vector<1x128xf32>
    %cst_19 = arith.constant 1.000000e+00 : f32
    %34 = vector.broadcast %cst_19 : f32 to vector<1x128xf32>
    %35 = arith.addf %34, %33 : vector<1x128xf32>
    %36 = arith.divf %34, %35 : vector<1x128xf32>
    %c0_20 = arith.constant 0 : index
    %c0_21 = arith.constant 0 : index
    %c0_22 = arith.constant 0 : index
    %37 = vector.load %arg8[%c0_20, %c0_21, %c0_22] : memref<1x1x128xf32, #tpu.memory_space<vmem>>, vector<1x1x128xf32>
    %38 = vector.shape_cast %37 : vector<1x1x128xf32> to vector<1x128xf32>
    %39 = vector.shape_cast %36 : vector<1x128xf32> to vector<1x1x128xf32>
    tpu.vector_store %arg8[%c0_20, %c0_21, %c0_22], %39 {strides = array<i32>} : memref<1x1x128xf32, #tpu.memory_space<vmem>>, vector<1x1x128xf32>,
    return
  }
  func.func @transform_0(%arg0: i32) -> (i32, i32) {
    %c0_i32 = arith.constant 0 : i32
    %c0_i32_0 = arith.constant 0 : i32
    return %arg0, %c0_i32 : i32, i32
  }
  func.func @transform_1(%arg0: i32) -> (i32, i32) {
    %c0_i32 = arith.constant 0 : i32
    %c0_i32_0 = arith.constant 0 : i32
    %c0_i32_1 = arith.constant 0 : i32
    return %c0_i32, %c0_i32_0 : i32, i32
  }
  func.func @transform_2(%arg0: i32) -> (i32, i32) {
    %c0_i32 = arith.constant 0 : i32
    %c0_i32_0 = arith.constant 0 : i32
    %c0_i32_1 = arith.constant 0 : i32
    return %c0_i32, %c0_i32_0 : i32, i32
  }
  func.func @transform_3(%arg0: i32) -> (i32, i32) {
    %c0_i32 = arith.constant 0 : i32
    %c0_i32_0 = arith.constant 0 : i32
    %c0_i32_1 = arith.constant 0 : i32
    return %c0_i32, %c0_i32_0 : i32, i32
  }
  func.func @transform_4(%arg0: i32) -> (i32, i32) {
    %c0_i32 = arith.constant 0 : i32
    %c0_i32_0 = arith.constant 0 : i32
    %c0_i32_1 = arith.constant 0 : i32
    return %c0_i32, %c0_i32_0 : i32, i32
  }
  func.func @transform_5(%arg0: i32) -> (i32, i32) {
    %c0_i32 = arith.constant 0 : i32
    %c0_i32_0 = arith.constant 0 : i32
    %c0_i32_1 = arith.constant 0 : i32
    return %c0_i32, %c0_i32_0 : i32, i32
  }
  func.func @transform_6(%arg0: i32) -> (i32, i32) {
    %c0_i32 = arith.constant 0 : i32
    %c0_i32_0 = arith.constant 0 : i32
    %c0_i32_1 = arith.constant 0 : i32
    return %c0_i32, %c0_i32_0 : i32, i32
  }
  func.func @transform_7(%arg0: i32) -> (i32, i32, i32) {
    %c0_i32 = arith.constant 0 : i32
    %c0_i32_0 = arith.constant 0 : i32
    %c0_i32_1 = arith.constant 0 : i32
    return %arg0, %c0_i32, %c0_i32_0 : i32, i32, i32
  }
}

</mosaic_0001>

<llo_original>
// kernel: tpu_custom_call.1
$region0: #{tpu_custom_call.1}
  #allocation0 [shape = 'u32[]', space=smem, size = 0x4, offset = 0x4, fixed_abs, tag = 'smem constant byte address 0x4 - core index']
  #allocation1 [shape = 'u32[72,128]{1,0:T(1,128)}', space=vmem, size = 0x9000, scoped, tag = 'internal scratch']
  %s0 = inlined_call_operand.hbm [shape: bf16[128,896], index: 0, kind: input, shape index: {}]
  %s1 = inlined_call_operand.hbm [shape: bf16[896,512], index: 1, kind: input, shape index: {}]
  %s2 = inlined_call_operand.hbm [shape: f32[1,512], index: 2, kind: input, shape index: {}]
  %s3 = inlined_call_operand.hbm [shape: bf16[512,256], index: 3, kind: input, shape index: {}]
  %s4 = inlined_call_operand.vmem [shape: f32[1,256], index: 4, kind: input, shape index: {}]
  %s5 = inlined_call_operand.hbm [shape: bf16[256,128], index: 5, kind: input, shape index: {}]
  %s6 = inlined_call_operand.vmem [shape: f32[1,128], index: 6, kind: input, shape index: {}]
  %s7 = inlined_call_operand.hbm [shape: f32[1,1,128], index: 7, kind: output, shape index: {}]
  %s8 = sld [smem:[#allocation0]]
  $region58: #{tpu_custom_call.1} parent=0
    _
  %s10 = ssub.s32 1, %s8
  %s11 = scalar_select 0, %s10, %s8
  $region1: #{tpu_custom_call.1} parent=0
    #allocation2 [shape = 'u8[229376]{0}', space=vmem, size = 0x38000, scoped, tag = 'input window, operand 0, single buffered']
    #allocation3 [shape = 's32[1]{0}', space=sflag, size = 0x4, scoped, tag = 'scoped memory for tpu_custom_call.1']
    #allocation4 [shape = 's32[1]{0}', space=sflag, size = 0x4, scoped, tag = 'scoped memory for tpu_custom_call.1']
    #allocation5 [shape = 'u8[917504]{0}', space=vmem, size = 0xe0000, scoped, tag = 'input window, operand 1, single buffered']
    #allocation6 [shape = 's32[1]{0}', space=sflag, size = 0x4, scoped, tag = 'scoped memory for tpu_custom_call.1']
    #allocation7 [shape = 'u8[2048]{0}', space=vmem, size = 0x800, scoped, tag = 'input window, operand 2, single buffered']
    #allocation8 [shape = 'u8[262144]{0}', space=vmem, size = 0x40000, scoped, tag = 'input window, operand 3, single buffered']
    #allocation9 [shape = 's32[1]{0}', space=sflag, size = 0x4, scoped, tag = 'scoped memory for tpu_custom_call.1']
    #allocation10 [shape = 'u8[65536]{0}', space=vmem, size = 0x10000, scoped, tag = 'input window, operand 5, single buffered']
    #allocation11 [shape = 'u8[512]{0}', space=vmem, size = 0x400, scoped, tag = 'output window, operand 0, single buffered']
    %12 = vsyncpa [#allocation3], 0
    %13 = vsyncpa [#allocation6], 0
    %14 = vsyncpa [#allocation9], 0
    %15 = vsyncpa [#allocation4], 0
    // Predicated region
    $region2: #{tpu_custom_call.1} parent=1 // pred_check
      _
    $region3: #{tpu_custom_call.1} parent=1 // pred_check_branch
      %17 = sbr.rel (0) target = $region5
    $region4: #{tpu_custom_call.1} parent=1 // pred_region
      %19 = vsyncadd [#allocation3], 0
      %s20 = sshll.u32 %s0, 4
      %s21 = int_to_ptr.hbm [resolvable:$true] %s20
      %s22 = sshll.u32 [#allocation2], 4
      %s23 = int_to_ptr.vmem [resolvable:$true] %s22
      %28 = dma.hbm_to_vmem [thread:$0]  %s21, 7168, %s23, [#allocation3], 448, 448, 28
    $region5: #{tpu_custom_call.1} parent=1 // pred_fallthru
      _
    // Predicated region
    $region6: #{tpu_custom_call.1} parent=1 // pred_check
      _
    $region7: #{tpu_custom_call.1} parent=1 // pred_check_branch
      %30 = sbr.rel (0) target = $region9
    $region8: #{tpu_custom_call.1} parent=1 // pred_region
      %32 = vsyncadd [#allocation6], 0
      %s33 = sshll.u32 %s1, 4
      %s34 = int_to_ptr.hbm [resolvable:$true] %s33
      %s35 = sshll.u32 [#allocation5], 4
      %s36 = int_to_ptr.vmem [resolvable:$true] %s35
      %41 = dma.hbm_to_vmem [thread:$0]  %s34, 28672, %s36, [#allocation6], 256, 256, 16
    $region9: #{tpu_custom_call.1} parent=1 // pred_fallthru
      _
    // Predicated region
    $region10: #{tpu_custom_call.1} parent=1 // pred_check
      _
    $region11: #{tpu_custom_call.1} parent=1 // pred_check_branch
      %43 = sbr.rel (0) target = $region13
    $region12: #{tpu_custom_call.1} parent=1 // pred_region
      %45 = vsyncadd [#allocation6], 0
      %s47 = sshll.u32 %s2, 4
      %s48 = int_to_ptr.hbm [resolvable:$true] %s47
      %s49 = sshll.u32 [#allocation7], 4
      %s50 = int_to_ptr.vmem [resolvable:$true] %s49
      %52 = dma.hbm_to_vmem [thread:$0]  %s48, 64, %s50, [#allocation6]
    $region13: #{tpu_custom_call.1} parent=1 // pred_fallthru
      _
    // Predicated region
    $region14: #{tpu_custom_call.1} parent=1 // pred_check
      _
    $region15: #{tpu_custom_call.1} parent=1 // pred_check_branch
      %54 = sbr.rel (0) target = $region17
    $region16: #{tpu_custom_call.1} parent=1 // pred_region
      %56 = vsyncadd [#allocation9], 0
      %s57 = sshll.u32 %s3, 4
      %s58 = int_to_ptr.hbm [resolvable:$true] %s57
      %s59 = sshll.u32 [#allocation8], 4
      %s60 = int_to_ptr.vmem [resolvable:$true] %s59
      %65 = dma.hbm_to_vmem [thread:$0]  %s58, 8192, %s60, [#allocation9], 128, 128, 8
    $region17: #{tpu_custom_call.1} parent=1 // pred_fallthru
      _
    // Predicated region
    $region18: #{tpu_custom_call.1} parent=1 // pred_check
      _
    $region19: #{tpu_custom_call.1} parent=1 // pred_check_branch
      %67 = sbr.rel (0) target = $region21
    $region20: #{tpu_custom_call.1} parent=1 // pred_region
      _
    $region21: #{tpu_custom_call.1} parent=1 // pred_fallthru
      _
    // Predicated region
    $region22: #{tpu_custom_call.1} parent=1 // pred_check
      _
    $region23: #{tpu_custom_call.1} parent=1 // pred_check_branch
      %69 = sbr.rel (0) target = $region25
    $region24: #{tpu_custom_call.1} parent=1 // pred_region
      %71 = vsyncadd [#allocation9], 0
      %s72 = sshll.u32 %s5, 4
      %s73 = int_to_ptr.hbm [resolvable:$true] %s72
      %s74 = sshll.u32 [#allocation10], 4
      %s75 = int_to_ptr.vmem [resolvable:$true] %s74
      %80 = dma.hbm_to_vmem [thread:$0]  %s73, 2048, %s75, [#allocation9], 64, 64, 4
    $region25: #{tpu_custom_call.1} parent=1 // pred_fallthru
      _
    // Predicated region
    $region26: #{tpu_custom_call.1} parent=1 // pred_check
      _
    $region27: #{tpu_custom_call.1} parent=1 // pred_check_branch
      %82 = sbr.rel (0) target = $region29
    $region28: #{tpu_custom_call.1} parent=1 // pred_region
      _
    $region29: #{tpu_custom_call.1} parent=1 // pred_fallthru
      _
    // Predicated region
    $region30: #{tpu_custom_call.1} parent=1 // pred_check
      _
    $region31: #{tpu_custom_call.1} parent=1 // pred_check_branch
      %84 = sbr.rel (0) target = $region33
    $region32: #{tpu_custom_call.1} parent=1 // pred_region
      %86 = dma.done [#allocation3], 7168
    $region33: #{tpu_custom_call.1} parent=1 // pred_fallthru
      _
    // Predicated region
    $region34: #{tpu_custom_call.1} parent=1 // pred_check
      _
    $region35: #{tpu_custom_call.1} parent=1 // pred_check_branch
      %88 = sbr.rel (0) target = $region37
    $region36: #{tpu_custom_call.1} parent=1 // pred_region
      %90 = dma.done [#allocation6], 28672
    $region37: #{tpu_custom_call.1} parent=1 // pred_fallthru
      _
    // Predicated region
    $region38: #{tpu_custom_call.1} parent=1 // pred_check
      _
    $region39: #{tpu_custom_call.1} parent=1 // pred_check_branch
      %92 = sbr.rel (0) target = $region41
    $region40: #{tpu_custom_call.1} parent=1 // pred_region
      %94 = dma.done [#allocation6], 64
    $region41: #{tpu_custom_call.1} parent=1 // pred_fallthru
      _
    // Predicated region
    $region42: #{tpu_custom_call.1} parent=1 // pred_check
      _
    $region43: #{tpu_custom_call.1} parent=1 // pred_check_branch
      %96 = sbr.rel (0) target = $region45
    $region44: #{tpu_custom_call.1} parent=1 // pred_region
      %98 = dma.done [#allocation9], 8192
    $region45: #{tpu_custom_call.1} parent=1 // pred_fallthru
      _
    // Predicated region
    $region46: #{tpu_custom_call.1} parent=1 // pred_check
      _
    $region47: #{tpu_custom_call.1} parent=1 // pred_check_branch
      %100 = sbr.rel (0) target = $region49
    $region48: #{tpu_custom_call.1} parent=1 // pred_region
      %102 = dma.done [#allocation9], 2048
    $region49: #{tpu_custom_call.1} parent=1 // pred_fallthru
      _
    %v103 = vld [vmem:[#allocation2] sm:$0xff]
    %v104 = vld [vmem:[#allocation2 + $0x8] sm:$0xff]
    %v105 = vld [vmem:[#allocation2 + $0x10] sm:$0xff]
    %v106 = vld [vmem:[#allocation2 + $0x18] sm:$0xf]
    %v107 = vld [vmem:[#allocation2 + $0x1c] sm:$0xff]
    %v108 = vld [vmem:[#allocation2 + $0x24] sm:$0xff]
    %v109 = vld [vmem:[#allocation2 + $0x2c] sm:$0xff]
    %v110 = vld [vmem:[#allocation2 + $0x34] sm:$0xf]
    %v111 = vld [vmem:[#allocation2 + $0x38] sm:$0xff]
    %v112 = vld [vmem:[#allocation2 + $0x40] sm:$0xff]
    %v113 = vld [vmem:[#allocation2 + $0x48] sm:$0xff]
    %v114 = vld [vmem:[#allocation2 + $0x50] sm:$0xf]
    %v115 = vld [vmem:[#allocation2 + $0x54] sm:$0xff]
    %v116 = vld [vmem:[#allocation2 + $0x5c] sm:$0xff]
    %v117 = vld [vmem:[#allocation2 + $0x64] sm:$0xff]
    %v118 = vld [vmem:[#allocation2 + $0x6c] sm:$0xf]
    %v119 = vld [vmem:[#allocation2 + $0x70] sm:$0xff]
    %v120 = vld [vmem:[#allocation2 + $0x78] sm:$0xff]
    %v121 = vld [vmem:[#allocation2 + $0x80] sm:$0xff]
    %v122 = vld [vmem:[#allocation2 + $0x88] sm:$0xf]
    %v123 = vld [vmem:[#allocation2 + $0x8c] sm:$0xff]
    %v124 = vld [vmem:[#allocation2 + $0x94] sm:$0xff]
    %v125 = vld [vmem:[#allocation2 + $0x9c] sm:$0xff]
    %v126 = vld [vmem:[#allocation2 + $0xa4] sm:$0xf]
    %v127 = vld [vmem:[#allocation2 + $0xa8] sm:$0xff]
    %v128 = vld [vmem:[#allocation2 + $0xb0] sm:$0xff]
    %v129 = vld [vmem:[#allocation2 + $0xb8] sm:$0xff]
    %v130 = vld [vmem:[#allocation2 + $0xc0] sm:$0xf]
    %v131 = vld [vmem:[#allocation2 + $0xc4] sm:$0xff]
    %v132 = vld [vmem:[#allocation2 + $0xcc] sm:$0xff]
    %v133 = vld [vmem:[#allocation2 + $0xd4] sm:$0xff]
    %v134 = vld [vmem:[#allocation2 + $0xdc] sm:$0xf]
    %v135 = vld [vmem:[#allocation2 + $0xe0] sm:$0xff]
    %v136 = vld [vmem:[#allocation2 + $0xe8] sm:$0xff]
    %v137 = vld [vmem:[#allocation2 + $0xf0] sm:$0xff]
    %v138 = vld [vmem:[#allocation2 + $0xf8] sm:$0xf]
    %v139 = vld [vmem:[#allocation2 + $0xfc] sm:$0xff]
    %v140 = vld [vmem:[#allocation2 + $0x104] sm:$0xff]
    %v141 = vld [vmem:[#allocation2 + $0x10c] sm:$0xff]
    %v142 = vld [vmem:[#allocation2 + $0x114] sm:$0xf]
    %v143 = vld [vmem:[#allocation2 + $0x118] sm:$0xff]
    %v144 = vld [vmem:[#allocation2 + $0x120] sm:$0xff]
    %v145 = vld [vmem:[#allocation2 + $0x128] sm:$0xff]
    %v146 = vld [vmem:[#allocation2 + $0x130] sm:$0xf]
    %v147 = vld [vmem:[#allocation2 + $0x134] sm:$0xff]
    %v148 = vld [vmem:[#allocation2 + $0x13c] sm:$0xff]
    %v149 = vld [vmem:[#allocation2 + $0x144] sm:$0xff]
    %v150 = vld [vmem:[#allocation2 + $0x14c] sm:$0xf]
    %v151 = vld [vmem:[#allocation2 + $0x150] sm:$0xff]
    %v152 = vld [vmem:[#allocation2 + $0x158] sm:$0xff]
    %v153 = vld [vmem:[#allocation2 + $0x160] sm:$0xff]
    %v154 = vld [vmem:[#allocation2 + $0x168] sm:$0xf]
    %v155 = vld [vmem:[#allocation2 + $0x16c] sm:$0xff]
    %v156 = vld [vmem:[#allocation2 + $0x174] sm:$0xff]
    %v157 = vld [vmem:[#allocation2 + $0x17c] sm:$0xff]
    %v158 = vld [vmem:[#allocation2 + $0x184] sm:$0xf]
    %v159 = vld [vmem:[#allocation2 + $0x188] sm:$0xff]
    %v160 = vld [vmem:[#allocation2 + $0x190] sm:$0xff]
    %v161 = vld [vmem:[#allocation2 + $0x198] sm:$0xff]
    %v162 = vld [vmem:[#allocation2 + $0x1a0] sm:$0xf]
    %v163 = vld [vmem:[#allocation2 + $0x1a4] sm:$0xff]
    %v164 = vld [vmem:[#allocation2 + $0x1ac] sm:$0xff]
    %v165 = vld [vmem:[#allocation2 + $0x1b4] sm:$0xff]
    %v166 = vld [vmem:[#allocation2 + $0x1bc] sm:$0xf]
    %v167 = vld [vmem:[#allocation5] sm:$0xff]
    %v168 = vld [vmem:[#allocation5 + $0x8] sm:$0xff]
    %v169 = vld [vmem:[#allocation5 + $0x10] sm:$0xff]
    %v170 = vld [vmem:[#allocation5 + $0x18] sm:$0xff]
    %v171 = vld [vmem:[#allocation5 + $0x20] sm:$0xff]
    %v172 = vld [vmem:[#allocation5 + $0x28] sm:$0xff]
    %v173 = vld [vmem:[#allocation5 + $0x30] sm:$0xff]
    %v174 = vld [vmem:[#allocation5 + $0x38] sm:$0xff]
    %v175 = vld [vmem:[#allocation5 + $0x40] sm:$0xff]
    %v176 = vld [vmem:[#allocation5 + $0x48] sm:$0xff]
    %v177 = vld [vmem:[#allocation5 + $0x50] sm:$0xff]
    %v178 = vld [vmem:[#allocation5 + $0x58] sm:$0xff]
    %v179 = vld [vmem:[#allocation5 + $0x60] sm:$0xff]
    %v180 = vld [vmem:[#allocation5 + $0x68] sm:$0xff]
    %v181 = vld [vmem:[#allocation5 + $0x70] sm:$0xff]
    %v182 = vld [vmem:[#allocation5 + $0x78] sm:$0xff]
    %v183 = vld [vmem:[#allocation5 + $0x80] sm:$0xff]
    %v184 = vld [vmem:[#allocation5 + $0x88] sm:$0xff]
    %v185 = vld [vmem:[#allocation5 + $0x90] sm:$0xff]
    %v186 = vld [vmem:[#allocation5 + $0x98] sm:$0xff]
    %v187 = vld [vmem:[#allocation5 + $0xa0] sm:$0xff]
    %v188 = vld [vmem:[#allocation5 + $0xa8] sm:$0xff]
    %v189 = vld [vmem:[#allocation5 + $0xb0] sm:$0xff]
    %v190 = vld [vmem:[#allocation5 + $0xb8] sm:$0xff]
    %v191 = vld [vmem:[#allocation5 + $0xc0] sm:$0xff]
    %v192 = vld [vmem:[#allocation5 + $0xc8] sm:$0xff]
    %v193 = vld [vmem:[#allocation5 + $0xd0] sm:$0xff]
    %v194 = vld [vmem:[#allocation5 + $0xd8] sm:$0xff]
    %v195 = vld [vmem:[#allocation5 + $0xe0] sm:$0xff]
    %v196 = vld [vmem:[#allocation5 + $0xe8] sm:$0xff]
    %v197 = vld [vmem:[#allocation5 + $0xf0] sm:$0xff]
    %v198 = vld [vmem:[#allocation5 + $0xf8] sm:$0xff]
    %v199 = vld [vmem:[#allocation5 + $0x100] sm:$0xff]
    %v200 = vld [vmem:[#allocation5 + $0x108] sm:$0xff]
    %v201 = vld [vmem:[#allocation5 + $0x110] sm:$0xff]
    %v202 = vld [vmem:[#allocation5 + $0x118] sm:$0xff]
    %v203 = vld [vmem:[#allocation5 + $0x120] sm:$0xff]
    %v204 = vld [vmem:[#allocation5 + $0x128] sm:$0xff]
    %v205 = vld [vmem:[#allocation5 + $0x130] sm:$0xff]
    %v206 = vld [vmem:[#allocation5 + $0x138] sm:$0xff]
    %v207 = vld [vmem:[#allocation5 + $0x140] sm:$0xff]
    %v208 = vld [vmem:[#allocation5 + $0x148] sm:$0xff]
    %v209 = vld [vmem:[#allocation5 + $0x150] sm:$0xff]
    %v210 = vld [vmem:[#allocation5 + $0x158] sm:$0xff]
    %v211 = vld [vmem:[#allocation5 + $0x160] sm:$0xff]
    %v212 = vld [vmem:[#allocation5 + $0x168] sm:$0xff]
    %v213 = vld [vmem:[#allocation5 + $0x170] sm:$0xff]
    %v214 = vld [vmem:[#allocation5 + $0x178] sm:$0xff]
    %v215 = vld [vmem:[#allocation5 + $0x180] sm:$0xff]
    %v216 = vld [vmem:[#allocation5 + $0x188] sm:$0xff]
    %v217 = vld [vmem:[#allocation5 + $0x190] sm:$0xff]
    %v218 = vld [vmem:[#allocation5 + $0x198] sm:$0xff]
    %v219 = vld [vmem:[#allocation5 + $0x1a0] sm:$0xff]
    %v220 = vld [vmem:[#allocation5 + $0x1a8] sm:$0xff]
    %v221 = vld [vmem:[#allocation5 + $0x1b0] sm:$0xff]
    %v222 = vld [vmem:[#allocation5 + $0x1b8] sm:$0xff]
    %v223 = vld [vmem:[#allocation5 + $0x1c0] sm:$0xff]
    %v224 = vld [vmem:[#allocation5 + $0x1c8] sm:$0xff]
    %v225 = vld [vmem:[#allocation5 + $0x1d0] sm:$0xff]
    %v226 = vld [vmem:[#allocation5 + $0x1d8] sm:$0xff]
    %v227 = vld [vmem:[#allocation5 + $0x1e0] sm:$0xff]
    %v228 = vld [vmem:[#allocation5 + $0x1e8] sm:$0xff]
    %v229 = vld [vmem:[#allocation5 + $0x1f0] sm:$0xff]
    %v230 = vld [vmem:[#allocation5 + $0x1f8] sm:$0xff]
    %v231 = vld [vmem:[#allocation5 + $0x200] sm:$0xff]
    %v232 = vld [vmem:[#allocation5 + $0x208] sm:$0xff]
    %v233 = vld [vmem:[#allocation5 + $0x210] sm:$0xff]
    %v234 = vld [vmem:[#allocation5 + $0x218] sm:$0xff]
    %v235 = vld [vmem:[#allocation5 + $0x220] sm:$0xff]
    %v236 = vld [vmem:[#allocation5 + $0x228] sm:$0xff]
    %v237 = vld [vmem:[#allocation5 + $0x230] sm:$0xff]
    %v238 = vld [vmem:[#allocation5 + $0x238] sm:$0xff]
    %v239 = vld [vmem:[#allocation5 + $0x240] sm:$0xff]
    %v240 = vld [vmem:[#allocation5 + $0x248] sm:$0xff]
    %v241 = vld [vmem:[#allocation5 + $0x250] sm:$0xff]
    %v242 = vld [vmem:[#allocation5 + $0x258] sm:$0xff]
    %v243 = vld [vmem:[#allocation5 + $0x260] sm:$0xff]
    %v244 = vld [vmem:[#allocation5 + $0x268] sm:$0xff]
    %v245 = vld [vmem:[#allocation5 + $0x270] sm:$0xff]
    %v246 = vld [vmem:[#allocation5 + $0x278] sm:$0xff]
    %v247 = vld [vmem:[#allocation5 + $0x280] sm:$0xff]
    %v248 = vld [vmem:[#allocation5 + $0x288] sm:$0xff]
    %v249 = vld [vmem:[#allocation5 + $0x290] sm:$0xff]
    %v250 = vld [vmem:[#allocation5 + $0x298] sm:$0xff]
    %v251 = vld [vmem:[#allocation5 + $0x2a0] sm:$0xff]
    %v252 = vld [vmem:[#allocation5 + $0x2a8] sm:$0xff]
    %v253 = vld [vmem:[#allocation5 + $0x2b0] sm:$0xff]
    %v254 = vld [vmem:[#allocation5 + $0x2b8] sm:$0xff]
    %v255 = vld [vmem:[#allocation5 + $0x2c0] sm:$0xff]
    %v256 = vld [vmem:[#allocation5 + $0x2c8] sm:$0xff]
    %v257 = vld [vmem:[#allocation5 + $0x2d0] sm:$0xff]
    %v258 = vld [vmem:[#allocation5 + $0x2d8] sm:$0xff]
    %v259 = vld [vmem:[#allocation5 + $0x2e0] sm:$0xff]
    %v260 = vld [vmem:[#allocation5 + $0x2e8] sm:$0xff]
    %v261 = vld [vmem:[#allocation5 + $0x2f0] sm:$0xff]
    %v262 = vld [vmem:[#allocation5 + $0x2f8] sm:$0xff]
    %v263 = vld [vmem:[#allocation5 + $0x300] sm:$0xff]
    %v264 = vld [vmem:[#allocation5 + $0x308] sm:$0xff]
    %v265 = vld [vmem:[#allocation5 + $0x310] sm:$0xff]
    %v266 = vld [vmem:[#allocation5 + $0x318] sm:$0xff]
    %v267 = vld [vmem:[#allocation5 + $0x320] sm:$0xff]
    %v268 = vld [vmem:[#allocation5 + $0x328] sm:$0xff]
    %v269 = vld [vmem:[#allocation5 + $0x330] sm:$0xff]
    %v270 = vld [vmem:[#allocation5 + $0x338] sm:$0xff]
    %v271 = vld [vmem:[#allocation5 + $0x340] sm:$0xff]
    %v272 = vld [vmem:[#allocation5 + $0x348] sm:$0xff]
    %v273 = vld [vmem:[#allocation5 + $0x350] sm:$0xff]
    %v274 = vld [vmem:[#allocation5 + $0x358] sm:$0xff]
    %v275 = vld [vmem:[#allocation5 + $0x360] sm:$0xff]
    %v276 = vld [vmem:[#allocation5 + $0x368] sm:$0xff]
    %v277 = vld [vmem:[#allocation5 + $0x370] sm:$0xff]
    %v278 = vld [vmem:[#allocation5 + $0x378] sm:$0xff]
    %v279 = vld [vmem:[#allocation5 + $0x380] sm:$0xff]
    %v280 = vld [vmem:[#allocation5 + $0x388] sm:$0xff]
    %v281 = vld [vmem:[#allocation5 + $0x390] sm:$0xff]
    %v282 = vld [vmem:[#allocation5 + $0x398] sm:$0xff]
    %v283 = vld [vmem:[#allocation5 + $0x3a0] sm:$0xff]
    %v284 = vld [vmem:[#allocation5 + $0x3a8] sm:$0xff]
    %v285 = vld [vmem:[#allocation5 + $0x3b0] sm:$0xff]
    %v286 = vld [vmem:[#allocation5 + $0x3b8] sm:$0xff]
    %v287 = vld [vmem:[#allocation5 + $0x3c0] sm:$0xff]
    %v288 = vld [vmem:[#allocation5 + $0x3c8] sm:$0xff]
    %v289 = vld [vmem:[#allocation5 + $0x3d0] sm:$0xff]
    %v290 = vld [vmem:[#allocation5 + $0x3d8] sm:$0xff]
    %v291 = vld [vmem:[#allocation5 + $0x3e0] sm:$0xff]
    %v292 = vld [vmem:[#allocation5 + $0x3e8] sm:$0xff]
    %v293 = vld [vmem:[#allocation5 + $0x3f0] sm:$0xff]
    %v294 = vld [vmem:[#allocation5 + $0x3f8] sm:$0xff]
    %v295 = vld [vmem:[#allocation5 + $0x400] sm:$0xff]
    %v296 = vld [vmem:[#allocation5 + $0x408] sm:$0xff]
    %v297 = vld [vmem:[#allocation5 + $0x410] sm:$0xff]
    %v298 = vld [vmem:[#allocation5 + $0x418] sm:$0xff]
    %v299 = vld [vmem:[#allocation5 + $0x420] sm:$0xff]
    %v300 = vld [vmem:[#allocation5 + $0x428] sm:$0xff]
    %v301 = vld [vmem:[#allocation5 + $0x430] sm:$0xff]
    %v302 = vld [vmem:[#allocation5 + $0x438] sm:$0xff]
    %v303 = vld [vmem:[#allocation5 + $0x440] sm:$0xff]
    %v304 = vld [vmem:[#allocation5 + $0x448] sm:$0xff]
    %v305 = vld [vmem:[#allocation5 + $0x450] sm:$0xff]
    %v306 = vld [vmem:[#allocation5 + $0x458] sm:$0xff]
    %v307 = vld [vmem:[#allocation5 + $0x460] sm:$0xff]
    %v308 = vld [vmem:[#allocation5 + $0x468] sm:$0xff]
    %v309 = vld [vmem:[#allocation5 + $0x470] sm:$0xff]
    %v310 = vld [vmem:[#allocation5 + $0x478] sm:$0xff]
    %v311 = vld [vmem:[#allocation5 + $0x480] sm:$0xff]
    %v312 = vld [vmem:[#allocation5 + $0x488] sm:$0xff]
    %v313 = vld [vmem:[#allocation5 + $0x490] sm:$0xff]
    %v314 = vld [vmem:[#allocation5 + $0x498] sm:$0xff]
    %v315 = vld [vmem:[#allocation5 + $0x4a0] sm:$0xff]
    %v316 = vld [vmem:[#allocation5 + $0x4a8] sm:$0xff]
    %v317 = vld [vmem:[#allocation5 + $0x4b0] sm:$0xff]
    %v318 = vld [vmem:[#allocation5 + $0x4b8] sm:$0xff]
    %v319 = vld [vmem:[#allocation5 + $0x4c0] sm:$0xff]
    %v320 = vld [vmem:[#allocation5 + $0x4c8] sm:$0xff]
    %v321 = vld [vmem:[#allocation5 + $0x4d0] sm:$0xff]
    %v322 = vld [vmem:[#allocation5 + $0x4d8] sm:$0xff]
    %v323 = vld [vmem:[#allocation5 + $0x4e0] sm:$0xff]
    %v324 = vld [vmem:[#allocation5 + $0x4e8] sm:$0xff]
    %v325 = vld [vmem:[#allocation5 + $0x4f0] sm:$0xff]
    %v326 = vld [vmem:[#allocation5 + $0x4f8] sm:$0xff]
    %v327 = vld [vmem:[#allocation5 + $0x500] sm:$0xff]
    %v328 = vld [vmem:[#allocation5 + $0x508] sm:$0xff]
    %v329 = vld [vmem:[#allocation5 + $0x510] sm:$0xff]
    %v330 = vld [vmem:[#allocation5 + $0x518] sm:$0xff]
    %v331 = vld [vmem:[#allocation5 + $0x520] sm:$0xff]
    %v332 = vld [vmem:[#allocation5 + $0x528] sm:$0xff]
    %v333 = vld [vmem:[#allocation5 + $0x530] sm:$0xff]
    %v334 = vld [vmem:[#allocation5 + $0x538] sm:$0xff]
    %v335 = vld [vmem:[#allocation5 + $0x540] sm:$0xff]
    %v336 = vld [vmem:[#allocation5 + $0x548] sm:$0xff]
    %v337 = vld [vmem:[#allocation5 + $0x550] sm:$0xff]
    %v338 = vld [vmem:[#allocation5 + $0x558] sm:$0xff]
    %v339 = vld [vmem:[#allocation5 + $0x560] sm:$0xff]
    %v340 = vld [vmem:[#allocation5 + $0x568] sm:$0xff]
    %v341 = vld [vmem:[#allocation5 + $0x570] sm:$0xff]
    %v342 = vld [vmem:[#allocation5 + $0x578] sm:$0xff]
    %v343 = vld [vmem:[#allocation5 + $0x580] sm:$0xff]
    %v344 = vld [vmem:[#allocation5 + $0x588] sm:$0xff]
    %v345 = vld [vmem:[#allocation5 + $0x590] sm:$0xff]
    %v346 = vld [vmem:[#allocation5 + $0x598] sm:$0xff]
    %v347 = vld [vmem:[#allocation5 + $0x5a0] sm:$0xff]
    %v348 = vld [vmem:[#allocation5 + $0x5a8] sm:$0xff]
    %v349 = vld [vmem:[#allocation5 + $0x5b0] sm:$0xff]
    %v350 = vld [vmem:[#allocation5 + $0x5b8] sm:$0xff]
    %v351 = vld [vmem:[#allocation5 + $0x5c0] sm:$0xff]
    %v352 = vld [vmem:[#allocation5 + $0x5c8] sm:$0xff]
    %v353 = vld [vmem:[#allocation5 + $0x5d0] sm:$0xff]
    %v354 = vld [vmem:[#allocation5 + $0x5d8] sm:$0xff]
    %v355 = vld [vmem:[#allocation5 + $0x5e0] sm:$0xff]
    %v356 = vld [vmem:[#allocation5 + $0x5e8] sm:$0xff]
    %v357 = vld [vmem:[#allocation5 + $0x5f0] sm:$0xff]
    %v358 = vld [vmem:[#allocation5 + $0x5f8] sm:$0xff]
    %v359 = vld [vmem:[#allocation5 + $0x600] sm:$0xff]
    %v360 = vld [vmem:[#allocation5 + $0x608] sm:$0xff]
    %v361 = vld [vmem:[#allocation5 + $0x610] sm:$0xff]
    %v362 = vld [vmem:[#allocation5 + $0x618] sm:$0xff]
    %v363 = vld [vmem:[#allocation5 + $0x620] sm:$0xff]
    %v364 = vld [vmem:[#allocation5 + $0x628] sm:$0xff]
    %v365 = vld [vmem:[#allocation5 + $0x630] sm:$0xff]
    %v366 = vld [vmem:[#allocation5 + $0x638] sm:$0xff]
    %v367 = vld [vmem:[#allocation5 + $0x640] sm:$0xff]
    %v368 = vld [vmem:[#allocation5 + $0x648] sm:$0xff]
    %v369 = vld [vmem:[#allocation5 + $0x650] sm:$0xff]
    %v370 = vld [vmem:[#allocation5 + $0x658] sm:$0xff]
    %v371 = vld [vmem:[#allocation5 + $0x660] sm:$0xff]
    %v372 = vld [vmem:[#allocation5 + $0x668] sm:$0xff]
    %v373 = vld [vmem:[#allocation5 + $0x670] sm:$0xff]
    %v374 = vld [vmem:[#allocation5 + $0x678] sm:$0xff]
    %v375 = vld [vmem:[#allocation5 + $0x680] sm:$0xff]
    %v376 = vld [vmem:[#allocation5 + $0x688] sm:$0xff]
    %v377 = vld [vmem:[#allocation5 + $0x690] sm:$0xff]
    %v378 = vld [vmem:[#allocation5 + $0x698] sm:$0xff]
    %v379 = vld [vmem:[#allocation5 + $0x6a0] sm:$0xff]
    %v380 = vld [vmem:[#allocation5 + $0x6a8] sm:$0xff]
    %v381 = vld [vmem:[#allocation5 + $0x6b0] sm:$0xff]
    %v382 = vld [vmem:[#allocation5 + $0x6b8] sm:$0xff]
    %v383 = vld [vmem:[#allocation5 + $0x6c0] sm:$0xff]
    %v384 = vld [vmem:[#allocation5 + $0x6c8] sm:$0xff]
    %v385 = vld [vmem:[#allocation5 + $0x6d0] sm:$0xff]
    %v386 = vld [vmem:[#allocation5 + $0x6d8] sm:$0xff]
    %v387 = vld [vmem:[#allocation5 + $0x6e0] sm:$0xff]
    %v388 = vld [vmem:[#allocation5 + $0x6e8] sm:$0xff]
    %v389 = vld [vmem:[#allocation5 + $0x6f0] sm:$0xff]
    %v390 = vld [vmem:[#allocation5 + $0x6f8] sm:$0xff]
    %v391 = vld [vmem:[#allocation7] sm:$0xf]
    %v393 = vperm.slane %v391, 0
    %v394 = vperm.slane %v391, 1
    %v395 = vperm.slane %v391, 2
    %v396 = vperm.slane %v391, 3
    %v465 = vunpack.c.l.b16 %v103
    %v466 = vunpack.c.h.b16 %v103
    %v467 = vunpack.c.l.b16 %v104
    %v468 = vunpack.c.h.b16 %v104
    %v469 = vunpack.c.l.b16 %v105
    %v470 = vunpack.c.h.b16 %v105
    %v471 = vunpack.c.l.b16 %v106
    %v472 = vunpack.c.l.b16 %v107
    %v473 = vunpack.c.h.b16 %v107
    %v474 = vunpack.c.l.b16 %v108
    %v475 = vunpack.c.h.b16 %v108
    %v476 = vunpack.c.l.b16 %v109
    %v477 = vunpack.c.h.b16 %v109
    %v478 = vunpack.c.l.b16 %v110
    %v479 = vunpack.c.l.b16 %v111
    %v480 = vunpack.c.h.b16 %v111
    %v481 = vunpack.c.l.b16 %v112
    %v482 = vunpack.c.h.b16 %v112
    %v483 = vunpack.c.l.b16 %v113
    %v484 = vunpack.c.h.b16 %v113
    %v485 = vunpack.c.l.b16 %v114
    %v486 = vunpack.c.l.b16 %v115
    %v487 = vunpack.c.h.b16 %v115
    %v488 = vunpack.c.l.b16 %v116
    %v489 = vunpack.c.h.b16 %v116
    %v490 = vunpack.c.l.b16 %v117
    %v491 = vunpack.c.h.b16 %v117
    %v492 = vunpack.c.l.b16 %v118
    %v493 = vunpack.c.l.b16 %v119
    %v494 = vunpack.c.h.b16 %v119
    %v495 = vunpack.c.l.b16 %v120
    %v496 = vunpack.c.h.b16 %v120
    %v497 = vunpack.c.l.b16 %v121
    %v498 = vunpack.c.h.b16 %v121
    %v499 = vunpack.c.l.b16 %v122
    %v500 = vunpack.c.l.b16 %v123
    %v501 = vunpack.c.h.b16 %v123
    %v502 = vunpack.c.l.b16 %v124
    %v503 = vunpack.c.h.b16 %v124
    %v504 = vunpack.c.l.b16 %v125
    %v505 = vunpack.c.h.b16 %v125
    %v506 = vunpack.c.l.b16 %v126
    %v507 = vunpack.c.l.b16 %v127
    %v508 = vunpack.c.h.b16 %v127
    %v509 = vunpack.c.l.b16 %v128
    %v510 = vunpack.c.h.b16 %v128
    %v511 = vunpack.c.l.b16 %v129
    %v512 = vunpack.c.h.b16 %v129
    %v513 = vunpack.c.l.b16 %v130
    %v514 = vunpack.c.l.b16 %v131
    %v515 = vunpack.c.h.b16 %v131
    %v516 = vunpack.c.l.b16 %v132
    %v517 = vunpack.c.h.b16 %v132
    %v518 = vunpack.c.l.b16 %v133
    %v519 = vunpack.c.h.b16 %v133
    %v520 = vunpack.c.l.b16 %v134
    %v521 = vunpack.c.l.b16 %v135
    %v522 = vunpack.c.h.b16 %v135
    %v523 = vunpack.c.l.b16 %v136
    %v524 = vunpack.c.h.b16 %v136
    %v525 = vunpack.c.l.b16 %v137
    %v526 = vunpack.c.h.b16 %v137
    %v527 = vunpack.c.l.b16 %v138
    %v528 = vunpack.c.l.b16 %v139
    %v529 = vunpack.c.h.b16 %v139
    %v530 = vunpack.c.l.b16 %v140
    %v531 = vunpack.c.h.b16 %v140
    %v532 = vunpack.c.l.b16 %v141
    %v533 = vunpack.c.h.b16 %v141
    %v534 = vunpack.c.l.b16 %v142
    %v535 = vunpack.c.l.b16 %v143
    %v536 = vunpack.c.h.b16 %v143
    %v537 = vunpack.c.l.b16 %v144
    %v538 = vunpack.c.h.b16 %v144
    %v539 = vunpack.c.l.b16 %v145
    %v540 = vunpack.c.h.b16 %v145
    %v541 = vunpack.c.l.b16 %v146
    %v542 = vunpack.c.l.b16 %v147
    %v543 = vunpack.c.h.b16 %v147
    %v544 = vunpack.c.l.b16 %v148
    %v545 = vunpack.c.h.b16 %v148
    %v546 = vunpack.c.l.b16 %v149
    %v547 = vunpack.c.h.b16 %v149
    %v548 = vunpack.c.l.b16 %v150
    %v549 = vunpack.c.l.b16 %v151
    %v550 = vunpack.c.h.b16 %v151
    %v551 = vunpack.c.l.b16 %v152
    %v552 = vunpack.c.h.b16 %v152
    %v553 = vunpack.c.l.b16 %v153
    %v554 = vunpack.c.h.b16 %v153
    %v555 = vunpack.c.l.b16 %v154
    %v556 = vunpack.c.l.b16 %v155
    %v557 = vunpack.c.h.b16 %v155
    %v558 = vunpack.c.l.b16 %v156
    %v559 = vunpack.c.h.b16 %v156
    %v560 = vunpack.c.l.b16 %v157
    %v561 = vunpack.c.h.b16 %v157
    %v562 = vunpack.c.l.b16 %v158
    %v563 = vunpack.c.l.b16 %v159
    %v564 = vunpack.c.h.b16 %v159
    %v565 = vunpack.c.l.b16 %v160
    %v566 = vunpack.c.h.b16 %v160
    %v567 = vunpack.c.l.b16 %v161
    %v568 = vunpack.c.h.b16 %v161
    %v569 = vunpack.c.l.b16 %v162
    %v570 = vunpack.c.l.b16 %v163
    %v571 = vunpack.c.h.b16 %v163
    %v572 = vunpack.c.l.b16 %v164
    %v573 = vunpack.c.h.b16 %v164
    %v574 = vunpack.c.l.b16 %v165
    %v575 = vunpack.c.h.b16 %v165
    %v576 = vunpack.c.l.b16 %v166
    %v577 = vpack.c.b16 %v472, %v465
    %v578 = vpack.c.b16 %v473, %v466
    %v579 = vpack.c.b16 %v474, %v467
    %v580 = vpack.c.b16 %v475, %v468
    %v581 = vpack.c.b16 %v476, %v469
    %v582 = vpack.c.b16 %v477, %v470
    %v583 = vpack.c.b16 %v478, %v471
    %v584 = vpack.c.b16 %v486, %v479
    %v585 = vpack.c.b16 %v487, %v480
    %v586 = vpack.c.b16 %v488, %v481
    %v587 = vpack.c.b16 %v489, %v482
    %v588 = vpack.c.b16 %v490, %v483
    %v589 = vpack.c.b16 %v491, %v484
    %v590 = vpack.c.b16 %v492, %v485
    %v591 = vpack.c.b16 %v500, %v493
    %v592 = vpack.c.b16 %v501, %v494
    %v593 = vpack.c.b16 %v502, %v495
    %v594 = vpack.c.b16 %v503, %v496
    %v595 = vpack.c.b16 %v504, %v497
    %v596 = vpack.c.b16 %v505, %v498
    %v597 = vpack.c.b16 %v506, %v499
    %v598 = vpack.c.b16 %v514, %v507
    %v599 = vpack.c.b16 %v515, %v508
    %v600 = vpack.c.b16 %v516, %v509
    %v601 = vpack.c.b16 %v517, %v510
    %v602 = vpack.c.b16 %v518, %v511
    %v603 = vpack.c.b16 %v519, %v512
    %v604 = vpack.c.b16 %v520, %v513
    %v605 = vpack.c.b16 %v528, %v521
    %v606 = vpack.c.b16 %v529, %v522
    %v607 = vpack.c.b16 %v530, %v523
    %v608 = vpack.c.b16 %v531, %v524
    %v609 = vpack.c.b16 %v532, %v525
    %v610 = vpack.c.b16 %v533, %v526
    %v611 = vpack.c.b16 %v534, %v527
    %v612 = vpack.c.b16 %v542, %v535
    %v613 = vpack.c.b16 %v543, %v536
    %v614 = vpack.c.b16 %v544, %v537
    %v615 = vpack.c.b16 %v545, %v538
    %v616 = vpack.c.b16 %v546, %v539
    %v617 = vpack.c.b16 %v547, %v540
    %v618 = vpack.c.b16 %v548, %v541
    %v619 = vpack.c.b16 %v556, %v549
    %v620 = vpack.c.b16 %v557, %v550
    %v621 = vpack.c.b16 %v558, %v551
    %v622 = vpack.c.b16 %v559, %v552
    %v623 = vpack.c.b16 %v560, %v553
    %v624 = vpack.c.b16 %v561, %v554
    %v625 = vpack.c.b16 %v562, %v555
    %v626 = vpack.c.b16 %v570, %v563
    %v627 = vpack.c.b16 %v571, %v564
    %v628 = vpack.c.b16 %v572, %v565
    %v629 = vpack.c.b16 %v573, %v566
    %v630 = vpack.c.b16 %v574, %v567
    %v631 = vpack.c.b16 %v575, %v568
    %v632 = vpack.c.b16 %v576, %v569
    %v913 = vunpack.c.l.b16 %v167
    %v914 = vunpack.c.h.b16 %v167
    %v915 = vunpack.c.l.b16 %v168
    %v916 = vunpack.c.h.b16 %v168
    %v917 = vunpack.c.l.b16 %v169
    %v918 = vunpack.c.h.b16 %v169
    %v919 = vunpack.c.l.b16 %v170
    %v920 = vunpack.c.h.b16 %v170
    %v921 = vunpack.c.l.b16 %v171
    %v922 = vunpack.c.h.b16 %v171
    %v923 = vunpack.c.l.b16 %v172
    %v924 = vunpack.c.h.b16 %v172
    %v925 = vunpack.c.l.b16 %v173
    %v926 = vunpack.c.h.b16 %v173
    %v927 = vunpack.c.l.b16 %v174
    %v928 = vunpack.c.h.b16 %v174
    %v929 = vunpack.c.l.b16 %v175
    %v930 = vunpack.c.h.b16 %v175
    %v931 = vunpack.c.l.b16 %v176
    %v932 = vunpack.c.h.b16 %v176
    %v933 = vunpack.c.l.b16 %v177
    %v934 = vunpack.c.h.b16 %v177
    %v935 = vunpack.c.l.b16 %v178
    %v936 = vunpack.c.h.b16 %v178
    %v937 = vunpack.c.l.b16 %v179
    %v938 = vunpack.c.h.b16 %v179
    %v939 = vunpack.c.l.b16 %v180
    %v940 = vunpack.c.h.b16 %v180
    %v941 = vunpack.c.l.b16 %v181
    %v942 = vunpack.c.h.b16 %v181
    %v943 = vunpack.c.l.b16 %v182
    %v944 = vunpack.c.h.b16 %v182
    %v945 = vunpack.c.l.b16 %v183
    %v946 = vunpack.c.h.b16 %v183
    %v947 = vunpack.c.l.b16 %v184
    %v948 = vunpack.c.h.b16 %v184
    %v949 = vunpack.c.l.b16 %v185
    %v950 = vunpack.c.h.b16 %v185
    %v951 = vunpack.c.l.b16 %v186
    %v952 = vunpack.c.h.b16 %v186
    %v953 = vunpack.c.l.b16 %v187
    %v954 = vunpack.c.h.b16 %v187
    %v955 = vunpack.c.l.b16 %v188
    %v956 = vunpack.c.h.b16 %v188
    %v957 = vunpack.c.l.b16 %v189
    %v958 = vunpack.c.h.b16 %v189
    %v959 = vunpack.c.l.b16 %v190
    %v960 = vunpack.c.h.b16 %v190
    %v961 = vunpack.c.l.b16 %v191
    %v962 = vunpack.c.h.b16 %v191
    %v963 = vunpack.c.l.b16 %v192
    %v964 = vunpack.c.h.b16 %v192
    %v965 = vunpack.c.l.b16 %v193
    %v966 = vunpack.c.h.b16 %v193
    %v967 = vunpack.c.l.b16 %v194
    %v968 = vunpack.c.h.b16 %v194
    %v969 = vunpack.c.l.b16 %v195
    %v970 = vunpack.c.h.b16 %v195
    %v971 = vunpack.c.l.b16 %v196
    %v972 = vunpack.c.h.b16 %v196
    %v973 = vunpack.c.l.b16 %v197
    %v974 = vunpack.c.h.b16 %v197
    %v975 = vunpack.c.l.b16 %v198
    %v976 = vunpack.c.h.b16 %v198
    %v977 = vunpack.c.l.b16 %v199
    %v978 = vunpack.c.h.b16 %v199
    %v979 = vunpack.c.l.b16 %v200
    %v980 = vunpack.c.h.b16 %v200
    %v981 = vunpack.c.l.b16 %v201
    %v982 = vunpack.c.h.b16 %v201
    %v983 = vunpack.c.l.b16 %v202
    %v984 = vunpack.c.h.b16 %v202
    %v985 = vunpack.c.l.b16 %v203
    %v986 = vunpack.c.h.b16 %v203
    %v987 = vunpack.c.l.b16 %v204
    %v988 = vunpack.c.h.b16 %v204
    %v989 = vunpack.c.l.b16 %v205
    %v990 = vunpack.c.h.b16 %v205
    %v991 = vunpack.c.l.b16 %v206
    %v992 = vunpack.c.h.b16 %v206
    %v993 = vunpack.c.l.b16 %v207
    %v994 = vunpack.c.h.b16 %v207
    %v995 = vunpack.c.l.b16 %v208
    %v996 = vunpack.c.h.b16 %v208
    %v997 = vunpack.c.l.b16 %v209
    %v998 = vunpack.c.h.b16 %v209
    %v999 = vunpack.c.l.b16 %v210
    %v1000 = vunpack.c.h.b16 %v210
    %v1001 = vunpack.c.l.b16 %v211
    %v1002 = vunpack.c.h.b16 %v211
    %v1003 = vunpack.c.l.b16 %v212
    %v1004 = vunpack.c.h.b16 %v212
    %v1005 = vunpack.c.l.b16 %v213
    %v1006 = vunpack.c.h.b16 %v213
    %v1007 = vunpack.c.l.b16 %v214
    %v1008 = vunpack.c.h.b16 %v214
    %v1009 = vunpack.c.l.b16 %v215
    %v1010 = vunpack.c.h.b16 %v215
    %v1011 = vunpack.c.l.b16 %v216
    %v1012 = vunpack.c.h.b16 %v216
    %v1013 = vunpack.c.l.b16 %v217
    %v1014 = vunpack.c.h.b16 %v217
    %v1015 = vunpack.c.l.b16 %v218
    %v1016 = vunpack.c.h.b16 %v218
    %v1017 = vunpack.c.l.b16 %v219
    %v1018 = vunpack.c.h.b16 %v219
    %v1019 = vunpack.c.l.b16 %v220
    %v1020 = vunpack.c.h.b16 %v220
    %v1021 = vunpack.c.l.b16 %v221
    %v1022 = vunpack.c.h.b16 %v221
    %v1023 = vunpack.c.l.b16 %v222
    %v1024 = vunpack.c.h.b16 %v222
    %v1025 = vunpack.c.l.b16 %v223
    %v1026 = vunpack.c.h.b16 %v223
    %v1027 = vunpack.c.l.b16 %v224
    %v1028 = vunpack.c.h.b16 %v224
    %v1029 = vunpack.c.l.b16 %v225
    %v1030 = vunpack.c.h.b16 %v225
    %v1031 = vunpack.c.l.b16 %v226
    %v1032 = vunpack.c.h.b16 %v226
    %v1033 = vunpack.c.l.b16 %v227
    %v1034 = vunpack.c.h.b16 %v227
    %v1035 = vunpack.c.l.b16 %v228
    %v1036 = vunpack.c.h.b16 %v228
    %v1037 = vunpack.c.l.b16 %v229
    %v1038 = vunpack.c.h.b16 %v229
    %v1039 = vunpack.c.l.b16 %v230
    %v1040 = vunpack.c.h.b16 %v230
    %v1041 = vunpack.c.l.b16 %v231
    %v1042 = vunpack.c.h.b16 %v231
    %v1043 = vunpack.c.l.b16 %v232
    %v1044 = vunpack.c.h.b16 %v232
    %v1045 = vunpack.c.l.b16 %v233
    %v1046 = vunpack.c.h.b16 %v233
    %v1047 = vunpack.c.l.b16 %v234
    %v1048 = vunpack.c.h.b16 %v234
    %v1049 = vunpack.c.l.b16 %v235
    %v1050 = vunpack.c.h.b16 %v235
    %v1051 = vunpack.c.l.b16 %v236
    %v1052 = vunpack.c.h.b16 %v236
    %v1053 = vunpack.c.l.b16 %v237
    %v1054 = vunpack.c.h.b16 %v237
    %v1055 = vunpack.c.l.b16 %v238
    %v1056 = vunpack.c.h.b16 %v238
    %v1057 = vunpack.c.l.b16 %v239
    %v1058 = vunpack.c.h.b16 %v239
    %v1059 = vunpack.c.l.b16 %v240
    %v1060 = vunpack.c.h.b16 %v240
    %v1061 = vunpack.c.l.b16 %v241
    %v1062 = vunpack.c.h.b16 %v241
    %v1063 = vunpack.c.l.b16 %v242
    %v1064 = vunpack.c.h.b16 %v242
    %v1065 = vunpack.c.l.b16 %v243
    %v1066 = vunpack.c.h.b16 %v243
    %v1067 = vunpack.c.l.b16 %v244
    %v1068 = vunpack.c.h.b16 %v244
    %v1069 = vunpack.c.l.b16 %v245
    %v1070 = vunpack.c.h.b16 %v245
    %v1071 = vunpack.c.l.b16 %v246
    %v1072 = vunpack.c.h.b16 %v246
    %v1073 = vunpack.c.l.b16 %v247
    %v1074 = vunpack.c.h.b16 %v247
    %v1075 = vunpack.c.l.b16 %v248
    %v1076 = vunpack.c.h.b16 %v248
    %v1077 = vunpack.c.l.b16 %v249
    %v1078 = vunpack.c.h.b16 %v249
    %v1079 = vunpack.c.l.b16 %v250
    %v1080 = vunpack.c.h.b16 %v250
    %v1081 = vunpack.c.l.b16 %v251
    %v1082 = vunpack.c.h.b16 %v251
    %v1083 = vunpack.c.l.b16 %v252
    %v1084 = vunpack.c.h.b16 %v252
    %v1085 = vunpack.c.l.b16 %v253
    %v1086 = vunpack.c.h.b16 %v253
    %v1087 = vunpack.c.l.b16 %v254
    %v1088 = vunpack.c.h.b16 %v254
    %v1089 = vunpack.c.l.b16 %v255
    %v1090 = vunpack.c.h.b16 %v255
    %v1091 = vunpack.c.l.b16 %v256
    %v1092 = vunpack.c.h.b16 %v256
    %v1093 = vunpack.c.l.b16 %v257
    %v1094 = vunpack.c.h.b16 %v257
    %v1095 = vunpack.c.l.b16 %v258
    %v1096 = vunpack.c.h.b16 %v258
    %v1097 = vunpack.c.l.b16 %v259
    %v1098 = vunpack.c.h.b16 %v259
    %v1099 = vunpack.c.l.b16 %v260
    %v1100 = vunpack.c.h.b16 %v260
    %v1101 = vunpack.c.l.b16 %v261
    %v1102 = vunpack.c.h.b16 %v261
    %v1103 = vunpack.c.l.b16 %v262
    %v1104 = vunpack.c.h.b16 %v262
    %v1105 = vunpack.c.l.b16 %v263
    %v1106 = vunpack.c.h.b16 %v263
    %v1107 = vunpack.c.l.b16 %v264
    %v1108 = vunpack.c.h.b16 %v264
    %v1109 = vunpack.c.l.b16 %v265
    %v1110 = vunpack.c.h.b16 %v265
    %v1111 = vunpack.c.l.b16 %v266
    %v1112 = vunpack.c.h.b16 %v266
    %v1113 = vunpack.c.l.b16 %v267
    %v1114 = vunpack.c.h.b16 %v267
    %v1115 = vunpack.c.l.b16 %v268
    %v1116 = vunpack.c.h.b16 %v268
    %v1117 = vunpack.c.l.b16 %v269
    %v1118 = vunpack.c.h.b16 %v269
    %v1119 = vunpack.c.l.b16 %v270
    %v1120 = vunpack.c.h.b16 %v270
    %v1121 = vunpack.c.l.b16 %v271
    %v1122 = vunpack.c.h.b16 %v271
    %v1123 = vunpack.c.l.b16 %v272
    %v1124 = vunpack.c.h.b16 %v272
    %v1125 = vunpack.c.l.b16 %v273
    %v1126 = vunpack.c.h.b16 %v273
    %v1127 = vunpack.c.l.b16 %v274
    %v1128 = vunpack.c.h.b16 %v274
    %v1129 = vunpack.c.l.b16 %v275
    %v1130 = vunpack.c.h.b16 %v275
    %v1131 = vunpack.c.l.b16 %v276
    %v1132 = vunpack.c.h.b16 %v276
    %v1133 = vunpack.c.l.b16 %v277
    %v1134 = vunpack.c.h.b16 %v277
    %v1135 = vunpack.c.l.b16 %v278
    %v1136 = vunpack.c.h.b16 %v278
    %v1137 = vunpack.c.l.b16 %v279
    %v1138 = vunpack.c.h.b16 %v279
    %v1139 = vunpack.c.l.b16 %v280
    %v1140 = vunpack.c.h.b16 %v280
    %v1141 = vunpack.c.l.b16 %v281
    %v1142 = vunpack.c.h.b16 %v281
    %v1143 = vunpack.c.l.b16 %v282
    %v1144 = vunpack.c.h.b16 %v282
    %v1145 = vunpack.c.l.b16 %v283
    %v1146 = vunpack.c.h.b16 %v283
    %v1147 = vunpack.c.l.b16 %v284
    %v1148 = vunpack.c.h.b16 %v284
    %v1149 = vunpack.c.l.b16 %v285
    %v1150 = vunpack.c.h.b16 %v285
    %v1151 = vunpack.c.l.b16 %v286
    %v1152 = vunpack.c.h.b16 %v286
    %v1153 = vunpack.c.l.b16 %v287
    %v1154 = vunpack.c.h.b16 %v287
    %v1155 = vunpack.c.l.b16 %v288
    %v1156 = vunpack.c.h.b16 %v288
    %v1157 = vunpack.c.l.b16 %v289
    %v1158 = vunpack.c.h.b16 %v289
    %v1159 = vunpack.c.l.b16 %v290
    %v1160 = vunpack.c.h.b16 %v290
    %v1161 = vunpack.c.l.b16 %v291
    %v1162 = vunpack.c.h.b16 %v291
    %v1163 = vunpack.c.l.b16 %v292
    %v1164 = vunpack.c.h.b16 %v292
    %v1165 = vunpack.c.l.b16 %v293
    %v1166 = vunpack.c.h.b16 %v293
    %v1167 = vunpack.c.l.b16 %v294
    %v1168 = vunpack.c.h.b16 %v294
    %v1169 = vunpack.c.l.b16 %v295
    %v1170 = vunpack.c.h.b16 %v295
    %v1171 = vunpack.c.l.b16 %v296
    %v1172 = vunpack.c.h.b16 %v296
    %v1173 = vunpack.c.l.b16 %v297
    %v1174 = vunpack.c.h.b16 %v297
    %v1175 = vunpack.c.l.b16 %v298
    %v1176 = vunpack.c.h.b16 %v298
    %v1177 = vunpack.c.l.b16 %v299
    %v1178 = vunpack.c.h.b16 %v299
    %v1179 = vunpack.c.l.b16 %v300
    %v1180 = vunpack.c.h.b16 %v300
    %v1181 = vunpack.c.l.b16 %v301
    %v1182 = vunpack.c.h.b16 %v301
    %v1183 = vunpack.c.l.b16 %v302
    %v1184 = vunpack.c.h.b16 %v302
    %v1185 = vunpack.c.l.b16 %v303
    %v1186 = vunpack.c.h.b16 %v303
    %v1187 = vunpack.c.l.b16 %v304
    %v1188 = vunpack.c.h.b16 %v304
    %v1189 = vunpack.c.l.b16 %v305
    %v1190 = vunpack.c.h.b16 %v305
    %v1191 = vunpack.c.l.b16 %v306
    %v1192 = vunpack.c.h.b16 %v306
    %v1193 = vunpack.c.l.b16 %v307
    %v1194 = vunpack.c.h.b16 %v307
    %v1195 = vunpack.c.l.b16 %v308
    %v1196 = vunpack.c.h.b16 %v308
    %v1197 = vunpack.c.l.b16 %v309
    %v1198 = vunpack.c.h.b16 %v309
    %v1199 = vunpack.c.l.b16 %v310
    %v1200 = vunpack.c.h.b16 %v310
    %v1201 = vunpack.c.l.b16 %v311
    %v1202 = vunpack.c.h.b16 %v311
    %v1203 = vunpack.c.l.b16 %v312
    %v1204 = vunpack.c.h.b16 %v312
    %v1205 = vunpack.c.l.b16 %v313
    %v1206 = vunpack.c.h.b16 %v313
    %v1207 = vunpack.c.l.b16 %v314
    %v1208 = vunpack.c.h.b16 %v314
    %v1209 = vunpack.c.l.b16 %v315
    %v1210 = vunpack.c.h.b16 %v315
    %v1211 = vunpack.c.l.b16 %v316
    %v1212 = vunpack.c.h.b16 %v316
    %v1213 = vunpack.c.l.b16 %v317
    %v1214 = vunpack.c.h.b16 %v317
    %v1215 = vunpack.c.l.b16 %v318
    %v1216 = vunpack.c.h.b16 %v318
    %v1217 = vunpack.c.l.b16 %v319
    %v1218 = vunpack.c.h.b16 %v319
    %v1219 = vunpack.c.l.b16 %v320
    %v1220 = vunpack.c.h.b16 %v320
    %v1221 = vunpack.c.l.b16 %v321
    %v1222 = vunpack.c.h.b16 %v321
    %v1223 = vunpack.c.l.b16 %v322
    %v1224 = vunpack.c.h.b16 %v322
    %v1225 = vunpack.c.l.b16 %v323
    %v1226 = vunpack.c.h.b16 %v323
    %v1227 = vunpack.c.l.b16 %v324
    %v1228 = vunpack.c.h.b16 %v324
    %v1229 = vunpack.c.l.b16 %v325
    %v1230 = vunpack.c.h.b16 %v325
    %v1231 = vunpack.c.l.b16 %v326
    %v1232 = vunpack.c.h.b16 %v326
    %v1233 = vunpack.c.l.b16 %v327
    %v1234 = vunpack.c.h.b16 %v327
    %v1235 = vunpack.c.l.b16 %v328
    %v1236 = vunpack.c.h.b16 %v328
    %v1237 = vunpack.c.l.b16 %v329
    %v1238 = vunpack.c.h.b16 %v329
    %v1239 = vunpack.c.l.b16 %v330
    %v1240 = vunpack.c.h.b16 %v330
    %v1241 = vunpack.c.l.b16 %v331
    %v1242 = vunpack.c.h.b16 %v331
    %v1243 = vunpack.c.l.b16 %v332
    %v1244 = vunpack.c.h.b16 %v332
    %v1245 = vunpack.c.l.b16 %v333
    %v1246 = vunpack.c.h.b16 %v333
    %v1247 = vunpack.c.l.b16 %v334
    %v1248 = vunpack.c.h.b16 %v334
    %v1249 = vunpack.c.l.b16 %v335
    %v1250 = vunpack.c.h.b16 %v335
    %v1251 = vunpack.c.l.b16 %v336
    %v1252 = vunpack.c.h.b16 %v336
    %v1253 = vunpack.c.l.b16 %v337
    %v1254 = vunpack.c.h.b16 %v337
    %v1255 = vunpack.c.l.b16 %v338
    %v1256 = vunpack.c.h.b16 %v338
    %v1257 = vunpack.c.l.b16 %v339
    %v1258 = vunpack.c.h.b16 %v339
    %v1259 = vunpack.c.l.b16 %v340
    %v1260 = vunpack.c.h.b16 %v340
    %v1261 = vunpack.c.l.b16 %v341
    %v1262 = vunpack.c.h.b16 %v341
    %v1263 = vunpack.c.l.b16 %v342
    %v1264 = vunpack.c.h.b16 %v342
    %v1265 = vunpack.c.l.b16 %v343
    %v1266 = vunpack.c.h.b16 %v343
    %v1267 = vunpack.c.l.b16 %v344
    %v1268 = vunpack.c.h.b16 %v344
    %v1269 = vunpack.c.l.b16 %v345
    %v1270 = vunpack.c.h.b16 %v345
    %v1271 = vunpack.c.l.b16 %v346
    %v1272 = vunpack.c.h.b16 %v346
    %v1273 = vunpack.c.l.b16 %v347
    %v1274 = vunpack.c.h.b16 %v347
    %v1275 = vunpack.c.l.b16 %v348
    %v1276 = vunpack.c.h.b16 %v348
    %v1277 = vunpack.c.l.b16 %v349
    %v1278 = vunpack.c.h.b16 %v349
    %v1279 = vunpack.c.l.b16 %v350
    %v1280 = vunpack.c.h.b16 %v350
    %v1281 = vunpack.c.l.b16 %v351
    %v1282 = vunpack.c.h.b16 %v351
    %v1283 = vunpack.c.l.b16 %v352
    %v1284 = vunpack.c.h.b16 %v352
    %v1285 = vunpack.c.l.b16 %v353
    %v1286 = vunpack.c.h.b16 %v353
    %v1287 = vunpack.c.l.b16 %v354
    %v1288 = vunpack.c.h.b16 %v354
    %v1289 = vunpack.c.l.b16 %v355
    %v1290 = vunpack.c.h.b16 %v355
    %v1291 = vunpack.c.l.b16 %v356
    %v1292 = vunpack.c.h.b16 %v356
    %v1293 = vunpack.c.l.b16 %v357
    %v1294 = vunpack.c.h.b16 %v357
    %v1295 = vunpack.c.l.b16 %v358
    %v1296 = vunpack.c.h.b16 %v358
    %v1297 = vunpack.c.l.b16 %v359
    %v1298 = vunpack.c.h.b16 %v359
    %v1299 = vunpack.c.l.b16 %v360
    %v1300 = vunpack.c.h.b16 %v360
    %v1301 = vunpack.c.l.b16 %v361
    %v1302 = vunpack.c.h.b16 %v361
    %v1303 = vunpack.c.l.b16 %v362
    %v1304 = vunpack.c.h.b16 %v362
    %v1305 = vunpack.c.l.b16 %v363
    %v1306 = vunpack.c.h.b16 %v363
    %v1307 = vunpack.c.l.b16 %v364
    %v1308 = vunpack.c.h.b16 %v364
    %v1309 = vunpack.c.l.b16 %v365
    %v1310 = vunpack.c.h.b16 %v365
    %v1311 = vunpack.c.l.b16 %v366
    %v1312 = vunpack.c.h.b16 %v366
    %v1313 = vunpack.c.l.b16 %v367
    %v1314 = vunpack.c.h.b16 %v367
    %v1315 = vunpack.c.l.b16 %v368
    %v1316 = vunpack.c.h.b16 %v368
    %v1317 = vunpack.c.l.b16 %v369
    %v1318 = vunpack.c.h.b16 %v369
    %v1319 = vunpack.c.l.b16 %v370
    %v1320 = vunpack.c.h.b16 %v370
    %v1321 = vunpack.c.l.b16 %v371
    %v1322 = vunpack.c.h.b16 %v371
    %v1323 = vunpack.c.l.b16 %v372
    %v1324 = vunpack.c.h.b16 %v372
    %v1325 = vunpack.c.l.b16 %v373
    %v1326 = vunpack.c.h.b16 %v373
    %v1327 = vunpack.c.l.b16 %v374
    %v1328 = vunpack.c.h.b16 %v374
    %v1329 = vunpack.c.l.b16 %v375
    %v1330 = vunpack.c.h.b16 %v375
    %v1331 = vunpack.c.l.b16 %v376
    %v1332 = vunpack.c.h.b16 %v376
    %v1333 = vunpack.c.l.b16 %v377
    %v1334 = vunpack.c.h.b16 %v377
    %v1335 = vunpack.c.l.b16 %v378
    %v1336 = vunpack.c.h.b16 %v378
    %v1337 = vunpack.c.l.b16 %v379
    %v1338 = vunpack.c.h.b16 %v379
    %v1339 = vunpack.c.l.b16 %v380
    %v1340 = vunpack.c.h.b16 %v380
    %v1341 = vunpack.c.l.b16 %v381
    %v1342 = vunpack.c.h.b16 %v381
    %v1343 = vunpack.c.l.b16 %v382
    %v1344 = vunpack.c.h.b16 %v382
    %v1345 = vunpack.c.l.b16 %v383
    %v1346 = vunpack.c.h.b16 %v383
    %v1347 = vunpack.c.l.b16 %v384
    %v1348 = vunpack.c.h.b16 %v384
    %v1349 = vunpack.c.l.b16 %v385
    %v1350 = vunpack.c.h.b16 %v385
    %v1351 = vunpack.c.l.b16 %v386
    %v1352 = vunpack.c.h.b16 %v386
    %v1353 = vunpack.c.l.b16 %v387
    %v1354 = vunpack.c.h.b16 %v387
    %v1355 = vunpack.c.l.b16 %v388
    %v1356 = vunpack.c.h.b16 %v388
    %v1357 = vunpack.c.l.b16 %v389
    %v1358 = vunpack.c.h.b16 %v389
    %v1359 = vunpack.c.l.b16 %v390
    %v1360 = vunpack.c.h.b16 %v390
    %v1361 = vpack.c.b16 %v917, %v913
    %v1362 = vpack.c.b16 %v918, %v914
    %v1363 = vpack.c.b16 %v919, %v915
    %v1364 = vpack.c.b16 %v920, %v916
    %v1365 = vpack.c.b16 %v925, %v921
    %v1366 = vpack.c.b16 %v926, %v922
    %v1367 = vpack.c.b16 %v927, %v923
    %v1368 = vpack.c.b16 %v928, %v924
    %v1369 = vpack.c.b16 %v933, %v929
    %v1370 = vpack.c.b16 %v934, %v930
    %v1371 = vpack.c.b16 %v935, %v931
    %v1372 = vpack.c.b16 %v936, %v932
    %v1373 = vpack.c.b16 %v941, %v937
    %v1374 = vpack.c.b16 %v942, %v938
    %v1375 = vpack.c.b16 %v943, %v939
    %v1376 = vpack.c.b16 %v944, %v940
    %v1377 = vpack.c.b16 %v949, %v945
    %v1378 = vpack.c.b16 %v950, %v946
    %v1379 = vpack.c.b16 %v951, %v947
    %v1380 = vpack.c.b16 %v952, %v948
    %v1381 = vpack.c.b16 %v957, %v953
    %v1382 = vpack.c.b16 %v958, %v954
    %v1383 = vpack.c.b16 %v959, %v955
    %v1384 = vpack.c.b16 %v960, %v956
    %v1385 = vpack.c.b16 %v965, %v961
    %v1386 = vpack.c.b16 %v966, %v962
    %v1387 = vpack.c.b16 %v967, %v963
    %v1388 = vpack.c.b16 %v968, %v964
    %v1389 = vpack.c.b16 %v973, %v969
    %v1390 = vpack.c.b16 %v974, %v970
    %v1391 = vpack.c.b16 %v975, %v971
    %v1392 = vpack.c.b16 %v976, %v972
    %v1393 = vpack.c.b16 %v981, %v977
    %v1394 = vpack.c.b16 %v982, %v978
    %v1395 = vpack.c.b16 %v983, %v979
    %v1396 = vpack.c.b16 %v984, %v980
    %v1397 = vpack.c.b16 %v989, %v985
    %v1398 = vpack.c.b16 %v990, %v986
    %v1399 = vpack.c.b16 %v991, %v987
    %v1400 = vpack.c.b16 %v992, %v988
    %v1401 = vpack.c.b16 %v997, %v993
    %v1402 = vpack.c.b16 %v998, %v994
    %v1403 = vpack.c.b16 %v999, %v995
    %v1404 = vpack.c.b16 %v1000, %v996
    %v1405 = vpack.c.b16 %v1005, %v1001
    %v1406 = vpack.c.b16 %v1006, %v1002
    %v1407 = vpack.c.b16 %v1007, %v1003
    %v1408 = vpack.c.b16 %v1008, %v1004
    %v1409 = vpack.c.b16 %v1013, %v1009
    %v1410 = vpack.c.b16 %v1014, %v1010
    %v1411 = vpack.c.b16 %v1015, %v1011
    %v1412 = vpack.c.b16 %v1016, %v1012
    %v1413 = vpack.c.b16 %v1021, %v1017
    %v1414 = vpack.c.b16 %v1022, %v1018
    %v1415 = vpack.c.b16 %v1023, %v1019
    %v1416 = vpack.c.b16 %v1024, %v1020
    %v1417 = vpack.c.b16 %v1029, %v1025
    %v1418 = vpack.c.b16 %v1030, %v1026
    %v1419 = vpack.c.b16 %v1031, %v1027
    %v1420 = vpack.c.b16 %v1032, %v1028
    %v1421 = vpack.c.b16 %v1037, %v1033
    %v1422 = vpack.c.b16 %v1038, %v1034
    %v1423 = vpack.c.b16 %v1039, %v1035
    %v1424 = vpack.c.b16 %v1040, %v1036
    %v1425 = vpack.c.b16 %v1045, %v1041
    %v1426 = vpack.c.b16 %v1046, %v1042
    %v1427 = vpack.c.b16 %v1047, %v1043
    %v1428 = vpack.c.b16 %v1048, %v1044
    %v1429 = vpack.c.b16 %v1053, %v1049
    %v1430 = vpack.c.b16 %v1054, %v1050
    %v1431 = vpack.c.b16 %v1055, %v1051
    %v1432 = vpack.c.b16 %v1056, %v1052
    %v1433 = vpack.c.b16 %v1061, %v1057
    %v1434 = vpack.c.b16 %v1062, %v1058
    %v1435 = vpack.c.b16 %v1063, %v1059
    %v1436 = vpack.c.b16 %v1064, %v1060
    %v1437 = vpack.c.b16 %v1069, %v1065
    %v1438 = vpack.c.b16 %v1070, %v1066
    %v1439 = vpack.c.b16 %v1071, %v1067
    %v1440 = vpack.c.b16 %v1072, %v1068
    %v1441 = vpack.c.b16 %v1077, %v1073
    %v1442 = vpack.c.b16 %v1078, %v1074
    %v1443 = vpack.c.b16 %v1079, %v1075
    %v1444 = vpack.c.b16 %v1080, %v1076
    %v1445 = vpack.c.b16 %v1085, %v1081
    %v1446 = vpack.c.b16 %v1086, %v1082
    %v1447 = vpack.c.b16 %v1087, %v1083
    %v1448 = vpack.c.b16 %v1088, %v1084
    %v1449 = vpack.c.b16 %v1093, %v1089
    %v1450 = vpack.c.b16 %v1094, %v1090
    %v1451 = vpack.c.b16 %v1095, %v1091
    %v1452 = vpack.c.b16 %v1096, %v1092
    %v1453 = vpack.c.b16 %v1101, %v1097
    %v1454 = vpack.c.b16 %v1102, %v1098
    %v1455 = vpack.c.b16 %v1103, %v1099
    %v1456 = vpack.c.b16 %v1104, %v1100
    %v1457 = vpack.c.b16 %v1109, %v1105
    %v1458 = vpack.c.b16 %v1110, %v1106
    %v1459 = vpack.c.b16 %v1111, %v1107
    %v1460 = vpack.c.b16 %v1112, %v1108
    %v1461 = vpack.c.b16 %v1117, %v1113
    %v1462 = vpack.c.b16 %v1118, %v1114
    %v1463 = vpack.c.b16 %v1119, %v1115
    %v1464 = vpack.c.b16 %v1120, %v1116
    %v1465 = vpack.c.b16 %v1125, %v1121
    %v1466 = vpack.c.b16 %v1126, %v1122
    %v1467 = vpack.c.b16 %v1127, %v1123
    %v1468 = vpack.c.b16 %v1128, %v1124
    %v1469 = vpack.c.b16 %v1133, %v1129
    %v1470 = vpack.c.b16 %v1134, %v1130
    %v1471 = vpack.c.b16 %v1135, %v1131
    %v1472 = vpack.c.b16 %v1136, %v1132
    %v1473 = vpack.c.b16 %v1141, %v1137
    %v1474 = vpack.c.b16 %v1142, %v1138
    %v1475 = vpack.c.b16 %v1143, %v1139
    %v1476 = vpack.c.b16 %v1144, %v1140
    %v1477 = vpack.c.b16 %v1149, %v1145
    %v1478 = vpack.c.b16 %v1150, %v1146
    %v1479 = vpack.c.b16 %v1151, %v1147
    %v1480 = vpack.c.b16 %v1152, %v1148
    %v1481 = vpack.c.b16 %v1157, %v1153
    %v1482 = vpack.c.b16 %v1158, %v1154
    %v1483 = vpack.c.b16 %v1159, %v1155
    %v1484 = vpack.c.b16 %v1160, %v1156
    %v1485 = vpack.c.b16 %v1165, %v1161
    %v1486 = vpack.c.b16 %v1166, %v1162
    %v1487 = vpack.c.b16 %v1167, %v1163
    %v1488 = vpack.c.b16 %v1168, %v1164
    %v1489 = vpack.c.b16 %v1173, %v1169
    %v1490 = vpack.c.b16 %v1174, %v1170
    %v1491 = vpack.c.b16 %v1175, %v1171
    %v1492 = vpack.c.b16 %v1176, %v1172
    %v1493 = vpack.c.b16 %v1181, %v1177
    %v1494 = vpack.c.b16 %v1182, %v1178
    %v1495 = vpack.c.b16 %v1183, %v1179
    %v1496 = vpack.c.b16 %v1184, %v1180
    %v1497 = vpack.c.b16 %v1189, %v1185
    %v1498 = vpack.c.b16 %v1190, %v1186
    %v1499 = vpack.c.b16 %v1191, %v1187
    %v1500 = vpack.c.b16 %v1192, %v1188
    %v1501 = vpack.c.b16 %v1197, %v1193
    %v1502 = vpack.c.b16 %v1198, %v1194
    %v1503 = vpack.c.b16 %v1199, %v1195
    %v1504 = vpack.c.b16 %v1200, %v1196
    %v1505 = vpack.c.b16 %v1205, %v1201
    %v1506 = vpack.c.b16 %v1206, %v1202
    %v1507 = vpack.c.b16 %v1207, %v1203
    %v1508 = vpack.c.b16 %v1208, %v1204
    %v1509 = vpack.c.b16 %v1213, %v1209
    %v1510 = vpack.c.b16 %v1214, %v1210
    %v1511 = vpack.c.b16 %v1215, %v1211
    %v1512 = vpack.c.b16 %v1216, %v1212
    %v1513 = vpack.c.b16 %v1221, %v1217
    %v1514 = vpack.c.b16 %v1222, %v1218
    %v1515 = vpack.c.b16 %v1223, %v1219
    %v1516 = vpack.c.b16 %v1224, %v1220
    %v1517 = vpack.c.b16 %v1229, %v1225
    %v1518 = vpack.c.b16 %v1230, %v1226
    %v1519 = vpack.c.b16 %v1231, %v1227
    %v1520 = vpack.c.b16 %v1232, %v1228
    %v1521 = vpack.c.b16 %v1237, %v1233
    %v1522 = vpack.c.b16 %v1238, %v1234
    %v1523 = vpack.c.b16 %v1239, %v1235
    %v1524 = vpack.c.b16 %v1240, %v1236
    %v1525 = vpack.c.b16 %v1245, %v1241
    %v1526 = vpack.c.b16 %v1246, %v1242
    %v1527 = vpack.c.b16 %v1247, %v1243
    %v1528 = vpack.c.b16 %v1248, %v1244
    %v1529 = vpack.c.b16 %v1253, %v1249
    %v1530 = vpack.c.b16 %v1254, %v1250
    %v1531 = vpack.c.b16 %v1255, %v1251
    %v1532 = vpack.c.b16 %v1256, %v1252
    %v1533 = vpack.c.b16 %v1261, %v1257
    %v1534 = vpack.c.b16 %v1262, %v1258
    %v1535 = vpack.c.b16 %v1263, %v1259
    %v1536 = vpack.c.b16 %v1264, %v1260
    %v1537 = vpack.c.b16 %v1269, %v1265
    %v1538 = vpack.c.b16 %v1270, %v1266
    %v1539 = vpack.c.b16 %v1271, %v1267
    %v1540 = vpack.c.b16 %v1272, %v1268
    %v1541 = vpack.c.b16 %v1277, %v1273
    %v1542 = vpack.c.b16 %v1278, %v1274
    %v1543 = vpack.c.b16 %v1279, %v1275
    %v1544 = vpack.c.b16 %v1280, %v1276
    %v1545 = vpack.c.b16 %v1285, %v1281
    %v1546 = vpack.c.b16 %v1286, %v1282
    %v1547 = vpack.c.b16 %v1287, %v1283
    %v1548 = vpack.c.b16 %v1288, %v1284
    %v1549 = vpack.c.b16 %v1293, %v1289
    %v1550 = vpack.c.b16 %v1294, %v1290
    %v1551 = vpack.c.b16 %v1295, %v1291
    %v1552 = vpack.c.b16 %v1296, %v1292
    %v1553 = vpack.c.b16 %v1301, %v1297
    %v1554 = vpack.c.b16 %v1302, %v1298
    %v1555 = vpack.c.b16 %v1303, %v1299
    %v1556 = vpack.c.b16 %v1304, %v1300
    %v1557 = vpack.c.b16 %v1309, %v1305
    %v1558 = vpack.c.b16 %v1310, %v1306
    %v1559 = vpack.c.b16 %v1311, %v1307
    %v1560 = vpack.c.b16 %v1312, %v1308
    %v1561 = vpack.c.b16 %v1317, %v1313
    %v1562 = vpack.c.b16 %v1318, %v1314
    %v1563 = vpack.c.b16 %v1319, %v1315
    %v1564 = vpack.c.b16 %v1320, %v1316
    %v1565 = vpack.c.b16 %v1325, %v1321
    %v1566 = vpack.c.b16 %v1326, %v1322
    %v1567 = vpack.c.b16 %v1327, %v1323
    %v1568 = vpack.c.b16 %v1328, %v1324
    %v1569 = vpack.c.b16 %v1333, %v1329
    %v1570 = vpack.c.b16 %v1334, %v1330
    %v1571 = vpack.c.b16 %v1335, %v1331
    %v1572 = vpack.c.b16 %v1336, %v1332
    %v1573 = vpack.c.b16 %v1341, %v1337
    %v1574 = vpack.c.b16 %v1342, %v1338
    %v1575 = vpack.c.b16 %v1343, %v1339
    %v1576 = vpack.c.b16 %v1344, %v1340
    %v1577 = vpack.c.b16 %v1349, %v1345
    %v1578 = vpack.c.b16 %v1350, %v1346
    %v1579 = vpack.c.b16 %v1351, %v1347
    %v1580 = vpack.c.b16 %v1352, %v1348
    %v1581 = vpack.c.b16 %v1357, %v1353
    %v1582 = vpack.c.b16 %v1358, %v1354
    %v1583 = vpack.c.b16 %v1359, %v1355
    %v1584 = vpack.c.b16 %v1360, %v1356
    %1809 = vmatpush.bf16.msra.mxu0 %v1389
    %1810 = vmatpush.bf16.msra.mxu0 %v1385
    %1811 = vmatpush.bf16.msra.mxu0 %v1381
    %1812 = vmatpush.bf16.msra.mxu0 %v1377
    %1813 = vmatpush.bf16.msra.mxu0 %v1373
    %1814 = vmatpush.bf16.msra.mxu0 %v1369
    %1815 = vmatpush.bf16.msra.mxu0 %v1365
    %1816 = vmatpush.bf16.msra.mxu0 %v1361
    %1817 = vmatmul.bf16.gmra.mxu0 %v577
    %v1818 = vpop.f32.mrf.mxu0
    %v1819 = vadd.f32 %v393, %v1818
    %v1820 = vpop.f32.mrf.mxu0
    %v1821 = vadd.f32 %v393, %v1820
    %1822 = vmatmul.bf16.gmra.mxu0 %v584
    %v1823 = vpop.f32.mrf.mxu0
    %v1824 = vadd.f32 %v393, %v1823
    %v1825 = vpop.f32.mrf.mxu0
    %v1826 = vadd.f32 %v393, %v1825
    %1827 = vmatmul.bf16.gmra.mxu0 %v591
    %v1828 = vpop.f32.mrf.mxu0
    %v1829 = vadd.f32 %v393, %v1828
    %v1830 = vpop.f32.mrf.mxu0
    %v1831 = vadd.f32 %v393, %v1830
    %1832 = vmatmul.bf16.gmra.mxu0 %v598
    %v1833 = vpop.f32.mrf.mxu0
    %v1834 = vadd.f32 %v393, %v1833
    %v1835 = vpop.f32.mrf.mxu0
    %v1836 = vadd.f32 %v393, %v1835
    %1837 = vmatmul.bf16.gmra.mxu0 %v605
    %v1838 = vpop.f32.mrf.mxu0
    %v1839 = vadd.f32 %v393, %v1838
    %v1840 = vpop.f32.mrf.mxu0
    %v1841 = vadd.f32 %v393, %v1840
    %1842 = vmatmul.bf16.gmra.mxu0 %v612
    %v1843 = vpop.f32.mrf.mxu0
    %v1844 = vadd.f32 %v393, %v1843
    %v1845 = vpop.f32.mrf.mxu0
    %v1846 = vadd.f32 %v393, %v1845
    %1847 = vmatmul.bf16.gmra.mxu0 %v619
    %v1848 = vpop.f32.mrf.mxu0
    %v1849 = vadd.f32 %v393, %v1848
    %v1850 = vpop.f32.mrf.mxu0
    %v1851 = vadd.f32 %v393, %v1850
    %1852 = vmatmul.bf16.gmra.mxu0 %v626
    %v1853 = vpop.f32.mrf.mxu0
    %v1854 = vadd.f32 %v393, %v1853
    %v1855 = vpop.f32.mrf.mxu0
    %v1856 = vadd.f32 %v393, %v1855
    %1857 = vdwg.mxu0
    %1858 = vmatpush.bf16.msra.mxu0 %v1421
    %1859 = vmatpush.bf16.msra.mxu0 %v1417
    %1860 = vmatpush.bf16.msra.mxu0 %v1413
    %1861 = vmatpush.bf16.msra.mxu0 %v1409
    %1862 = vmatpush.bf16.msra.mxu0 %v1405
    %1863 = vmatpush.bf16.msra.mxu0 %v1401
    %1864 = vmatpush.bf16.msra.mxu0 %v1397
    %1865 = vmatpush.bf16.msra.mxu0 %v1393
    %1866 = vmatmul.bf16.gmra.mxu0 %v578
    %v1867 = vpop.f32.mrf.mxu0
    %v1868 = vadd.f32 %v1819, %v1867
    %v1869 = vpop.f32.mrf.mxu0
    %v1870 = vadd.f32 %v1821, %v1869
    %1871 = vmatmul.bf16.gmra.mxu0 %v585
    %v1872 = vpop.f32.mrf.mxu0
    %v1873 = vadd.f32 %v1824, %v1872
    %v1874 = vpop.f32.mrf.mxu0
    %v1875 = vadd.f32 %v1826, %v1874
    %1876 = vmatmul.bf16.gmra.mxu0 %v592
    %v1877 = vpop.f32.mrf.mxu0
    %v1878 = vadd.f32 %v1829, %v1877
    %v1879 = vpop.f32.mrf.mxu0
    %v1880 = vadd.f32 %v1831, %v1879
    %1881 = vmatmul.bf16.gmra.mxu0 %v599
    %v1882 = vpop.f32.mrf.mxu0
    %v1883 = vadd.f32 %v1834, %v1882
    %v1884 = vpop.f32.mrf.mxu0
    %v1885 = vadd.f32 %v1836, %v1884
    %1886 = vmatmul.bf16.gmra.mxu0 %v606
    %v1887 = vpop.f32.mrf.mxu0
    %v1888 = vadd.f32 %v1839, %v1887
    %v1889 = vpop.f32.mrf.mxu0
    %v1890 = vadd.f32 %v1841, %v1889
    %1891 = vmatmul.bf16.gmra.mxu0 %v613
    %v1892 = vpop.f32.mrf.mxu0
    %v1893 = vadd.f32 %v1844, %v1892
    %v1894 = vpop.f32.mrf.mxu0
    %v1895 = vadd.f32 %v1846, %v1894
    %1896 = vmatmul.bf16.gmra.mxu0 %v620
    %v1897 = vpop.f32.mrf.mxu0
    %v1898 = vadd.f32 %v1849, %v1897
    %v1899 = vpop.f32.mrf.mxu0
    %v1900 = vadd.f32 %v1851, %v1899
    %1901 = vmatmul.bf16.gmra.mxu0 %v627
    %v1902 = vpop.f32.mrf.mxu0
    %v1903 = vadd.f32 %v1854, %v1902
    %v1904 = vpop.f32.mrf.mxu0
    %v1905 = vadd.f32 %v1856, %v1904
    %1906 = vdwg.mxu0
    %1907 = vmatpush.bf16.msra.mxu0 %v1453
    %1908 = vmatpush.bf16.msra.mxu0 %v1449
    %1909 = vmatpush.bf16.msra.mxu0 %v1445
    %1910 = vmatpush.bf16.msra.mxu0 %v1441
    %1911 = vmatpush.bf16.msra.mxu0 %v1437
    %1912 = vmatpush.bf16.msra.mxu0 %v1433
    %1913 = vmatpush.bf16.msra.mxu0 %v1429
    %1914 = vmatpush.bf16.msra.mxu0 %v1425
    %1915 = vmatmul.bf16.gmra.mxu0 %v579
    %v1916 = vpop.f32.mrf.mxu0
    %v1917 = vadd.f32 %v1868, %v1916
    %v1918 = vpop.f32.mrf.mxu0
    %v1919 = vadd.f32 %v1870, %v1918
    %1920 = vmatmul.bf16.gmra.mxu0 %v586
    %v1921 = vpop.f32.mrf.mxu0
    %v1922 = vadd.f32 %v1873, %v1921
    %v1923 = vpop.f32.mrf.mxu0
    %v1924 = vadd.f32 %v1875, %v1923
    %1925 = vmatmul.bf16.gmra.mxu0 %v593
    %v1926 = vpop.f32.mrf.mxu0
    %v1927 = vadd.f32 %v1878, %v1926
    %v1928 = vpop.f32.mrf.mxu0
    %v1929 = vadd.f32 %v1880, %v1928
    %1930 = vmatmul.bf16.gmra.mxu0 %v600
    %v1931 = vpop.f32.mrf.mxu0
    %v1932 = vadd.f32 %v1883, %v1931
    %v1933 = vpop.f32.mrf.mxu0
    %v1934 = vadd.f32 %v1885, %v1933
    %1935 = vmatmul.bf16.gmra.mxu0 %v607
    %v1936 = vpop.f32.mrf.mxu0
    %v1937 = vadd.f32 %v1888, %v1936
    %v1938 = vpop.f32.mrf.mxu0
    %v1939 = vadd.f32 %v1890, %v1938
    %1940 = vmatmul.bf16.gmra.mxu0 %v614
    %v1941 = vpop.f32.mrf.mxu0
    %v1942 = vadd.f32 %v1893, %v1941
    %v1943 = vpop.f32.mrf.mxu0
    %v1944 = vadd.f32 %v1895, %v1943
    %1945 = vmatmul.bf16.gmra.mxu0 %v621
    %v1946 = vpop.f32.mrf.mxu0
    %v1947 = vadd.f32 %v1898, %v1946
    %v1948 = vpop.f32.mrf.mxu0
    %v1949 = vadd.f32 %v1900, %v1948
    %1950 = vmatmul.bf16.gmra.mxu0 %v628
    %v1951 = vpop.f32.mrf.mxu0
    %v1952 = vadd.f32 %v1903, %v1951
    %v1953 = vpop.f32.mrf.mxu0
    %v1954 = vadd.f32 %v1905, %v1953
    %1955 = vdwg.mxu0
    %1956 = vmatpush.bf16.msra.mxu0 %v1485
    %1957 = vmatpush.bf16.msra.mxu0 %v1481
    %1958 = vmatpush.bf16.msra.mxu0 %v1477
    %1959 = vmatpush.bf16.msra.mxu0 %v1473
    %1960 = vmatpush.bf16.msra.mxu0 %v1469
    %1961 = vmatpush.bf16.msra.mxu0 %v1465
    %1962 = vmatpush.bf16.msra.mxu0 %v1461
    %1963 = vmatpush.bf16.msra.mxu0 %v1457
    %1964 = vmatmul.bf16.gmra.mxu0 %v580
    %v1965 = vpop.f32.mrf.mxu0
    %v1966 = vadd.f32 %v1917, %v1965
    %v1967 = vpop.f32.mrf.mxu0
    %v1968 = vadd.f32 %v1919, %v1967
    %1969 = vmatmul.bf16.gmra.mxu0 %v587
    %v1970 = vpop.f32.mrf.mxu0
    %v1971 = vadd.f32 %v1922, %v1970
    %v1972 = vpop.f32.mrf.mxu0
    %v1973 = vadd.f32 %v1924, %v1972
    %1974 = vmatmul.bf16.gmra.mxu0 %v594
    %v1975 = vpop.f32.mrf.mxu0
    %v1976 = vadd.f32 %v1927, %v1975
    %v1977 = vpop.f32.mrf.mxu0
    %v1978 = vadd.f32 %v1929, %v1977
    %1979 = vmatmul.bf16.gmra.mxu0 %v601
    %v1980 = vpop.f32.mrf.mxu0
    %v1981 = vadd.f32 %v1932, %v1980
    %v1982 = vpop.f32.mrf.mxu0
    %v1983 = vadd.f32 %v1934, %v1982
    %1984 = vmatmul.bf16.gmra.mxu0 %v608
    %v1985 = vpop.f32.mrf.mxu0
    %v1986 = vadd.f32 %v1937, %v1985
    %v1987 = vpop.f32.mrf.mxu0
    %v1988 = vadd.f32 %v1939, %v1987
    %1989 = vmatmul.bf16.gmra.mxu0 %v615
    %v1990 = vpop.f32.mrf.mxu0
    %v1991 = vadd.f32 %v1942, %v1990
    %v1992 = vpop.f32.mrf.mxu0
    %v1993 = vadd.f32 %v1944, %v1992
    %1994 = vmatmul.bf16.gmra.mxu0 %v622
    %v1995 = vpop.f32.mrf.mxu0
    %v1996 = vadd.f32 %v1947, %v1995
    %v1997 = vpop.f32.mrf.mxu0
    %v1998 = vadd.f32 %v1949, %v1997
    %1999 = vmatmul.bf16.gmra.mxu0 %v629
    %v2000 = vpop.f32.mrf.mxu0
    %v2001 = vadd.f32 %v1952, %v2000
    %v2002 = vpop.f32.mrf.mxu0
    %v2003 = vadd.f32 %v1954, %v2002
    %2004 = vdwg.mxu0
    %2005 = vmatpush.bf16.msra.mxu0 %v1517
    %2006 = vmatpush.bf16.msra.mxu0 %v1513
    %2007 = vmatpush.bf16.msra.mxu0 %v1509
    %2008 = vmatpush.bf16.msra.mxu0 %v1505
    %2009 = vmatpush.bf16.msra.mxu0 %v1501
    %2010 = vmatpush.bf16.msra.mxu0 %v1497
    %2011 = vmatpush.bf16.msra.mxu0 %v1493
    %2012 = vmatpush.bf16.msra.mxu0 %v1489
    %2013 = vmatmul.bf16.gmra.mxu0 %v581
    %v2014 = vpop.f32.mrf.mxu0
    %v2015 = vadd.f32 %v1966, %v2014
    %v2016 = vpop.f32.mrf.mxu0
    %v2017 = vadd.f32 %v1968, %v2016
    %2018 = vmatmul.bf16.gmra.mxu0 %v588
    %v2019 = vpop.f32.mrf.mxu0
    %v2020 = vadd.f32 %v1971, %v2019
    %v2021 = vpop.f32.mrf.mxu0
    %v2022 = vadd.f32 %v1973, %v2021
    %2023 = vmatmul.bf16.gmra.mxu0 %v595
    %v2024 = vpop.f32.mrf.mxu0
    %v2025 = vadd.f32 %v1976, %v2024
    %v2026 = vpop.f32.mrf.mxu0
    %v2027 = vadd.f32 %v1978, %v2026
    %2028 = vmatmul.bf16.gmra.mxu0 %v602
    %v2029 = vpop.f32.mrf.mxu0
    %v2030 = vadd.f32 %v1981, %v2029
    %v2031 = vpop.f32.mrf.mxu0
    %v2032 = vadd.f32 %v1983, %v2031
    %2033 = vmatmul.bf16.gmra.mxu0 %v609
    %v2034 = vpop.f32.mrf.mxu0
    %v2035 = vadd.f32 %v1986, %v2034
    %v2036 = vpop.f32.mrf.mxu0
    %v2037 = vadd.f32 %v1988, %v2036
    %2038 = vmatmul.bf16.gmra.mxu0 %v616
    %v2039 = vpop.f32.mrf.mxu0
    %v2040 = vadd.f32 %v1991, %v2039
    %v2041 = vpop.f32.mrf.mxu0
    %v2042 = vadd.f32 %v1993, %v2041
    %2043 = vmatmul.bf16.gmra.mxu0 %v623
    %v2044 = vpop.f32.mrf.mxu0
    %v2045 = vadd.f32 %v1996, %v2044
    %v2046 = vpop.f32.mrf.mxu0
    %v2047 = vadd.f32 %v1998, %v2046
    %2048 = vmatmul.bf16.gmra.mxu0 %v630
    %v2049 = vpop.f32.mrf.mxu0
    %v2050 = vadd.f32 %v2001, %v2049
    %v2051 = vpop.f32.mrf.mxu0
    %v2052 = vadd.f32 %v2003, %v2051
    %2053 = vdwg.mxu0
    %2054 = vmatpush.bf16.msra.mxu0 %v1549
    %2055 = vmatpush.bf16.msra.mxu0 %v1545
    %2056 = vmatpush.bf16.msra.mxu0 %v1541
    %2057 = vmatpush.bf16.msra.mxu0 %v1537
    %2058 = vmatpush.bf16.msra.mxu0 %v1533
    %2059 = vmatpush.bf16.msra.mxu0 %v1529
    %2060 = vmatpush.bf16.msra.mxu0 %v1525
    %2061 = vmatpush.bf16.msra.mxu0 %v1521
    %2062 = vmatmul.bf16.gmra.mxu0 %v582
    %v2063 = vpop.f32.mrf.mxu0
    %v2064 = vadd.f32 %v2015, %v2063
    %v2065 = vpop.f32.mrf.mxu0
    %v2066 = vadd.f32 %v2017, %v2065
    %2067 = vmatmul.bf16.gmra.mxu0 %v589
    %v2068 = vpop.f32.mrf.mxu0
    %v2069 = vadd.f32 %v2020, %v2068
    %v2070 = vpop.f32.mrf.mxu0
    %v2071 = vadd.f32 %v2022, %v2070
    %2072 = vmatmul.bf16.gmra.mxu0 %v596
    %v2073 = vpop.f32.mrf.mxu0
    %v2074 = vadd.f32 %v2025, %v2073
    %v2075 = vpop.f32.mrf.mxu0
    %v2076 = vadd.f32 %v2027, %v2075
    %2077 = vmatmul.bf16.gmra.mxu0 %v603
    %v2078 = vpop.f32.mrf.mxu0
    %v2079 = vadd.f32 %v2030, %v2078
    %v2080 = vpop.f32.mrf.mxu0
    %v2081 = vadd.f32 %v2032, %v2080
    %2082 = vmatmul.bf16.gmra.mxu0 %v610
    %v2083 = vpop.f32.mrf.mxu0
    %v2084 = vadd.f32 %v2035, %v2083
    %v2085 = vpop.f32.mrf.mxu0
    %v2086 = vadd.f32 %v2037, %v2085
    %2087 = vmatmul.bf16.gmra.mxu0 %v617
    %v2088 = vpop.f32.mrf.mxu0
    %v2089 = vadd.f32 %v2040, %v2088
    %v2090 = vpop.f32.mrf.mxu0
    %v2091 = vadd.f32 %v2042, %v2090
    %2092 = vmatmul.bf16.gmra.mxu0 %v624
    %v2093 = vpop.f32.mrf.mxu0
    %v2094 = vadd.f32 %v2045, %v2093
    %v2095 = vpop.f32.mrf.mxu0
    %v2096 = vadd.f32 %v2047, %v2095
    %2097 = vmatmul.bf16.gmra.mxu0 %v631
    %v2098 = vpop.f32.mrf.mxu0
    %v2099 = vadd.f32 %v2050, %v2098
    %v2100 = vpop.f32.mrf.mxu0
    %v2101 = vadd.f32 %v2052, %v2100
    %2102 = vdwg.mxu0
    %2103 = vmatpush.bf16.msra.mxu0 %v1581
    %2104 = vmatpush.bf16.msra.mxu0 %v1577
    %2105 = vmatpush.bf16.msra.mxu0 %v1573
    %2106 = vmatpush.bf16.msra.mxu0 %v1569
    %2107 = vmatpush.bf16.msra.mxu0 %v1565
    %2108 = vmatpush.bf16.msra.mxu0 %v1561
    %2109 = vmatpush.bf16.msra.mxu0 %v1557
    %2110 = vmatpush.bf16.msra.mxu0 %v1553
    %2111 = vmatmul.bf16.gmra.mxu0 %v583
    %v2112 = vpop.f32.mrf.mxu0
    %v2113 = vadd.f32 %v2064, %v2112
    %v2114 = vpop.f32.mrf.mxu0
    %v2115 = vadd.f32 %v2066, %v2114
    %2116 = vmatmul.bf16.gmra.mxu0 %v590
    %v2117 = vpop.f32.mrf.mxu0
    %v2118 = vadd.f32 %v2069, %v2117
    %v2119 = vpop.f32.mrf.mxu0
    %v2120 = vadd.f32 %v2071, %v2119
    %2121 = vmatmul.bf16.gmra.mxu0 %v597
    %v2122 = vpop.f32.mrf.mxu0
    %v2123 = vadd.f32 %v2074, %v2122
    %v2124 = vpop.f32.mrf.mxu0
    %v2125 = vadd.f32 %v2076, %v2124
    %2126 = vmatmul.bf16.gmra.mxu0 %v604
    %v2127 = vpop.f32.mrf.mxu0
    %v2128 = vadd.f32 %v2079, %v2127
    %v2129 = vpop.f32.mrf.mxu0
    %v2130 = vadd.f32 %v2081, %v2129
    %2131 = vmatmul.bf16.gmra.mxu0 %v611
    %v2132 = vpop.f32.mrf.mxu0
    %v2133 = vadd.f32 %v2084, %v2132
    %v2134 = vpop.f32.mrf.mxu0
    %v2135 = vadd.f32 %v2086, %v2134
    %2136 = vmatmul.bf16.gmra.mxu0 %v618
    %v2137 = vpop.f32.mrf.mxu0
    %v2138 = vadd.f32 %v2089, %v2137
    %v2139 = vpop.f32.mrf.mxu0
    %v2140 = vadd.f32 %v2091, %v2139
    %2141 = vmatmul.bf16.gmra.mxu0 %v625
    %v2142 = vpop.f32.mrf.mxu0
    %v2143 = vadd.f32 %v2094, %v2142
    %v2144 = vpop.f32.mrf.mxu0
    %v2145 = vadd.f32 %v2096, %v2144
    %2146 = vmatmul.bf16.gmra.mxu0 %v632
    %v2147 = vpop.f32.mrf.mxu0
    %v2148 = vadd.f32 %v2099, %v2147
    %v2149 = vpop.f32.mrf.mxu0
    %v2150 = vadd.f32 %v2101, %v2149
    %2151 = vdwg.mxu0
    %2152 = vmatpush.bf16.msra.mxu0 %v1390
    %2153 = vmatpush.bf16.msra.mxu0 %v1386
    %2154 = vmatpush.bf16.msra.mxu0 %v1382
    %2155 = vmatpush.bf16.msra.mxu0 %v1378
    %2156 = vmatpush.bf16.msra.mxu0 %v1374
    %2157 = vmatpush.bf16.msra.mxu0 %v1370
    %2158 = vmatpush.bf16.msra.mxu0 %v1366
    %2159 = vmatpush.bf16.msra.mxu0 %v1362
    %2160 = vmatmul.bf16.gmra.mxu0 %v577
    %v2161 = vpop.f32.mrf.mxu0
    %v2162 = vadd.f32 %v394, %v2161
    %v2163 = vpop.f32.mrf.mxu0
    %v2164 = vadd.f32 %v394, %v2163
    %2165 = vmatmul.bf16.gmra.mxu0 %v584
    %v2166 = vpop.f32.mrf.mxu0
    %v2167 = vadd.f32 %v394, %v2166
    %v2168 = vpop.f32.mrf.mxu0
    %v2169 = vadd.f32 %v394, %v2168
    %2170 = vmatmul.bf16.gmra.mxu0 %v591
    %v2171 = vpop.f32.mrf.mxu0
    %v2172 = vadd.f32 %v394, %v2171
    %v2173 = vpop.f32.mrf.mxu0
    %v2174 = vadd.f32 %v394, %v2173
    %2175 = vmatmul.bf16.gmra.mxu0 %v598
    %v2176 = vpop.f32.mrf.mxu0
    %v2177 = vadd.f32 %v394, %v2176
    %v2178 = vpop.f32.mrf.mxu0
    %v2179 = vadd.f32 %v394, %v2178
    %2180 = vmatmul.bf16.gmra.mxu0 %v605
    %v2181 = vpop.f32.mrf.mxu0
    %v2182 = vadd.f32 %v394, %v2181
    %v2183 = vpop.f32.mrf.mxu0
    %v2184 = vadd.f32 %v394, %v2183
    %2185 = vmatmul.bf16.gmra.mxu0 %v612
    %v2186 = vpop.f32.mrf.mxu0
    %v2187 = vadd.f32 %v394, %v2186
    %v2188 = vpop.f32.mrf.mxu0
    %v2189 = vadd.f32 %v394, %v2188
    %2190 = vmatmul.bf16.gmra.mxu0 %v619
    %v2191 = vpop.f32.mrf.mxu0
    %v2192 = vadd.f32 %v394, %v2191
    %v2193 = vpop.f32.mrf.mxu0
    %v2194 = vadd.f32 %v394, %v2193
    %2195 = vmatmul.bf16.gmra.mxu0 %v626
    %v2196 = vpop.f32.mrf.mxu0
    %v2197 = vadd.f32 %v394, %v2196
    %v2198 = vpop.f32.mrf.mxu0
    %v2199 = vadd.f32 %v394, %v2198
    %2200 = vdwg.mxu0
    %2201 = vmatpush.bf16.msra.mxu0 %v1422
    %2202 = vmatpush.bf16.msra.mxu0 %v1418
    %2203 = vmatpush.bf16.msra.mxu0 %v1414
    %2204 = vmatpush.bf16.msra.mxu0 %v1410
    %2205 = vmatpush.bf16.msra.mxu0 %v1406
    %2206 = vmatpush.bf16.msra.mxu0 %v1402
    %2207 = vmatpush.bf16.msra.mxu0 %v1398
    %2208 = vmatpush.bf16.msra.mxu0 %v1394
    %2209 = vmatmul.bf16.gmra.mxu0 %v578
    %v2210 = vpop.f32.mrf.mxu0
    %v2211 = vadd.f32 %v2162, %v2210
    %v2212 = vpop.f32.mrf.mxu0
    %v2213 = vadd.f32 %v2164, %v2212
    %2214 = vmatmul.bf16.gmra.mxu0 %v585
    %v2215 = vpop.f32.mrf.mxu0
    %v2216 = vadd.f32 %v2167, %v2215
    %v2217 = vpop.f32.mrf.mxu0
    %v2218 = vadd.f32 %v2169, %v2217
    %2219 = vmatmul.bf16.gmra.mxu0 %v592
    %v2220 = vpop.f32.mrf.mxu0
    %v2221 = vadd.f32 %v2172, %v2220
    %v2222 = vpop.f32.mrf.mxu0
    %v2223 = vadd.f32 %v2174, %v2222
    %2224 = vmatmul.bf16.gmra.mxu0 %v599
    %v2225 = vpop.f32.mrf.mxu0
    %v2226 = vadd.f32 %v2177, %v2225
    %v2227 = vpop.f32.mrf.mxu0
    %v2228 = vadd.f32 %v2179, %v2227
    %2229 = vmatmul.bf16.gmra.mxu0 %v606
    %v2230 = vpop.f32.mrf.mxu0
    %v2231 = vadd.f32 %v2182, %v2230
    %v2232 = vpop.f32.mrf.mxu0
    %v2233 = vadd.f32 %v2184, %v2232
    %2234 = vmatmul.bf16.gmra.mxu0 %v613
    %v2235 = vpop.f32.mrf.mxu0
    %v2236 = vadd.f32 %v2187, %v2235
    %v2237 = vpop.f32.mrf.mxu0
    %v2238 = vadd.f32 %v2189, %v2237
    %2239 = vmatmul.bf16.gmra.mxu0 %v620
    %v2240 = vpop.f32.mrf.mxu0
    %v2241 = vadd.f32 %v2192, %v2240
    %v2242 = vpop.f32.mrf.mxu0
    %v2243 = vadd.f32 %v2194, %v2242
    %2244 = vmatmul.bf16.gmra.mxu0 %v627
    %v2245 = vpop.f32.mrf.mxu0
    %v2246 = vadd.f32 %v2197, %v2245
    %v2247 = vpop.f32.mrf.mxu0
    %v2248 = vadd.f32 %v2199, %v2247
    %2249 = vdwg.mxu0
    %2250 = vmatpush.bf16.msra.mxu0 %v1454
    %2251 = vmatpush.bf16.msra.mxu0 %v1450
    %2252 = vmatpush.bf16.msra.mxu0 %v1446
    %2253 = vmatpush.bf16.msra.mxu0 %v1442
    %2254 = vmatpush.bf16.msra.mxu0 %v1438
    %2255 = vmatpush.bf16.msra.mxu0 %v1434
    %2256 = vmatpush.bf16.msra.mxu0 %v1430
    %2257 = vmatpush.bf16.msra.mxu0 %v1426
    %2258 = vmatmul.bf16.gmra.mxu0 %v579
    %v2259 = vpop.f32.mrf.mxu0
    %v2260 = vadd.f32 %v2211, %v2259
    %v2261 = vpop.f32.mrf.mxu0
    %v2262 = vadd.f32 %v2213, %v2261
    %2263 = vmatmul.bf16.gmra.mxu0 %v586
    %v2264 = vpop.f32.mrf.mxu0
    %v2265 = vadd.f32 %v2216, %v2264
    %v2266 = vpop.f32.mrf.mxu0
    %v2267 = vadd.f32 %v2218, %v2266
    %2268 = vmatmul.bf16.gmra.mxu0 %v593
    %v2269 = vpop.f32.mrf.mxu0
    %v2270 = vadd.f32 %v2221, %v2269
    %v2271 = vpop.f32.mrf.mxu0
    %v2272 = vadd.f32 %v2223, %v2271
    %2273 = vmatmul.bf16.gmra.mxu0 %v600
    %v2274 = vpop.f32.mrf.mxu0
    %v2275 = vadd.f32 %v2226, %v2274
    %v2276 = vpop.f32.mrf.mxu0
    %v2277 = vadd.f32 %v2228, %v2276
    %2278 = vmatmul.bf16.gmra.mxu0 %v607
    %v2279 = vpop.f32.mrf.mxu0
    %v2280 = vadd.f32 %v2231, %v2279
    %v2281 = vpop.f32.mrf.mxu0
    %v2282 = vadd.f32 %v2233, %v2281
    %2283 = vmatmul.bf16.gmra.mxu0 %v614
    %v2284 = vpop.f32.mrf.mxu0
    %v2285 = vadd.f32 %v2236, %v2284
    %v2286 = vpop.f32.mrf.mxu0
    %v2287 = vadd.f32 %v2238, %v2286
    %2288 = vmatmul.bf16.gmra.mxu0 %v621
    %v2289 = vpop.f32.mrf.mxu0
    %v2290 = vadd.f32 %v2241, %v2289
    %v2291 = vpop.f32.mrf.mxu0
    %v2292 = vadd.f32 %v2243, %v2291
    %2293 = vmatmul.bf16.gmra.mxu0 %v628
    %v2294 = vpop.f32.mrf.mxu0
    %v2295 = vadd.f32 %v2246, %v2294
    %v2296 = vpop.f32.mrf.mxu0
    %v2297 = vadd.f32 %v2248, %v2296
    %2298 = vdwg.mxu0
    %2299 = vmatpush.bf16.msra.mxu0 %v1486
    %2300 = vmatpush.bf16.msra.mxu0 %v1482
    %2301 = vmatpush.bf16.msra.mxu0 %v1478
    %2302 = vmatpush.bf16.msra.mxu0 %v1474
    %2303 = vmatpush.bf16.msra.mxu0 %v1470
    %2304 = vmatpush.bf16.msra.mxu0 %v1466
    %2305 = vmatpush.bf16.msra.mxu0 %v1462
    %2306 = vmatpush.bf16.msra.mxu0 %v1458
    %2307 = vmatmul.bf16.gmra.mxu0 %v580
    %v2308 = vpop.f32.mrf.mxu0
    %v2309 = vadd.f32 %v2260, %v2308
    %v2310 = vpop.f32.mrf.mxu0
    %v2311 = vadd.f32 %v2262, %v2310
    %2312 = vmatmul.bf16.gmra.mxu0 %v587
    %v2313 = vpop.f32.mrf.mxu0
    %v2314 = vadd.f32 %v2265, %v2313
    %v2315 = vpop.f32.mrf.mxu0
    %v2316 = vadd.f32 %v2267, %v2315
    %2317 = vmatmul.bf16.gmra.mxu0 %v594
    %v2318 = vpop.f32.mrf.mxu0
    %v2319 = vadd.f32 %v2270, %v2318
    %v2320 = vpop.f32.mrf.mxu0
    %v2321 = vadd.f32 %v2272, %v2320
    %2322 = vmatmul.bf16.gmra.mxu0 %v601
    %v2323 = vpop.f32.mrf.mxu0
    %v2324 = vadd.f32 %v2275, %v2323
    %v2325 = vpop.f32.mrf.mxu0
    %v2326 = vadd.f32 %v2277, %v2325
    %2327 = vmatmul.bf16.gmra.mxu0 %v608
    %v2328 = vpop.f32.mrf.mxu0
    %v2329 = vadd.f32 %v2280, %v2328
    %v2330 = vpop.f32.mrf.mxu0
    %v2331 = vadd.f32 %v2282, %v2330
    %2332 = vmatmul.bf16.gmra.mxu0 %v615
    %v2333 = vpop.f32.mrf.mxu0
    %v2334 = vadd.f32 %v2285, %v2333
    %v2335 = vpop.f32.mrf.mxu0
    %v2336 = vadd.f32 %v2287, %v2335
    %2337 = vmatmul.bf16.gmra.mxu0 %v622
    %v2338 = vpop.f32.mrf.mxu0
    %v2339 = vadd.f32 %v2290, %v2338
    %v2340 = vpop.f32.mrf.mxu0
    %v2341 = vadd.f32 %v2292, %v2340
    %2342 = vmatmul.bf16.gmra.mxu0 %v629
    %v2343 = vpop.f32.mrf.mxu0
    %v2344 = vadd.f32 %v2295, %v2343
    %v2345 = vpop.f32.mrf.mxu0
    %v2346 = vadd.f32 %v2297, %v2345
    %2347 = vdwg.mxu0
    %2348 = vmatpush.bf16.msra.mxu0 %v1518
    %2349 = vmatpush.bf16.msra.mxu0 %v1514
    %2350 = vmatpush.bf16.msra.mxu0 %v1510
    %2351 = vmatpush.bf16.msra.mxu0 %v1506
    %2352 = vmatpush.bf16.msra.mxu0 %v1502
    %2353 = vmatpush.bf16.msra.mxu0 %v1498
    %2354 = vmatpush.bf16.msra.mxu0 %v1494
    %2355 = vmatpush.bf16.msra.mxu0 %v1490
    %2356 = vmatmul.bf16.gmra.mxu0 %v581
    %v2357 = vpop.f32.mrf.mxu0
    %v2358 = vadd.f32 %v2309, %v2357
    %v2359 = vpop.f32.mrf.mxu0
    %v2360 = vadd.f32 %v2311, %v2359
    %2361 = vmatmul.bf16.gmra.mxu0 %v588
    %v2362 = vpop.f32.mrf.mxu0
    %v2363 = vadd.f32 %v2314, %v2362
    %v2364 = vpop.f32.mrf.mxu0
    %v2365 = vadd.f32 %v2316, %v2364
    %2366 = vmatmul.bf16.gmra.mxu0 %v595
    %v2367 = vpop.f32.mrf.mxu0
    %v2368 = vadd.f32 %v2319, %v2367
    %v2369 = vpop.f32.mrf.mxu0
    %v2370 = vadd.f32 %v2321, %v2369
    %2371 = vmatmul.bf16.gmra.mxu0 %v602
    %v2372 = vpop.f32.mrf.mxu0
    %v2373 = vadd.f32 %v2324, %v2372
    %v2374 = vpop.f32.mrf.mxu0
    %v2375 = vadd.f32 %v2326, %v2374
    %2376 = vmatmul.bf16.gmra.mxu0 %v609
    %v2377 = vpop.f32.mrf.mxu0
    %v2378 = vadd.f32 %v2329, %v2377
    %v2379 = vpop.f32.mrf.mxu0
    %v2380 = vadd.f32 %v2331, %v2379
    %2381 = vmatmul.bf16.gmra.mxu0 %v616
    %v2382 = vpop.f32.mrf.mxu0
    %v2383 = vadd.f32 %v2334, %v2382
    %v2384 = vpop.f32.mrf.mxu0
    %v2385 = vadd.f32 %v2336, %v2384
    %2386 = vmatmul.bf16.gmra.mxu0 %v623
    %v2387 = vpop.f32.mrf.mxu0
    %v2388 = vadd.f32 %v2339, %v2387
    %v2389 = vpop.f32.mrf.mxu0
    %v2390 = vadd.f32 %v2341, %v2389
    %2391 = vmatmul.bf16.gmra.mxu0 %v630
    %v2392 = vpop.f32.mrf.mxu0
    %v2393 = vadd.f32 %v2344, %v2392
    %v2394 = vpop.f32.mrf.mxu0
    %v2395 = vadd.f32 %v2346, %v2394
    %2396 = vdwg.mxu0
    %2397 = vmatpush.bf16.msra.mxu0 %v1550
    %2398 = vmatpush.bf16.msra.mxu0 %v1546
    %2399 = vmatpush.bf16.msra.mxu0 %v1542
    %2400 = vmatpush.bf16.msra.mxu0 %v1538
    %2401 = vmatpush.bf16.msra.mxu0 %v1534
    %2402 = vmatpush.bf16.msra.mxu0 %v1530
    %2403 = vmatpush.bf16.msra.mxu0 %v1526
    %2404 = vmatpush.bf16.msra.mxu0 %v1522
    %2405 = vmatmul.bf16.gmra.mxu0 %v582
    %v2406 = vpop.f32.mrf.mxu0
    %v2407 = vadd.f32 %v2358, %v2406
    %v2408 = vpop.f32.mrf.mxu0
    %v2409 = vadd.f32 %v2360, %v2408
    %2410 = vmatmul.bf16.gmra.mxu0 %v589
    %v2411 = vpop.f32.mrf.mxu0
    %v2412 = vadd.f32 %v2363, %v2411
    %v2413 = vpop.f32.mrf.mxu0
    %v2414 = vadd.f32 %v2365, %v2413
    %2415 = vmatmul.bf16.gmra.mxu0 %v596
    %v2416 = vpop.f32.mrf.mxu0
    %v2417 = vadd.f32 %v2368, %v2416
    %v2418 = vpop.f32.mrf.mxu0
    %v2419 = vadd.f32 %v2370, %v2418
    %2420 = vmatmul.bf16.gmra.mxu0 %v603
    %v2421 = vpop.f32.mrf.mxu0
    %v2422 = vadd.f32 %v2373, %v2421
    %v2423 = vpop.f32.mrf.mxu0
    %v2424 = vadd.f32 %v2375, %v2423
    %2425 = vmatmul.bf16.gmra.mxu0 %v610
    %v2426 = vpop.f32.mrf.mxu0
    %v2427 = vadd.f32 %v2378, %v2426
    %v2428 = vpop.f32.mrf.mxu0
    %v2429 = vadd.f32 %v2380, %v2428
    %2430 = vmatmul.bf16.gmra.mxu0 %v617
    %v2431 = vpop.f32.mrf.mxu0
    %v2432 = vadd.f32 %v2383, %v2431
    %v2433 = vpop.f32.mrf.mxu0
    %v2434 = vadd.f32 %v2385, %v2433
    %2435 = vmatmul.bf16.gmra.mxu0 %v624
    %v2436 = vpop.f32.mrf.mxu0
    %v2437 = vadd.f32 %v2388, %v2436
    %v2438 = vpop.f32.mrf.mxu0
    %v2439 = vadd.f32 %v2390, %v2438
    %2440 = vmatmul.bf16.gmra.mxu0 %v631
    %v2441 = vpop.f32.mrf.mxu0
    %v2442 = vadd.f32 %v2393, %v2441
    %v2443 = vpop.f32.mrf.mxu0
    %v2444 = vadd.f32 %v2395, %v2443
    %2445 = vdwg.mxu0
    %2446 = vmatpush.bf16.msra.mxu0 %v1582
    %2447 = vmatpush.bf16.msra.mxu0 %v1578
    %2448 = vmatpush.bf16.msra.mxu0 %v1574
    %2449 = vmatpush.bf16.msra.mxu0 %v1570
    %2450 = vmatpush.bf16.msra.mxu0 %v1566
    %2451 = vmatpush.bf16.msra.mxu0 %v1562
    %2452 = vmatpush.bf16.msra.mxu0 %v1558
    %2453 = vmatpush.bf16.msra.mxu0 %v1554
    %2454 = vmatmul.bf16.gmra.mxu0 %v583
    %v2455 = vpop.f32.mrf.mxu0
    %v2456 = vadd.f32 %v2407, %v2455
    %v2457 = vpop.f32.mrf.mxu0
    %v2458 = vadd.f32 %v2409, %v2457
    %2459 = vmatmul.bf16.gmra.mxu0 %v590
    %v2460 = vpop.f32.mrf.mxu0
    %v2461 = vadd.f32 %v2412, %v2460
    %v2462 = vpop.f32.mrf.mxu0
    %v2463 = vadd.f32 %v2414, %v2462
    %2464 = vmatmul.bf16.gmra.mxu0 %v597
    %v2465 = vpop.f32.mrf.mxu0
    %v2466 = vadd.f32 %v2417, %v2465
    %v2467 = vpop.f32.mrf.mxu0
    %v2468 = vadd.f32 %v2419, %v2467
    %2469 = vmatmul.bf16.gmra.mxu0 %v604
    %v2470 = vpop.f32.mrf.mxu0
    %v2471 = vadd.f32 %v2422, %v2470
    %v2472 = vpop.f32.mrf.mxu0
    %v2473 = vadd.f32 %v2424, %v2472
    %2474 = vmatmul.bf16.gmra.mxu0 %v611
    %v2475 = vpop.f32.mrf.mxu0
    %v2476 = vadd.f32 %v2427, %v2475
    %v2477 = vpop.f32.mrf.mxu0
    %v2478 = vadd.f32 %v2429, %v2477
    %2479 = vmatmul.bf16.gmra.mxu0 %v618
    %v2480 = vpop.f32.mrf.mxu0
    %v2481 = vadd.f32 %v2432, %v2480
    %v2482 = vpop.f32.mrf.mxu0
    %v2483 = vadd.f32 %v2434, %v2482
    %2484 = vmatmul.bf16.gmra.mxu0 %v625
    %v2485 = vpop.f32.mrf.mxu0
    %v2486 = vadd.f32 %v2437, %v2485
    %v2487 = vpop.f32.mrf.mxu0
    %v2488 = vadd.f32 %v2439, %v2487
    %2489 = vmatmul.bf16.gmra.mxu0 %v632
    %v2490 = vpop.f32.mrf.mxu0
    %v2491 = vadd.f32 %v2442, %v2490
    %v2492 = vpop.f32.mrf.mxu0
    %v2493 = vadd.f32 %v2444, %v2492
    %2494 = vdwg.mxu0
    %2495 = vmatpush.bf16.msra.mxu0 %v1391
    %2496 = vmatpush.bf16.msra.mxu0 %v1387
    %2497 = vmatpush.bf16.msra.mxu0 %v1383
    %2498 = vmatpush.bf16.msra.mxu0 %v1379
    %2499 = vmatpush.bf16.msra.mxu0 %v1375
    %2500 = vmatpush.bf16.msra.mxu0 %v1371
    %2501 = vmatpush.bf16.msra.mxu0 %v1367
    %2502 = vmatpush.bf16.msra.mxu0 %v1363
    %2503 = vmatmul.bf16.gmra.mxu0 %v577
    %v2504 = vpop.f32.mrf.mxu0
    %v2505 = vadd.f32 %v395, %v2504
    %v2506 = vpop.f32.mrf.mxu0
    %v2507 = vadd.f32 %v395, %v2506
    %2508 = vmatmul.bf16.gmra.mxu0 %v584
    %v2509 = vpop.f32.mrf.mxu0
    %v2510 = vadd.f32 %v395, %v2509
    %v2511 = vpop.f32.mrf.mxu0
    %v2512 = vadd.f32 %v395, %v2511
    %2513 = vmatmul.bf16.gmra.mxu0 %v591
    %v2514 = vpop.f32.mrf.mxu0
    %v2515 = vadd.f32 %v395, %v2514
    %v2516 = vpop.f32.mrf.mxu0
    %v2517 = vadd.f32 %v395, %v2516
    %2518 = vmatmul.bf16.gmra.mxu0 %v598
    %v2519 = vpop.f32.mrf.mxu0
    %v2520 = vadd.f32 %v395, %v2519
    %v2521 = vpop.f32.mrf.mxu0
    %v2522 = vadd.f32 %v395, %v2521
    %2523 = vmatmul.bf16.gmra.mxu0 %v605
    %v2524 = vpop.f32.mrf.mxu0
    %v2525 = vadd.f32 %v395, %v2524
    %v2526 = vpop.f32.mrf.mxu0
    %v2527 = vadd.f32 %v395, %v2526
    %2528 = vmatmul.bf16.gmra.mxu0 %v612
    %v2529 = vpop.f32.mrf.mxu0
    %v2530 = vadd.f32 %v395, %v2529
    %v2531 = vpop.f32.mrf.mxu0
    %v2532 = vadd.f32 %v395, %v2531
    %2533 = vmatmul.bf16.gmra.mxu0 %v619
    %v2534 = vpop.f32.mrf.mxu0
    %v2535 = vadd.f32 %v395, %v2534
    %v2536 = vpop.f32.mrf.mxu0
    %v2537 = vadd.f32 %v395, %v2536
    %2538 = vmatmul.bf16.gmra.mxu0 %v626
    %v2539 = vpop.f32.mrf.mxu0
    %v2540 = vadd.f32 %v395, %v2539
    %v2541 = vpop.f32.mrf.mxu0
    %v2542 = vadd.f32 %v395, %v2541
    %2543 = vdwg.mxu0
    %2544 = vmatpush.bf16.msra.mxu0 %v1423
    %2545 = vmatpush.bf16.msra.mxu0 %v1419
    %2546 = vmatpush.bf16.msra.mxu0 %v1415
    %2547 = vmatpush.bf16.msra.mxu0 %v1411
    %2548 = vmatpush.bf16.msra.mxu0 %v1407
    %2549 = vmatpush.bf16.msra.mxu0 %v1403
    %2550 = vmatpush.bf16.msra.mxu0 %v1399
    %2551 = vmatpush.bf16.msra.mxu0 %v1395
    %2552 = vmatmul.bf16.gmra.mxu0 %v578
    %v2553 = vpop.f32.mrf.mxu0
    %v2554 = vadd.f32 %v2505, %v2553
    %v2555 = vpop.f32.mrf.mxu0
    %v2556 = vadd.f32 %v2507, %v2555
    %2557 = vmatmul.bf16.gmra.mxu0 %v585
    %v2558 = vpop.f32.mrf.mxu0
    %v2559 = vadd.f32 %v2510, %v2558
    %v2560 = vpop.f32.mrf.mxu0
    %v2561 = vadd.f32 %v2512, %v2560
    %2562 = vmatmul.bf16.gmra.mxu0 %v592
    %v2563 = vpop.f32.mrf.mxu0
    %v2564 = vadd.f32 %v2515, %v2563
    %v2565 = vpop.f32.mrf.mxu0
    %v2566 = vadd.f32 %v2517, %v2565
    %2567 = vmatmul.bf16.gmra.mxu0 %v599
    %v2568 = vpop.f32.mrf.mxu0
    %v2569 = vadd.f32 %v2520, %v2568
    %v2570 = vpop.f32.mrf.mxu0
    %v2571 = vadd.f32 %v2522, %v2570
    %2572 = vmatmul.bf16.gmra.mxu0 %v606
    %v2573 = vpop.f32.mrf.mxu0
    %v2574 = vadd.f32 %v2525, %v2573
    %v2575 = vpop.f32.mrf.mxu0
    %v2576 = vadd.f32 %v2527, %v2575
    %2577 = vmatmul.bf16.gmra.mxu0 %v613
    %v2578 = vpop.f32.mrf.mxu0
    %v2579 = vadd.f32 %v2530, %v2578
    %v2580 = vpop.f32.mrf.mxu0
    %v2581 = vadd.f32 %v2532, %v2580
    %2582 = vmatmul.bf16.gmra.mxu0 %v620
    %v2583 = vpop.f32.mrf.mxu0
    %v2584 = vadd.f32 %v2535, %v2583
    %v2585 = vpop.f32.mrf.mxu0
    %v2586 = vadd.f32 %v2537, %v2585
    %2587 = vmatmul.bf16.gmra.mxu0 %v627
    %v2588 = vpop.f32.mrf.mxu0
    %v2589 = vadd.f32 %v2540, %v2588
    %v2590 = vpop.f32.mrf.mxu0
    %v2591 = vadd.f32 %v2542, %v2590
    %2592 = vdwg.mxu0
    %2593 = vmatpush.bf16.msra.mxu0 %v1455
    %2594 = vmatpush.bf16.msra.mxu0 %v1451
    %2595 = vmatpush.bf16.msra.mxu0 %v1447
    %2596 = vmatpush.bf16.msra.mxu0 %v1443
    %2597 = vmatpush.bf16.msra.mxu0 %v1439
    %2598 = vmatpush.bf16.msra.mxu0 %v1435
    %2599 = vmatpush.bf16.msra.mxu0 %v1431
    %2600 = vmatpush.bf16.msra.mxu0 %v1427
    %2601 = vmatmul.bf16.gmra.mxu0 %v579
    %v2602 = vpop.f32.mrf.mxu0
    %v2603 = vadd.f32 %v2554, %v2602
    %v2604 = vpop.f32.mrf.mxu0
    %v2605 = vadd.f32 %v2556, %v2604
    %2606 = vmatmul.bf16.gmra.mxu0 %v586
    %v2607 = vpop.f32.mrf.mxu0
    %v2608 = vadd.f32 %v2559, %v2607
    %v2609 = vpop.f32.mrf.mxu0
    %v2610 = vadd.f32 %v2561, %v2609
    %2611 = vmatmul.bf16.gmra.mxu0 %v593
    %v2612 = vpop.f32.mrf.mxu0
    %v2613 = vadd.f32 %v2564, %v2612
    %v2614 = vpop.f32.mrf.mxu0
    %v2615 = vadd.f32 %v2566, %v2614
    %2616 = vmatmul.bf16.gmra.mxu0 %v600
    %v2617 = vpop.f32.mrf.mxu0
    %v2618 = vadd.f32 %v2569, %v2617
    %v2619 = vpop.f32.mrf.mxu0
    %v2620 = vadd.f32 %v2571, %v2619
    %2621 = vmatmul.bf16.gmra.mxu0 %v607
    %v2622 = vpop.f32.mrf.mxu0
    %v2623 = vadd.f32 %v2574, %v2622
    %v2624 = vpop.f32.mrf.mxu0
    %v2625 = vadd.f32 %v2576, %v2624
    %2626 = vmatmul.bf16.gmra.mxu0 %v614
    %v2627 = vpop.f32.mrf.mxu0
    %v2628 = vadd.f32 %v2579, %v2627
    %v2629 = vpop.f32.mrf.mxu0
    %v2630 = vadd.f32 %v2581, %v2629
    %2631 = vmatmul.bf16.gmra.mxu0 %v621
    %v2632 = vpop.f32.mrf.mxu0
    %v2633 = vadd.f32 %v2584, %v2632
    %v2634 = vpop.f32.mrf.mxu0
    %v2635 = vadd.f32 %v2586, %v2634
    %2636 = vmatmul.bf16.gmra.mxu0 %v628
    %v2637 = vpop.f32.mrf.mxu0
    %v2638 = vadd.f32 %v2589, %v2637
    %v2639 = vpop.f32.mrf.mxu0
    %v2640 = vadd.f32 %v2591, %v2639
    %2641 = vdwg.mxu0
    %2642 = vmatpush.bf16.msra.mxu0 %v1487
    %2643 = vmatpush.bf16.msra.mxu0 %v1483
    %2644 = vmatpush.bf16.msra.mxu0 %v1479
    %2645 = vmatpush.bf16.msra.mxu0 %v1475
    %2646 = vmatpush.bf16.msra.mxu0 %v1471
    %2647 = vmatpush.bf16.msra.mxu0 %v1467
    %2648 = vmatpush.bf16.msra.mxu0 %v1463
    %2649 = vmatpush.bf16.msra.mxu0 %v1459
    %2650 = vmatmul.bf16.gmra.mxu0 %v580
    %v2651 = vpop.f32.mrf.mxu0
    %v2652 = vadd.f32 %v2603, %v2651
    %v2653 = vpop.f32.mrf.mxu0
    %v2654 = vadd.f32 %v2605, %v2653
    %2655 = vmatmul.bf16.gmra.mxu0 %v587
    %v2656 = vpop.f32.mrf.mxu0
    %v2657 = vadd.f32 %v2608, %v2656
    %v2658 = vpop.f32.mrf.mxu0
    %v2659 = vadd.f32 %v2610, %v2658
    %2660 = vmatmul.bf16.gmra.mxu0 %v594
    %v2661 = vpop.f32.mrf.mxu0
    %v2662 = vadd.f32 %v2613, %v2661
    %v2663 = vpop.f32.mrf.mxu0
    %v2664 = vadd.f32 %v2615, %v2663
    %2665 = vmatmul.bf16.gmra.mxu0 %v601
    %v2666 = vpop.f32.mrf.mxu0
    %v2667 = vadd.f32 %v2618, %v2666
    %v2668 = vpop.f32.mrf.mxu0
    %v2669 = vadd.f32 %v2620, %v2668
    %2670 = vmatmul.bf16.gmra.mxu0 %v608
    %v2671 = vpop.f32.mrf.mxu0
    %v2672 = vadd.f32 %v2623, %v2671
    %v2673 = vpop.f32.mrf.mxu0
    %v2674 = vadd.f32 %v2625, %v2673
    %2675 = vmatmul.bf16.gmra.mxu0 %v615
    %v2676 = vpop.f32.mrf.mxu0
    %v2677 = vadd.f32 %v2628, %v2676
    %v2678 = vpop.f32.mrf.mxu0
    %v2679 = vadd.f32 %v2630, %v2678
    %2680 = vmatmul.bf16.gmra.mxu0 %v622
    %v2681 = vpop.f32.mrf.mxu0
    %v2682 = vadd.f32 %v2633, %v2681
    %v2683 = vpop.f32.mrf.mxu0
    %v2684 = vadd.f32 %v2635, %v2683
    %2685 = vmatmul.bf16.gmra.mxu0 %v629
    %v2686 = vpop.f32.mrf.mxu0
    %v2687 = vadd.f32 %v2638, %v2686
    %v2688 = vpop.f32.mrf.mxu0
    %v2689 = vadd.f32 %v2640, %v2688
    %2690 = vdwg.mxu0
    %2691 = vmatpush.bf16.msra.mxu0 %v1519
    %2692 = vmatpush.bf16.msra.mxu0 %v1515
    %2693 = vmatpush.bf16.msra.mxu0 %v1511
    %2694 = vmatpush.bf16.msra.mxu0 %v1507
    %2695 = vmatpush.bf16.msra.mxu0 %v1503
    %2696 = vmatpush.bf16.msra.mxu0 %v1499
    %2697 = vmatpush.bf16.msra.mxu0 %v1495
    %2698 = vmatpush.bf16.msra.mxu0 %v1491
    %2699 = vmatmul.bf16.gmra.mxu0 %v581
    %v2700 = vpop.f32.mrf.mxu0
    %v2701 = vadd.f32 %v2652, %v2700
    %v2702 = vpop.f32.mrf.mxu0
    %v2703 = vadd.f32 %v2654, %v2702
    %2704 = vmatmul.bf16.gmra.mxu0 %v588
    %v2705 = vpop.f32.mrf.mxu0
    %v2706 = vadd.f32 %v2657, %v2705
    %v2707 = vpop.f32.mrf.mxu0
    %v2708 = vadd.f32 %v2659, %v2707
    %2709 = vmatmul.bf16.gmra.mxu0 %v595
    %v2710 = vpop.f32.mrf.mxu0
    %v2711 = vadd.f32 %v2662, %v2710
    %v2712 = vpop.f32.mrf.mxu0
    %v2713 = vadd.f32 %v2664, %v2712
    %2714 = vmatmul.bf16.gmra.mxu0 %v602
    %v2715 = vpop.f32.mrf.mxu0
    %v2716 = vadd.f32 %v2667, %v2715
    %v2717 = vpop.f32.mrf.mxu0
    %v2718 = vadd.f32 %v2669, %v2717
    %2719 = vmatmul.bf16.gmra.mxu0 %v609
    %v2720 = vpop.f32.mrf.mxu0
    %v2721 = vadd.f32 %v2672, %v2720
    %v2722 = vpop.f32.mrf.mxu0
    %v2723 = vadd.f32 %v2674, %v2722
    %2724 = vmatmul.bf16.gmra.mxu0 %v616
    %v2725 = vpop.f32.mrf.mxu0
    %v2726 = vadd.f32 %v2677, %v2725
    %v2727 = vpop.f32.mrf.mxu0
    %v2728 = vadd.f32 %v2679, %v2727
    %2729 = vmatmul.bf16.gmra.mxu0 %v623
    %v2730 = vpop.f32.mrf.mxu0
    %v2731 = vadd.f32 %v2682, %v2730
    %v2732 = vpop.f32.mrf.mxu0
    %v2733 = vadd.f32 %v2684, %v2732
    %2734 = vmatmul.bf16.gmra.mxu0 %v630
    %v2735 = vpop.f32.mrf.mxu0
    %v2736 = vadd.f32 %v2687, %v2735
    %v2737 = vpop.f32.mrf.mxu0
    %v2738 = vadd.f32 %v2689, %v2737
    %2739 = vdwg.mxu0
    %2740 = vmatpush.bf16.msra.mxu0 %v1551
    %2741 = vmatpush.bf16.msra.mxu0 %v1547
    %2742 = vmatpush.bf16.msra.mxu0 %v1543
    %2743 = vmatpush.bf16.msra.mxu0 %v1539
    %2744 = vmatpush.bf16.msra.mxu0 %v1535
    %2745 = vmatpush.bf16.msra.mxu0 %v1531
    %2746 = vmatpush.bf16.msra.mxu0 %v1527
    %2747 = vmatpush.bf16.msra.mxu0 %v1523
    %2748 = vmatmul.bf16.gmra.mxu0 %v582
    %v2749 = vpop.f32.mrf.mxu0
    %v2750 = vadd.f32 %v2701, %v2749
    %v2751 = vpop.f32.mrf.mxu0
    %v2752 = vadd.f32 %v2703, %v2751
    %2753 = vmatmul.bf16.gmra.mxu0 %v589
    %v2754 = vpop.f32.mrf.mxu0
    %v2755 = vadd.f32 %v2706, %v2754
    %v2756 = vpop.f32.mrf.mxu0
    %v2757 = vadd.f32 %v2708, %v2756
    %2758 = vmatmul.bf16.gmra.mxu0 %v596
    %v2759 = vpop.f32.mrf.mxu0
    %v2760 = vadd.f32 %v2711, %v2759
    %v2761 = vpop.f32.mrf.mxu0
    %v2762 = vadd.f32 %v2713, %v2761
    %2763 = vmatmul.bf16.gmra.mxu0 %v603
    %v2764 = vpop.f32.mrf.mxu0
    %v2765 = vadd.f32 %v2716, %v2764
    %v2766 = vpop.f32.mrf.mxu0
    %v2767 = vadd.f32 %v2718, %v2766
    %2768 = vmatmul.bf16.gmra.mxu0 %v610
    %v2769 = vpop.f32.mrf.mxu0
    %v2770 = vadd.f32 %v2721, %v2769
    %v2771 = vpop.f32.mrf.mxu0
    %v2772 = vadd.f32 %v2723, %v2771
    %2773 = vmatmul.bf16.gmra.mxu0 %v617
    %v2774 = vpop.f32.mrf.mxu0
    %v2775 = vadd.f32 %v2726, %v2774
    %v2776 = vpop.f32.mrf.mxu0
    %v2777 = vadd.f32 %v2728, %v2776
    %2778 = vmatmul.bf16.gmra.mxu0 %v624
    %v2779 = vpop.f32.mrf.mxu0
    %v2780 = vadd.f32 %v2731, %v2779
    %v2781 = vpop.f32.mrf.mxu0
    %v2782 = vadd.f32 %v2733, %v2781
    %2783 = vmatmul.bf16.gmra.mxu0 %v631
    %v2784 = vpop.f32.mrf.mxu0
    %v2785 = vadd.f32 %v2736, %v2784
    %v2786 = vpop.f32.mrf.mxu0
    %v2787 = vadd.f32 %v2738, %v2786
    %2788 = vdwg.mxu0
    %2789 = vmatpush.bf16.msra.mxu0 %v1583
    %2790 = vmatpush.bf16.msra.mxu0 %v1579
    %2791 = vmatpush.bf16.msra.mxu0 %v1575
    %2792 = vmatpush.bf16.msra.mxu0 %v1571
    %2793 = vmatpush.bf16.msra.mxu0 %v1567
    %2794 = vmatpush.bf16.msra.mxu0 %v1563
    %2795 = vmatpush.bf16.msra.mxu0 %v1559
    %2796 = vmatpush.bf16.msra.mxu0 %v1555
    %2797 = vmatmul.bf16.gmra.mxu0 %v583
    %v2798 = vpop.f32.mrf.mxu0
    %v2799 = vadd.f32 %v2750, %v2798
    %v2800 = vpop.f32.mrf.mxu0
    %v2801 = vadd.f32 %v2752, %v2800
    %2802 = vmatmul.bf16.gmra.mxu0 %v590
    %v2803 = vpop.f32.mrf.mxu0
    %v2804 = vadd.f32 %v2755, %v2803
    %v2805 = vpop.f32.mrf.mxu0
    %v2806 = vadd.f32 %v2757, %v2805
    %2807 = vmatmul.bf16.gmra.mxu0 %v597
    %v2808 = vpop.f32.mrf.mxu0
    %v2809 = vadd.f32 %v2760, %v2808
    %v2810 = vpop.f32.mrf.mxu0
    %v2811 = vadd.f32 %v2762, %v2810
    %2812 = vmatmul.bf16.gmra.mxu0 %v604
    %v2813 = vpop.f32.mrf.mxu0
    %v2814 = vadd.f32 %v2765, %v2813
    %v2815 = vpop.f32.mrf.mxu0
    %v2816 = vadd.f32 %v2767, %v2815
    %2817 = vmatmul.bf16.gmra.mxu0 %v611
    %v2818 = vpop.f32.mrf.mxu0
    %v2819 = vadd.f32 %v2770, %v2818
    %v2820 = vpop.f32.mrf.mxu0
    %v2821 = vadd.f32 %v2772, %v2820
    %2822 = vmatmul.bf16.gmra.mxu0 %v618
    %v2823 = vpop.f32.mrf.mxu0
    %v2824 = vadd.f32 %v2775, %v2823
    %v2825 = vpop.f32.mrf.mxu0
    %v2826 = vadd.f32 %v2777, %v2825
    %2827 = vmatmul.bf16.gmra.mxu0 %v625
    %v2828 = vpop.f32.mrf.mxu0
    %v2829 = vadd.f32 %v2780, %v2828
    %v2830 = vpop.f32.mrf.mxu0
    %v2831 = vadd.f32 %v2782, %v2830
    %2832 = vmatmul.bf16.gmra.mxu0 %v632
    %v2833 = vpop.f32.mrf.mxu0
    %v2834 = vadd.f32 %v2785, %v2833
    %v2835 = vpop.f32.mrf.mxu0
    %v2836 = vadd.f32 %v2787, %v2835
    %2837 = vdwg.mxu0
    %2838 = vmatpush.bf16.msra.mxu0 %v1392
    %2839 = vmatpush.bf16.msra.mxu0 %v1388
    %2840 = vmatpush.bf16.msra.mxu0 %v1384
    %2841 = vmatpush.bf16.msra.mxu0 %v1380
    %2842 = vmatpush.bf16.msra.mxu0 %v1376
    %2843 = vmatpush.bf16.msra.mxu0 %v1372
    %2844 = vmatpush.bf16.msra.mxu0 %v1368
    %2845 = vmatpush.bf16.msra.mxu0 %v1364
    %2846 = vmatmul.bf16.gmra.mxu0 %v577
    %v2847 = vpop.f32.mrf.mxu0
    %v2848 = vadd.f32 %v396, %v2847
    %v2849 = vpop.f32.mrf.mxu0
    %v2850 = vadd.f32 %v396, %v2849
    %2851 = vmatmul.bf16.gmra.mxu0 %v584
    %v2852 = vpop.f32.mrf.mxu0
    %v2853 = vadd.f32 %v396, %v2852
    %v2854 = vpop.f32.mrf.mxu0
    %v2855 = vadd.f32 %v396, %v2854
    %2856 = vmatmul.bf16.gmra.mxu0 %v591
    %v2857 = vpop.f32.mrf.mxu0
    %v2858 = vadd.f32 %v396, %v2857
    %v2859 = vpop.f32.mrf.mxu0
    %v2860 = vadd.f32 %v396, %v2859
    %2861 = vmatmul.bf16.gmra.mxu0 %v598
    %v2862 = vpop.f32.mrf.mxu0
    %v2863 = vadd.f32 %v396, %v2862
    %v2864 = vpop.f32.mrf.mxu0
    %v2865 = vadd.f32 %v396, %v2864
    %2866 = vmatmul.bf16.gmra.mxu0 %v605
    %v2867 = vpop.f32.mrf.mxu0
    %v2868 = vadd.f32 %v396, %v2867
    %v2869 = vpop.f32.mrf.mxu0
    %v2870 = vadd.f32 %v396, %v2869
    %2871 = vmatmul.bf16.gmra.mxu0 %v612
    %v2872 = vpop.f32.mrf.mxu0
    %v2873 = vadd.f32 %v396, %v2872
    %v2874 = vpop.f32.mrf.mxu0
    %v2875 = vadd.f32 %v396, %v2874
    %2876 = vmatmul.bf16.gmra.mxu0 %v619
    %v2877 = vpop.f32.mrf.mxu0
    %v2878 = vadd.f32 %v396, %v2877
    %v2879 = vpop.f32.mrf.mxu0
    %v2880 = vadd.f32 %v396, %v2879
    %2881 = vmatmul.bf16.gmra.mxu0 %v626
    %v2882 = vpop.f32.mrf.mxu0
    %v2883 = vadd.f32 %v396, %v2882
    %v2884 = vpop.f32.mrf.mxu0
    %v2885 = vadd.f32 %v396, %v2884
    %2886 = vdwg.mxu0
    %2887 = vmatpush.bf16.msra.mxu0 %v1424
    %2888 = vmatpush.bf16.msra.mxu0 %v1420
    %2889 = vmatpush.bf16.msra.mxu0 %v1416
    %2890 = vmatpush.bf16.msra.mxu0 %v1412
    %2891 = vmatpush.bf16.msra.mxu0 %v1408
    %2892 = vmatpush.bf16.msra.mxu0 %v1404
    %2893 = vmatpush.bf16.msra.mxu0 %v1400
    %2894 = vmatpush.bf16.msra.mxu0 %v1396
    %2895 = vmatmul.bf16.gmra.mxu0 %v578
    %v2896 = vpop.f32.mrf.mxu0
    %v2897 = vadd.f32 %v2848, %v2896
    %v2898 = vpop.f32.mrf.mxu0
    %v2899 = vadd.f32 %v2850, %v2898
    %2900 = vmatmul.bf16.gmra.mxu0 %v585
    %v2901 = vpop.f32.mrf.mxu0
    %v2902 = vadd.f32 %v2853, %v2901
    %v2903 = vpop.f32.mrf.mxu0
    %v2904 = vadd.f32 %v2855, %v2903
    %2905 = vmatmul.bf16.gmra.mxu0 %v592
    %v2906 = vpop.f32.mrf.mxu0
    %v2907 = vadd.f32 %v2858, %v2906
    %v2908 = vpop.f32.mrf.mxu0
    %v2909 = vadd.f32 %v2860, %v2908
    %2910 = vmatmul.bf16.gmra.mxu0 %v599
    %v2911 = vpop.f32.mrf.mxu0
    %v2912 = vadd.f32 %v2863, %v2911
    %v2913 = vpop.f32.mrf.mxu0
    %v2914 = vadd.f32 %v2865, %v2913
    %2915 = vmatmul.bf16.gmra.mxu0 %v606
    %v2916 = vpop.f32.mrf.mxu0
    %v2917 = vadd.f32 %v2868, %v2916
    %v2918 = vpop.f32.mrf.mxu0
    %v2919 = vadd.f32 %v2870, %v2918
    %2920 = vmatmul.bf16.gmra.mxu0 %v613
    %v2921 = vpop.f32.mrf.mxu0
    %v2922 = vadd.f32 %v2873, %v2921
    %v2923 = vpop.f32.mrf.mxu0
    %v2924 = vadd.f32 %v2875, %v2923
    %2925 = vmatmul.bf16.gmra.mxu0 %v620
    %v2926 = vpop.f32.mrf.mxu0
    %v2927 = vadd.f32 %v2878, %v2926
    %v2928 = vpop.f32.mrf.mxu0
    %v2929 = vadd.f32 %v2880, %v2928
    %2930 = vmatmul.bf16.gmra.mxu0 %v627
    %v2931 = vpop.f32.mrf.mxu0
    %v2932 = vadd.f32 %v2883, %v2931
    %v2933 = vpop.f32.mrf.mxu0
    %v2934 = vadd.f32 %v2885, %v2933
    %2935 = vdwg.mxu0
    %2936 = vmatpush.bf16.msra.mxu0 %v1456
    %2937 = vmatpush.bf16.msra.mxu0 %v1452
    %2938 = vmatpush.bf16.msra.mxu0 %v1448
    %2939 = vmatpush.bf16.msra.mxu0 %v1444
    %2940 = vmatpush.bf16.msra.mxu0 %v1440
    %2941 = vmatpush.bf16.msra.mxu0 %v1436
    %2942 = vmatpush.bf16.msra.mxu0 %v1432
    %2943 = vmatpush.bf16.msra.mxu0 %v1428
    %2944 = vmatmul.bf16.gmra.mxu0 %v579
    %v2945 = vpop.f32.mrf.mxu0
    %v2946 = vadd.f32 %v2897, %v2945
    %v2947 = vpop.f32.mrf.mxu0
    %v2948 = vadd.f32 %v2899, %v2947
    %2949 = vmatmul.bf16.gmra.mxu0 %v586
    %v2950 = vpop.f32.mrf.mxu0
    %v2951 = vadd.f32 %v2902, %v2950
    %v2952 = vpop.f32.mrf.mxu0
    %v2953 = vadd.f32 %v2904, %v2952
    %2954 = vmatmul.bf16.gmra.mxu0 %v593
    %v2955 = vpop.f32.mrf.mxu0
    %v2956 = vadd.f32 %v2907, %v2955
    %v2957 = vpop.f32.mrf.mxu0
    %v2958 = vadd.f32 %v2909, %v2957
    %2959 = vmatmul.bf16.gmra.mxu0 %v600
    %v2960 = vpop.f32.mrf.mxu0
    %v2961 = vadd.f32 %v2912, %v2960
    %v2962 = vpop.f32.mrf.mxu0
    %v2963 = vadd.f32 %v2914, %v2962
    %2964 = vmatmul.bf16.gmra.mxu0 %v607
    %v2965 = vpop.f32.mrf.mxu0
    %v2966 = vadd.f32 %v2917, %v2965
    %v2967 = vpop.f32.mrf.mxu0
    %v2968 = vadd.f32 %v2919, %v2967
    %2969 = vmatmul.bf16.gmra.mxu0 %v614
    %v2970 = vpop.f32.mrf.mxu0
    %v2971 = vadd.f32 %v2922, %v2970
    %v2972 = vpop.f32.mrf.mxu0
    %v2973 = vadd.f32 %v2924, %v2972
    %2974 = vmatmul.bf16.gmra.mxu0 %v621
    %v2975 = vpop.f32.mrf.mxu0
    %v2976 = vadd.f32 %v2927, %v2975
    %v2977 = vpop.f32.mrf.mxu0
    %v2978 = vadd.f32 %v2929, %v2977
    %2979 = vmatmul.bf16.gmra.mxu0 %v628
    %v2980 = vpop.f32.mrf.mxu0
    %v2981 = vadd.f32 %v2932, %v2980
    %v2982 = vpop.f32.mrf.mxu0
    %v2983 = vadd.f32 %v2934, %v2982
    %2984 = vdwg.mxu0
    %2985 = vmatpush.bf16.msra.mxu0 %v1488
    %2986 = vmatpush.bf16.msra.mxu0 %v1484
    %2987 = vmatpush.bf16.msra.mxu0 %v1480
    %2988 = vmatpush.bf16.msra.mxu0 %v1476
    %2989 = vmatpush.bf16.msra.mxu0 %v1472
    %2990 = vmatpush.bf16.msra.mxu0 %v1468
    %2991 = vmatpush.bf16.msra.mxu0 %v1464
    %2992 = vmatpush.bf16.msra.mxu0 %v1460
    %2993 = vmatmul.bf16.gmra.mxu0 %v580
    %v2994 = vpop.f32.mrf.mxu0
    %v2995 = vadd.f32 %v2946, %v2994
    %v2996 = vpop.f32.mrf.mxu0
    %v2997 = vadd.f32 %v2948, %v2996
    %2998 = vmatmul.bf16.gmra.mxu0 %v587
    %v2999 = vpop.f32.mrf.mxu0
    %v3000 = vadd.f32 %v2951, %v2999
    %v3001 = vpop.f32.mrf.mxu0
    %v3002 = vadd.f32 %v2953, %v3001
    %3003 = vmatmul.bf16.gmra.mxu0 %v594
    %v3004 = vpop.f32.mrf.mxu0
    %v3005 = vadd.f32 %v2956, %v3004
    %v3006 = vpop.f32.mrf.mxu0
    %v3007 = vadd.f32 %v2958, %v3006
    %3008 = vmatmul.bf16.gmra.mxu0 %v601
    %v3009 = vpop.f32.mrf.mxu0
    %v3010 = vadd.f32 %v2961, %v3009
    %v3011 = vpop.f32.mrf.mxu0
    %v3012 = vadd.f32 %v2963, %v3011
    %3013 = vmatmul.bf16.gmra.mxu0 %v608
    %v3014 = vpop.f32.mrf.mxu0
    %v3015 = vadd.f32 %v2966, %v3014
    %v3016 = vpop.f32.mrf.mxu0
    %v3017 = vadd.f32 %v2968, %v3016
    %3018 = vmatmul.bf16.gmra.mxu0 %v615
    %v3019 = vpop.f32.mrf.mxu0
    %v3020 = vadd.f32 %v2971, %v3019
    %v3021 = vpop.f32.mrf.mxu0
    %v3022 = vadd.f32 %v2973, %v3021
    %3023 = vmatmul.bf16.gmra.mxu0 %v622
    %v3024 = vpop.f32.mrf.mxu0
    %v3025 = vadd.f32 %v2976, %v3024
    %v3026 = vpop.f32.mrf.mxu0
    %v3027 = vadd.f32 %v2978, %v3026
    %3028 = vmatmul.bf16.gmra.mxu0 %v629
    %v3029 = vpop.f32.mrf.mxu0
    %v3030 = vadd.f32 %v2981, %v3029
    %v3031 = vpop.f32.mrf.mxu0
    %v3032 = vadd.f32 %v2983, %v3031
    %3033 = vdwg.mxu0
    %3034 = vmatpush.bf16.msra.mxu0 %v1520
    %3035 = vmatpush.bf16.msra.mxu0 %v1516
    %3036 = vmatpush.bf16.msra.mxu0 %v1512
    %3037 = vmatpush.bf16.msra.mxu0 %v1508
    %3038 = vmatpush.bf16.msra.mxu0 %v1504
    %3039 = vmatpush.bf16.msra.mxu0 %v1500
    %3040 = vmatpush.bf16.msra.mxu0 %v1496
    %3041 = vmatpush.bf16.msra.mxu0 %v1492
    %3042 = vmatmul.bf16.gmra.mxu0 %v581
    %v3043 = vpop.f32.mrf.mxu0
    %v3044 = vadd.f32 %v2995, %v3043
    %v3045 = vpop.f32.mrf.mxu0
    %v3046 = vadd.f32 %v2997, %v3045
    %3047 = vmatmul.bf16.gmra.mxu0 %v588
    %v3048 = vpop.f32.mrf.mxu0
    %v3049 = vadd.f32 %v3000, %v3048
    %v3050 = vpop.f32.mrf.mxu0
    %v3051 = vadd.f32 %v3002, %v3050
    %3052 = vmatmul.bf16.gmra.mxu0 %v595
    %v3053 = vpop.f32.mrf.mxu0
    %v3054 = vadd.f32 %v3005, %v3053
    %v3055 = vpop.f32.mrf.mxu0
    %v3056 = vadd.f32 %v3007, %v3055
    %3057 = vmatmul.bf16.gmra.mxu0 %v602
    %v3058 = vpop.f32.mrf.mxu0
    %v3059 = vadd.f32 %v3010, %v3058
    %v3060 = vpop.f32.mrf.mxu0
    %v3061 = vadd.f32 %v3012, %v3060
    %3062 = vmatmul.bf16.gmra.mxu0 %v609
    %v3063 = vpop.f32.mrf.mxu0
    %v3064 = vadd.f32 %v3015, %v3063
    %v3065 = vpop.f32.mrf.mxu0
    %v3066 = vadd.f32 %v3017, %v3065
    %3067 = vmatmul.bf16.gmra.mxu0 %v616
    %v3068 = vpop.f32.mrf.mxu0
    %v3069 = vadd.f32 %v3020, %v3068
    %v3070 = vpop.f32.mrf.mxu0
    %v3071 = vadd.f32 %v3022, %v3070
    %3072 = vmatmul.bf16.gmra.mxu0 %v623
    %v3073 = vpop.f32.mrf.mxu0
    %v3074 = vadd.f32 %v3025, %v3073
    %v3075 = vpop.f32.mrf.mxu0
    %v3076 = vadd.f32 %v3027, %v3075
    %3077 = vmatmul.bf16.gmra.mxu0 %v630
    %v3078 = vpop.f32.mrf.mxu0
    %v3079 = vadd.f32 %v3030, %v3078
    %v3080 = vpop.f32.mrf.mxu0
    %v3081 = vadd.f32 %v3032, %v3080
    %3082 = vdwg.mxu0
    %3083 = vmatpush.bf16.msra.mxu0 %v1552
    %3084 = vmatpush.bf16.msra.mxu0 %v1548
    %3085 = vmatpush.bf16.msra.mxu0 %v1544
    %3086 = vmatpush.bf16.msra.mxu0 %v1540
    %3087 = vmatpush.bf16.msra.mxu0 %v1536
    %3088 = vmatpush.bf16.msra.mxu0 %v1532
    %3089 = vmatpush.bf16.msra.mxu0 %v1528
    %3090 = vmatpush.bf16.msra.mxu0 %v1524
    %3091 = vmatmul.bf16.gmra.mxu0 %v582
    %v3092 = vpop.f32.mrf.mxu0
    %v3093 = vadd.f32 %v3044, %v3092
    %v3094 = vpop.f32.mrf.mxu0
    %v3095 = vadd.f32 %v3046, %v3094
    %3096 = vmatmul.bf16.gmra.mxu0 %v589
    %v3097 = vpop.f32.mrf.mxu0
    %v3098 = vadd.f32 %v3049, %v3097
    %v3099 = vpop.f32.mrf.mxu0
    %v3100 = vadd.f32 %v3051, %v3099
    %3101 = vmatmul.bf16.gmra.mxu0 %v596
    %v3102 = vpop.f32.mrf.mxu0
    %v3103 = vadd.f32 %v3054, %v3102
    %v3104 = vpop.f32.mrf.mxu0
    %v3105 = vadd.f32 %v3056, %v3104
    %3106 = vmatmul.bf16.gmra.mxu0 %v603
    %v3107 = vpop.f32.mrf.mxu0
    %v3108 = vadd.f32 %v3059, %v3107
    %v3109 = vpop.f32.mrf.mxu0
    %v3110 = vadd.f32 %v3061, %v3109
    %3111 = vmatmul.bf16.gmra.mxu0 %v610
    %v3112 = vpop.f32.mrf.mxu0
    %v3113 = vadd.f32 %v3064, %v3112
    %v3114 = vpop.f32.mrf.mxu0
    %v3115 = vadd.f32 %v3066, %v3114
    %3116 = vmatmul.bf16.gmra.mxu0 %v617
    %v3117 = vpop.f32.mrf.mxu0
    %v3118 = vadd.f32 %v3069, %v3117
    %v3119 = vpop.f32.mrf.mxu0
    %v3120 = vadd.f32 %v3071, %v3119
    %3121 = vmatmul.bf16.gmra.mxu0 %v624
    %v3122 = vpop.f32.mrf.mxu0
    %v3123 = vadd.f32 %v3074, %v3122
    %v3124 = vpop.f32.mrf.mxu0
    %v3125 = vadd.f32 %v3076, %v3124
    %3126 = vmatmul.bf16.gmra.mxu0 %v631
    %v3127 = vpop.f32.mrf.mxu0
    %v3128 = vadd.f32 %v3079, %v3127
    %v3129 = vpop.f32.mrf.mxu0
    %v3130 = vadd.f32 %v3081, %v3129
    %3131 = vdwg.mxu0
    %3132 = vmatpush.bf16.msra.mxu0 %v1584
    %3133 = vmatpush.bf16.msra.mxu0 %v1580
    %3134 = vmatpush.bf16.msra.mxu0 %v1576
    %3135 = vmatpush.bf16.msra.mxu0 %v1572
    %3136 = vmatpush.bf16.msra.mxu0 %v1568
    %3137 = vmatpush.bf16.msra.mxu0 %v1564
    %3138 = vmatpush.bf16.msra.mxu0 %v1560
    %3139 = vmatpush.bf16.msra.mxu0 %v1556
    %3140 = vmatmul.bf16.gmra.mxu0 %v583
    %v3141 = vpop.f32.mrf.mxu0
    %v3142 = vadd.f32 %v3093, %v3141
    %v3143 = vpop.f32.mrf.mxu0
    %v3144 = vadd.f32 %v3095, %v3143
    %3145 = vmatmul.bf16.gmra.mxu0 %v590
    %v3146 = vpop.f32.mrf.mxu0
    %v3147 = vadd.f32 %v3098, %v3146
    %v3148 = vpop.f32.mrf.mxu0
    %v3149 = vadd.f32 %v3100, %v3148
    %3150 = vmatmul.bf16.gmra.mxu0 %v597
    %v3151 = vpop.f32.mrf.mxu0
    %v3152 = vadd.f32 %v3103, %v3151
    %v3153 = vpop.f32.mrf.mxu0
    %v3154 = vadd.f32 %v3105, %v3153
    %3155 = vmatmul.bf16.gmra.mxu0 %v604
    %v3156 = vpop.f32.mrf.mxu0
    %v3157 = vadd.f32 %v3108, %v3156
    %v3158 = vpop.f32.mrf.mxu0
    %v3159 = vadd.f32 %v3110, %v3158
    %3160 = vmatmul.bf16.gmra.mxu0 %v611
    %v3161 = vpop.f32.mrf.mxu0
    %v3162 = vadd.f32 %v3113, %v3161
    %v3163 = vpop.f32.mrf.mxu0
    %v3164 = vadd.f32 %v3115, %v3163
    %3165 = vmatmul.bf16.gmra.mxu0 %v618
    %v3166 = vpop.f32.mrf.mxu0
    %v3167 = vadd.f32 %v3118, %v3166
    %v3168 = vpop.f32.mrf.mxu0
    %v3169 = vadd.f32 %v3120, %v3168
    %3170 = vmatmul.bf16.gmra.mxu0 %v625
    %v3171 = vpop.f32.mrf.mxu0
    %v3172 = vadd.f32 %v3123, %v3171
    %v3173 = vpop.f32.mrf.mxu0
    %v3174 = vadd.f32 %v3125, %v3173
    %3175 = vmatmul.bf16.gmra.mxu0 %v632
    %v3176 = vpop.f32.mrf.mxu0
    %v3177 = vadd.f32 %v3128, %v3176
    %v3178 = vpop.f32.mrf.mxu0
    %v3179 = vadd.f32 %v3130, %v3178
    %3180 = vdwg.mxu0
    %v3181 = vmul.f32 %v2113, 0.2
    %v3182 = vmul.f32 %v2456, 0.2
    %v3183 = vmul.f32 %v2799, 0.2
    %v3184 = vmul.f32 %v3142, 0.2
    %v3185 = vmul.f32 %v2115, 0.2
    %v3186 = vmul.f32 %v2458, 0.2
    %v3187 = vmul.f32 %v2801, 0.2
    %v3188 = vmul.f32 %v3144, 0.2
    %v3189 = vmul.f32 %v2118, 0.2
    %v3190 = vmul.f32 %v2461, 0.2
    %v3191 = vmul.f32 %v2804, 0.2
    %v3192 = vmul.f32 %v3147, 0.2
    %v3193 = vmul.f32 %v2120, 0.2
    %v3194 = vmul.f32 %v2463, 0.2
    %v3195 = vmul.f32 %v2806, 0.2
    %v3196 = vmul.f32 %v3149, 0.2
    %v3197 = vmul.f32 %v2123, 0.2
    %v3198 = vmul.f32 %v2466, 0.2
    %v3199 = vmul.f32 %v2809, 0.2
    %v3200 = vmul.f32 %v3152, 0.2
    %v3201 = vmul.f32 %v2125, 0.2
    %v3202 = vmul.f32 %v2468, 0.2
    %v3203 = vmul.f32 %v2811, 0.2
    %v3204 = vmul.f32 %v3154, 0.2
    %v3205 = vmul.f32 %v2128, 0.2
    %v3206 = vmul.f32 %v2471, 0.2
    %v3207 = vmul.f32 %v2814, 0.2
    %v3208 = vmul.f32 %v3157, 0.2
    %v3209 = vmul.f32 %v2130, 0.2
    %v3210 = vmul.f32 %v2473, 0.2
    %v3211 = vmul.f32 %v2816, 0.2
    %v3212 = vmul.f32 %v3159, 0.2
    %v3213 = vmul.f32 %v2133, 0.2
    %v3214 = vmul.f32 %v2476, 0.2
    %v3215 = vmul.f32 %v2819, 0.2
    %v3216 = vmul.f32 %v3162, 0.2
    %v3217 = vmul.f32 %v2135, 0.2
    %v3218 = vmul.f32 %v2478, 0.2
    %v3219 = vmul.f32 %v2821, 0.2
    %v3220 = vmul.f32 %v3164, 0.2
    %v3221 = vmul.f32 %v2138, 0.2
    %v3222 = vmul.f32 %v2481, 0.2
    %v3223 = vmul.f32 %v2824, 0.2
    %v3224 = vmul.f32 %v3167, 0.2
    %v3225 = vmul.f32 %v2140, 0.2
    %v3226 = vmul.f32 %v2483, 0.2
    %v3227 = vmul.f32 %v2826, 0.2
    %v3228 = vmul.f32 %v3169, 0.2
    %v3229 = vmul.f32 %v2143, 0.2
    %v3230 = vmul.f32 %v2486, 0.2
    %v3231 = vmul.f32 %v2829, 0.2
    %v3232 = vmul.f32 %v3172, 0.2
    %v3233 = vmul.f32 %v2145, 0.2
    %v3234 = vmul.f32 %v2488, 0.2
    %v3235 = vmul.f32 %v2831, 0.2
    %v3236 = vmul.f32 %v3174, 0.2
    %v3237 = vmul.f32 %v2148, 0.2
    %v3238 = vmul.f32 %v2491, 0.2
    %v3239 = vmul.f32 %v2834, 0.2
    %v3240 = vmul.f32 %v3177, 0.2
    %v3241 = vmul.f32 %v2150, 0.2
    %v3242 = vmul.f32 %v2493, 0.2
    %v3243 = vmul.f32 %v2836, 0.2
    %v3244 = vmul.f32 %v3179, 0.2
    %v3245 = vmax.f32 %v2113, %v3181
    %v3246 = vmax.f32 %v2456, %v3182
    %v3247 = vmax.f32 %v2799, %v3183
    %v3248 = vmax.f32 %v3142, %v3184
    %v3249 = vmax.f32 %v2115, %v3185
    %v3250 = vmax.f32 %v2458, %v3186
    %v3251 = vmax.f32 %v2801, %v3187
    %v3252 = vmax.f32 %v3144, %v3188
    %v3253 = vmax.f32 %v2118, %v3189
    %v3254 = vmax.f32 %v2461, %v3190
    %v3255 = vmax.f32 %v2804, %v3191
    %v3256 = vmax.f32 %v3147, %v3192
    %v3257 = vmax.f32 %v2120, %v3193
    %v3258 = vmax.f32 %v2463, %v3194
    %v3259 = vmax.f32 %v2806, %v3195
    %v3260 = vmax.f32 %v3149, %v3196
    %v3261 = vmax.f32 %v2123, %v3197
    %v3262 = vmax.f32 %v2466, %v3198
    %v3263 = vmax.f32 %v2809, %v3199
    %v3264 = vmax.f32 %v3152, %v3200
    %v3265 = vmax.f32 %v2125, %v3201
    %v3266 = vmax.f32 %v2468, %v3202
    %v3267 = vmax.f32 %v2811, %v3203
    %v3268 = vmax.f32 %v3154, %v3204
    %v3269 = vmax.f32 %v2128, %v3205
    %v3270 = vmax.f32 %v2471, %v3206
    %v3271 = vmax.f32 %v2814, %v3207
    %v3272 = vmax.f32 %v3157, %v3208
    %v3273 = vmax.f32 %v2130, %v3209
    %v3274 = vmax.f32 %v2473, %v3210
    %v3275 = vmax.f32 %v2816, %v3211
    %v3276 = vmax.f32 %v3159, %v3212
    %v3277 = vmax.f32 %v2133, %v3213
    %v3278 = vmax.f32 %v2476, %v3214
    %v3279 = vmax.f32 %v2819, %v3215
    %v3280 = vmax.f32 %v3162, %v3216
    %v3281 = vmax.f32 %v2135, %v3217
    %v3282 = vmax.f32 %v2478, %v3218
    %v3283 = vmax.f32 %v2821, %v3219
    %v3284 = vmax.f32 %v3164, %v3220
    %v3285 = vmax.f32 %v2138, %v3221
    %v3286 = vmax.f32 %v2481, %v3222
    %v3287 = vmax.f32 %v2824, %v3223
    %v3288 = vmax.f32 %v3167, %v3224
    %v3289 = vmax.f32 %v2140, %v3225
    %v3290 = vmax.f32 %v2483, %v3226
    %v3291 = vmax.f32 %v2826, %v3227
    %v3292 = vmax.f32 %v3169, %v3228
    %v3293 = vmax.f32 %v2143, %v3229
    %v3294 = vmax.f32 %v2486, %v3230
    %v3295 = vmax.f32 %v2829, %v3231
    %v3296 = vmax.f32 %v3172, %v3232
    %v3297 = vmax.f32 %v2145, %v3233
    %v3298 = vmax.f32 %v2488, %v3234
    %v3299 = vmax.f32 %v2831, %v3235
    %v3300 = vmax.f32 %v3174, %v3236
    %v3301 = vmax.f32 %v2148, %v3237
    %v3302 = vmax.f32 %v2491, %v3238
    %v3303 = vmax.f32 %v2834, %v3239
    %v3304 = vmax.f32 %v3177, %v3240
    %v3305 = vmax.f32 %v2150, %v3241
    %v3306 = vmax.f32 %v2493, %v3242
    %v3307 = vmax.f32 %v2836, %v3243
    %v3308 = vmax.f32 %v3179, %v3244
    %v3309 = vpack.c.bf16 %v3249, %v3245
    %v3310 = vpack.c.bf16 %v3250, %v3246
    %v3311 = vpack.c.bf16 %v3251, %v3247
    %v3312 = vpack.c.bf16 %v3252, %v3248
    %v3313 = vpack.c.bf16 %v3257, %v3253
    %v3314 = vpack.c.bf16 %v3258, %v3254
    %v3315 = vpack.c.bf16 %v3259, %v3255
    %v3316 = vpack.c.bf16 %v3260, %v3256
    %v3317 = vpack.c.bf16 %v3265, %v3261
    %v3318 = vpack.c.bf16 %v3266, %v3262
    %v3319 = vpack.c.bf16 %v3267, %v3263
    %v3320 = vpack.c.bf16 %v3268, %v3264
    %v3321 = vpack.c.bf16 %v3273, %v3269
    %v3322 = vpack.c.bf16 %v3274, %v3270
    %v3323 = vpack.c.bf16 %v3275, %v3271
    %v3324 = vpack.c.bf16 %v3276, %v3272
    %v3325 = vpack.c.bf16 %v3281, %v3277
    %v3326 = vpack.c.bf16 %v3282, %v3278
    %v3327 = vpack.c.bf16 %v3283, %v3279
    %v3328 = vpack.c.bf16 %v3284, %v3280
    %v3329 = vpack.c.bf16 %v3289, %v3285
    %v3330 = vpack.c.bf16 %v3290, %v3286
    %v3331 = vpack.c.bf16 %v3291, %v3287
    %v3332 = vpack.c.bf16 %v3292, %v3288
    %v3333 = vpack.c.bf16 %v3297, %v3293
    %v3334 = vpack.c.bf16 %v3298, %v3294
    %v3335 = vpack.c.bf16 %v3299, %v3295
    %v3336 = vpack.c.bf16 %v3300, %v3296
    %v3337 = vpack.c.bf16 %v3305, %v3301
    %v3338 = vpack.c.bf16 %v3306, %v3302
    %v3339 = vpack.c.bf16 %v3307, %v3303
    %v3340 = vpack.c.bf16 %v3308, %v3304
    %v3341 = vld [vmem:[#allocation8] sm:$0xff]
    %v3342 = vld [vmem:[#allocation8 + $0x8] sm:$0xff]
    %v3343 = vld [vmem:[#allocation8 + $0x10] sm:$0xff]
    %v3344 = vld [vmem:[#allocation8 + $0x18] sm:$0xff]
    %v3345 = vld [vmem:[#allocation8 + $0x20] sm:$0xff]
    %v3346 = vld [vmem:[#allocation8 + $0x28] sm:$0xff]
    %v3347 = vld [vmem:[#allocation8 + $0x30] sm:$0xff]
    %v3348 = vld [vmem:[#allocation8 + $0x38] sm:$0xff]
    %v3349 = vld [vmem:[#allocation8 + $0x40] sm:$0xff]
    %v3350 = vld [vmem:[#allocation8 + $0x48] sm:$0xff]
    %v3351 = vld [vmem:[#allocation8 + $0x50] sm:$0xff]
    %v3352 = vld [vmem:[#allocation8 + $0x58] sm:$0xff]
    %v3353 = vld [vmem:[#allocation8 + $0x60] sm:$0xff]
    %v3354 = vld [vmem:[#allocation8 + $0x68] sm:$0xff]
    %v3355 = vld [vmem:[#allocation8 + $0x70] sm:$0xff]
    %v3356 = vld [vmem:[#allocation8 + $0x78] sm:$0xff]
    %v3357 = vld [vmem:[#allocation8 + $0x80] sm:$0xff]
    %v3358 = vld [vmem:[#allocation8 + $0x88] sm:$0xff]
    %v3359 = vld [vmem:[#allocation8 + $0x90] sm:$0xff]
    %v3360 = vld [vmem:[#allocation8 + $0x98] sm:$0xff]
    %v3361 = vld [vmem:[#allocation8 + $0xa0] sm:$0xff]
    %v3362 = vld [vmem:[#allocation8 + $0xa8] sm:$0xff]
    %v3363 = vld [vmem:[#allocation8 + $0xb0] sm:$0xff]
    %v3364 = vld [vmem:[#allocation8 + $0xb8] sm:$0xff]
    %v3365 = vld [vmem:[#allocation8 + $0xc0] sm:$0xff]
    %v3366 = vld [vmem:[#allocation8 + $0xc8] sm:$0xff]
    %v3367 = vld [vmem:[#allocation8 + $0xd0] sm:$0xff]
    %v3368 = vld [vmem:[#allocation8 + $0xd8] sm:$0xff]
    %v3369 = vld [vmem:[#allocation8 + $0xe0] sm:$0xff]
    %v3370 = vld [vmem:[#allocation8 + $0xe8] sm:$0xff]
    %v3371 = vld [vmem:[#allocation8 + $0xf0] sm:$0xff]
    %v3372 = vld [vmem:[#allocation8 + $0xf8] sm:$0xff]
    %v3373 = vld [vmem:[#allocation8 + $0x100] sm:$0xff]
    %v3374 = vld [vmem:[#allocation8 + $0x108] sm:$0xff]
    %v3375 = vld [vmem:[#allocation8 + $0x110] sm:$0xff]
    %v3376 = vld [vmem:[#allocation8 + $0x118] sm:$0xff]
    %v3377 = vld [vmem:[#allocation8 + $0x120] sm:$0xff]
    %v3378 = vld [vmem:[#allocation8 + $0x128] sm:$0xff]
    %v3379 = vld [vmem:[#allocation8 + $0x130] sm:$0xff]
    %v3380 = vld [vmem:[#allocation8 + $0x138] sm:$0xff]
    %v3381 = vld [vmem:[#allocation8 + $0x140] sm:$0xff]
    %v3382 = vld [vmem:[#allocation8 + $0x148] sm:$0xff]
    %v3383 = vld [vmem:[#allocation8 + $0x150] sm:$0xff]
    %v3384 = vld [vmem:[#allocation8 + $0x158] sm:$0xff]
    %v3385 = vld [vmem:[#allocation8 + $0x160] sm:$0xff]
    %v3386 = vld [vmem:[#allocation8 + $0x168] sm:$0xff]
    %v3387 = vld [vmem:[#allocation8 + $0x170] sm:$0xff]
    %v3388 = vld [vmem:[#allocation8 + $0x178] sm:$0xff]
    %v3389 = vld [vmem:[#allocation8 + $0x180] sm:$0xff]
    %v3390 = vld [vmem:[#allocation8 + $0x188] sm:$0xff]
    %v3391 = vld [vmem:[#allocation8 + $0x190] sm:$0xff]
    %v3392 = vld [vmem:[#allocation8 + $0x198] sm:$0xff]
    %v3393 = vld [vmem:[#allocation8 + $0x1a0] sm:$0xff]
    %v3394 = vld [vmem:[#allocation8 + $0x1a8] sm:$0xff]
    %v3395 = vld [vmem:[#allocation8 + $0x1b0] sm:$0xff]
    %v3396 = vld [vmem:[#allocation8 + $0x1b8] sm:$0xff]
    %v3397 = vld [vmem:[#allocation8 + $0x1c0] sm:$0xff]
    %v3398 = vld [vmem:[#allocation8 + $0x1c8] sm:$0xff]
    %v3399 = vld [vmem:[#allocation8 + $0x1d0] sm:$0xff]
    %v3400 = vld [vmem:[#allocation8 + $0x1d8] sm:$0xff]
    %v3401 = vld [vmem:[#allocation8 + $0x1e0] sm:$0xff]
    %v3402 = vld [vmem:[#allocation8 + $0x1e8] sm:$0xff]
    %v3403 = vld [vmem:[#allocation8 + $0x1f0] sm:$0xff]
    %v3404 = vld [vmem:[#allocation8 + $0x1f8] sm:$0xff]
    %v3405 = vld [vmem:[%s4] sm:$0x3]
    %v3407 = vperm.slane %v3405, 0
    %v3408 = vperm.slane %v3405, 1
    %v3475 = vunpack.c.l.b16 %v3341
    %v3476 = vunpack.c.h.b16 %v3341
    %v3477 = vunpack.c.l.b16 %v3342
    %v3478 = vunpack.c.h.b16 %v3342
    %v3479 = vunpack.c.l.b16 %v3343
    %v3480 = vunpack.c.h.b16 %v3343
    %v3481 = vunpack.c.l.b16 %v3344
    %v3482 = vunpack.c.h.b16 %v3344
    %v3483 = vunpack.c.l.b16 %v3345
    %v3484 = vunpack.c.h.b16 %v3345
    %v3485 = vunpack.c.l.b16 %v3346
    %v3486 = vunpack.c.h.b16 %v3346
    %v3487 = vunpack.c.l.b16 %v3347
    %v3488 = vunpack.c.h.b16 %v3347
    %v3489 = vunpack.c.l.b16 %v3348
    %v3490 = vunpack.c.h.b16 %v3348
    %v3491 = vunpack.c.l.b16 %v3349
    %v3492 = vunpack.c.h.b16 %v3349
    %v3493 = vunpack.c.l.b16 %v3350
    %v3494 = vunpack.c.h.b16 %v3350
    %v3495 = vunpack.c.l.b16 %v3351
    %v3496 = vunpack.c.h.b16 %v3351
    %v3497 = vunpack.c.l.b16 %v3352
    %v3498 = vunpack.c.h.b16 %v3352
    %v3499 = vunpack.c.l.b16 %v3353
    %v3500 = vunpack.c.h.b16 %v3353
    %v3501 = vunpack.c.l.b16 %v3354
    %v3502 = vunpack.c.h.b16 %v3354
    %v3503 = vunpack.c.l.b16 %v3355
    %v3504 = vunpack.c.h.b16 %v3355
    %v3505 = vunpack.c.l.b16 %v3356
    %v3506 = vunpack.c.h.b16 %v3356
    %v3507 = vunpack.c.l.b16 %v3357
    %v3508 = vunpack.c.h.b16 %v3357
    %v3509 = vunpack.c.l.b16 %v3358
    %v3510 = vunpack.c.h.b16 %v3358
    %v3511 = vunpack.c.l.b16 %v3359
    %v3512 = vunpack.c.h.b16 %v3359
    %v3513 = vunpack.c.l.b16 %v3360
    %v3514 = vunpack.c.h.b16 %v3360
    %v3515 = vunpack.c.l.b16 %v3361
    %v3516 = vunpack.c.h.b16 %v3361
    %v3517 = vunpack.c.l.b16 %v3362
    %v3518 = vunpack.c.h.b16 %v3362
    %v3519 = vunpack.c.l.b16 %v3363
    %v3520 = vunpack.c.h.b16 %v3363
    %v3521 = vunpack.c.l.b16 %v3364
    %v3522 = vunpack.c.h.b16 %v3364
    %v3523 = vunpack.c.l.b16 %v3365
    %v3524 = vunpack.c.h.b16 %v3365
    %v3525 = vunpack.c.l.b16 %v3366
    %v3526 = vunpack.c.h.b16 %v3366
    %v3527 = vunpack.c.l.b16 %v3367
    %v3528 = vunpack.c.h.b16 %v3367
    %v3529 = vunpack.c.l.b16 %v3368
    %v3530 = vunpack.c.h.b16 %v3368
    %v3531 = vunpack.c.l.b16 %v3369
    %v3532 = vunpack.c.h.b16 %v3369
    %v3533 = vunpack.c.l.b16 %v3370
    %v3534 = vunpack.c.h.b16 %v3370
    %v3535 = vunpack.c.l.b16 %v3371
    %v3536 = vunpack.c.h.b16 %v3371
    %v3537 = vunpack.c.l.b16 %v3372
    %v3538 = vunpack.c.h.b16 %v3372
    %v3539 = vunpack.c.l.b16 %v3373
    %v3540 = vunpack.c.h.b16 %v3373
    %v3541 = vunpack.c.l.b16 %v3374
    %v3542 = vunpack.c.h.b16 %v3374
    %v3543 = vunpack.c.l.b16 %v3375
    %v3544 = vunpack.c.h.b16 %v3375
    %v3545 = vunpack.c.l.b16 %v3376
    %v3546 = vunpack.c.h.b16 %v3376
    %v3547 = vunpack.c.l.b16 %v3377
    %v3548 = vunpack.c.h.b16 %v3377
    %v3549 = vunpack.c.l.b16 %v3378
    %v3550 = vunpack.c.h.b16 %v3378
    %v3551 = vunpack.c.l.b16 %v3379
    %v3552 = vunpack.c.h.b16 %v3379
    %v3553 = vunpack.c.l.b16 %v3380
    %v3554 = vunpack.c.h.b16 %v3380
    %v3555 = vunpack.c.l.b16 %v3381
    %v3556 = vunpack.c.h.b16 %v3381
    %v3557 = vunpack.c.l.b16 %v3382
    %v3558 = vunpack.c.h.b16 %v3382
    %v3559 = vunpack.c.l.b16 %v3383
    %v3560 = vunpack.c.h.b16 %v3383
    %v3561 = vunpack.c.l.b16 %v3384
    %v3562 = vunpack.c.h.b16 %v3384
    %v3563 = vunpack.c.l.b16 %v3385
    %v3564 = vunpack.c.h.b16 %v3385
    %v3565 = vunpack.c.l.b16 %v3386
    %v3566 = vunpack.c.h.b16 %v3386
    %v3567 = vunpack.c.l.b16 %v3387
    %v3568 = vunpack.c.h.b16 %v3387
    %v3569 = vunpack.c.l.b16 %v3388
    %v3570 = vunpack.c.h.b16 %v3388
    %v3571 = vunpack.c.l.b16 %v3389
    %v3572 = vunpack.c.h.b16 %v3389
    %v3573 = vunpack.c.l.b16 %v3390
    %v3574 = vunpack.c.h.b16 %v3390
    %v3575 = vunpack.c.l.b16 %v3391
    %v3576 = vunpack.c.h.b16 %v3391
    %v3577 = vunpack.c.l.b16 %v3392
    %v3578 = vunpack.c.h.b16 %v3392
    %v3579 = vunpack.c.l.b16 %v3393
    %v3580 = vunpack.c.h.b16 %v3393
    %v3581 = vunpack.c.l.b16 %v3394
    %v3582 = vunpack.c.h.b16 %v3394
    %v3583 = vunpack.c.l.b16 %v3395
    %v3584 = vunpack.c.h.b16 %v3395
    %v3585 = vunpack.c.l.b16 %v3396
    %v3586 = vunpack.c.h.b16 %v3396
    %v3587 = vunpack.c.l.b16 %v3397
    %v3588 = vunpack.c.h.b16 %v3397
    %v3589 = vunpack.c.l.b16 %v3398
    %v3590 = vunpack.c.h.b16 %v3398
    %v3591 = vunpack.c.l.b16 %v3399
    %v3592 = vunpack.c.h.b16 %v3399
    %v3593 = vunpack.c.l.b16 %v3400
    %v3594 = vunpack.c.h.b16 %v3400
    %v3595 = vunpack.c.l.b16 %v3401
    %v3596 = vunpack.c.h.b16 %v3401
    %v3597 = vunpack.c.l.b16 %v3402
    %v3598 = vunpack.c.h.b16 %v3402
    %v3599 = vunpack.c.l.b16 %v3403
    %v3600 = vunpack.c.h.b16 %v3403
    %v3601 = vunpack.c.l.b16 %v3404
    %v3602 = vunpack.c.h.b16 %v3404
    %v3603 = vpack.c.b16 %v3477, %v3475
    %v3604 = vpack.c.b16 %v3478, %v3476
    %v3605 = vpack.c.b16 %v3481, %v3479
    %v3606 = vpack.c.b16 %v3482, %v3480
    %v3607 = vpack.c.b16 %v3485, %v3483
    %v3608 = vpack.c.b16 %v3486, %v3484
    %v3609 = vpack.c.b16 %v3489, %v3487
    %v3610 = vpack.c.b16 %v3490, %v3488
    %v3611 = vpack.c.b16 %v3493, %v3491
    %v3612 = vpack.c.b16 %v3494, %v3492
    %v3613 = vpack.c.b16 %v3497, %v3495
    %v3614 = vpack.c.b16 %v3498, %v3496
    %v3615 = vpack.c.b16 %v3501, %v3499
    %v3616 = vpack.c.b16 %v3502, %v3500
    %v3617 = vpack.c.b16 %v3505, %v3503
    %v3618 = vpack.c.b16 %v3506, %v3504
    %v3619 = vpack.c.b16 %v3509, %v3507
    %v3620 = vpack.c.b16 %v3510, %v3508
    %v3621 = vpack.c.b16 %v3513, %v3511
    %v3622 = vpack.c.b16 %v3514, %v3512
    %v3623 = vpack.c.b16 %v3517, %v3515
    %v3624 = vpack.c.b16 %v3518, %v3516
    %v3625 = vpack.c.b16 %v3521, %v3519
    %v3626 = vpack.c.b16 %v3522, %v3520
    %v3627 = vpack.c.b16 %v3525, %v3523
    %v3628 = vpack.c.b16 %v3526, %v3524
    %v3629 = vpack.c.b16 %v3529, %v3527
    %v3630 = vpack.c.b16 %v3530, %v3528
    %v3631 = vpack.c.b16 %v3533, %v3531
    %v3632 = vpack.c.b16 %v3534, %v3532
    %v3633 = vpack.c.b16 %v3537, %v3535
    %v3634 = vpack.c.b16 %v3538, %v3536
    %v3635 = vpack.c.b16 %v3541, %v3539
    %v3636 = vpack.c.b16 %v3542, %v3540
    %v3637 = vpack.c.b16 %v3545, %v3543
    %v3638 = vpack.c.b16 %v3546, %v3544
    %v3639 = vpack.c.b16 %v3549, %v3547
    %v3640 = vpack.c.b16 %v3550, %v3548
    %v3641 = vpack.c.b16 %v3553, %v3551
    %v3642 = vpack.c.b16 %v3554, %v3552
    %v3643 = vpack.c.b16 %v3557, %v3555
    %v3644 = vpack.c.b16 %v3558, %v3556
    %v3645 = vpack.c.b16 %v3561, %v3559
    %v3646 = vpack.c.b16 %v3562, %v3560
    %v3647 = vpack.c.b16 %v3565, %v3563
    %v3648 = vpack.c.b16 %v3566, %v3564
    %v3649 = vpack.c.b16 %v3569, %v3567
    %v3650 = vpack.c.b16 %v3570, %v3568
    %v3651 = vpack.c.b16 %v3573, %v3571
    %v3652 = vpack.c.b16 %v3574, %v3572
    %v3653 = vpack.c.b16 %v3577, %v3575
    %v3654 = vpack.c.b16 %v3578, %v3576
    %v3655 = vpack.c.b16 %v3581, %v3579
    %v3656 = vpack.c.b16 %v3582, %v3580
    %v3657 = vpack.c.b16 %v3585, %v3583
    %v3658 = vpack.c.b16 %v3586, %v3584
    %v3659 = vpack.c.b16 %v3589, %v3587
    %v3660 = vpack.c.b16 %v3590, %v3588
    %v3661 = vpack.c.b16 %v3593, %v3591
    %v3662 = vpack.c.b16 %v3594, %v3592
    %v3663 = vpack.c.b16 %v3597, %v3595
    %v3664 = vpack.c.b16 %v3598, %v3596
    %v3665 = vpack.c.b16 %v3601, %v3599
    %v3666 = vpack.c.b16 %v3602, %v3600
    %3731 = vmatpush.bf16.msra.mxu0 %v3617
    %3732 = vmatpush.bf16.msra.mxu0 %v3615
    %3733 = vmatpush.bf16.msra.mxu0 %v3613
    %3734 = vmatpush.bf16.msra.mxu0 %v3611
    %3735 = vmatpush.bf16.msra.mxu0 %v3609
    %3736 = vmatpush.bf16.msra.mxu0 %v3607
    %3737 = vmatpush.bf16.msra.mxu0 %v3605
    %3738 = vmatpush.bf16.msra.mxu0 %v3603
    %3739 = vmatmul.bf16.gmra.mxu0 %v3309
    %v3740 = vpop.f32.mrf.mxu0
    %v3741 = vadd.f32 %v3407, %v3740
    %v3742 = vpop.f32.mrf.mxu0
    %v3743 = vadd.f32 %v3407, %v3742
    %3744 = vmatmul.bf16.gmra.mxu0 %v3313
    %v3745 = vpop.f32.mrf.mxu0
    %v3746 = vadd.f32 %v3407, %v3745
    %v3747 = vpop.f32.mrf.mxu0
    %v3748 = vadd.f32 %v3407, %v3747
    %3749 = vmatmul.bf16.gmra.mxu0 %v3317
    %v3750 = vpop.f32.mrf.mxu0
    %v3751 = vadd.f32 %v3407, %v3750
    %v3752 = vpop.f32.mrf.mxu0
    %v3753 = vadd.f32 %v3407, %v3752
    %3754 = vmatmul.bf16.gmra.mxu0 %v3321
    %v3755 = vpop.f32.mrf.mxu0
    %v3756 = vadd.f32 %v3407, %v3755
    %v3757 = vpop.f32.mrf.mxu0
    %v3758 = vadd.f32 %v3407, %v3757
    %3759 = vmatmul.bf16.gmra.mxu0 %v3325
    %v3760 = vpop.f32.mrf.mxu0
    %v3761 = vadd.f32 %v3407, %v3760
    %v3762 = vpop.f32.mrf.mxu0
    %v3763 = vadd.f32 %v3407, %v3762
    %3764 = vmatmul.bf16.gmra.mxu0 %v3329
    %v3765 = vpop.f32.mrf.mxu0
    %v3766 = vadd.f32 %v3407, %v3765
    %v3767 = vpop.f32.mrf.mxu0
    %v3768 = vadd.f32 %v3407, %v3767
    %3769 = vmatmul.bf16.gmra.mxu0 %v3333
    %v3770 = vpop.f32.mrf.mxu0
    %v3771 = vadd.f32 %v3407, %v3770
    %v3772 = vpop.f32.mrf.mxu0
    %v3773 = vadd.f32 %v3407, %v3772
    %3774 = vmatmul.bf16.gmra.mxu0 %v3337
    %v3775 = vpop.f32.mrf.mxu0
    %v3776 = vadd.f32 %v3407, %v3775
    %v3777 = vpop.f32.mrf.mxu0
    %v3778 = vadd.f32 %v3407, %v3777
    %3779 = vdwg.mxu0
    %3780 = vmatpush.bf16.msra.mxu0 %v3633
    %3781 = vmatpush.bf16.msra.mxu0 %v3631
    %3782 = vmatpush.bf16.msra.mxu0 %v3629
    %3783 = vmatpush.bf16.msra.mxu0 %v3627
    %3784 = vmatpush.bf16.msra.mxu0 %v3625
    %3785 = vmatpush.bf16.msra.mxu0 %v3623
    %3786 = vmatpush.bf16.msra.mxu0 %v3621
    %3787 = vmatpush.bf16.msra.mxu0 %v3619
    %3788 = vmatmul.bf16.gmra.mxu0 %v3310
    %v3789 = vpop.f32.mrf.mxu0
    %v3790 = vadd.f32 %v3741, %v3789
    %v3791 = vpop.f32.mrf.mxu0
    %v3792 = vadd.f32 %v3743, %v3791
    %3793 = vmatmul.bf16.gmra.mxu0 %v3314
    %v3794 = vpop.f32.mrf.mxu0
    %v3795 = vadd.f32 %v3746, %v3794
    %v3796 = vpop.f32.mrf.mxu0
    %v3797 = vadd.f32 %v3748, %v3796
    %3798 = vmatmul.bf16.gmra.mxu0 %v3318
    %v3799 = vpop.f32.mrf.mxu0
    %v3800 = vadd.f32 %v3751, %v3799
    %v3801 = vpop.f32.mrf.mxu0
    %v3802 = vadd.f32 %v3753, %v3801
    %3803 = vmatmul.bf16.gmra.mxu0 %v3322
    %v3804 = vpop.f32.mrf.mxu0
    %v3805 = vadd.f32 %v3756, %v3804
    %v3806 = vpop.f32.mrf.mxu0
    %v3807 = vadd.f32 %v3758, %v3806
    %3808 = vmatmul.bf16.gmra.mxu0 %v3326
    %v3809 = vpop.f32.mrf.mxu0
    %v3810 = vadd.f32 %v3761, %v3809
    %v3811 = vpop.f32.mrf.mxu0
    %v3812 = vadd.f32 %v3763, %v3811
    %3813 = vmatmul.bf16.gmra.mxu0 %v3330
    %v3814 = vpop.f32.mrf.mxu0
    %v3815 = vadd.f32 %v3766, %v3814
    %v3816 = vpop.f32.mrf.mxu0
    %v3817 = vadd.f32 %v3768, %v3816
    %3818 = vmatmul.bf16.gmra.mxu0 %v3334
    %v3819 = vpop.f32.mrf.mxu0
    %v3820 = vadd.f32 %v3771, %v3819
    %v3821 = vpop.f32.mrf.mxu0
    %v3822 = vadd.f32 %v3773, %v3821
    %3823 = vmatmul.bf16.gmra.mxu0 %v3338
    %v3824 = vpop.f32.mrf.mxu0
    %v3825 = vadd.f32 %v3776, %v3824
    %v3826 = vpop.f32.mrf.mxu0
    %v3827 = vadd.f32 %v3778, %v3826
    %3828 = vdwg.mxu0
    %3829 = vmatpush.bf16.msra.mxu0 %v3649
    %3830 = vmatpush.bf16.msra.mxu0 %v3647
    %3831 = vmatpush.bf16.msra.mxu0 %v3645
    %3832 = vmatpush.bf16.msra.mxu0 %v3643
    %3833 = vmatpush.bf16.msra.mxu0 %v3641
    %3834 = vmatpush.bf16.msra.mxu0 %v3639
    %3835 = vmatpush.bf16.msra.mxu0 %v3637
    %3836 = vmatpush.bf16.msra.mxu0 %v3635
    %3837 = vmatmul.bf16.gmra.mxu0 %v3311
    %v3838 = vpop.f32.mrf.mxu0
    %v3839 = vadd.f32 %v3790, %v3838
    %v3840 = vpop.f32.mrf.mxu0
    %v3841 = vadd.f32 %v3792, %v3840
    %3842 = vmatmul.bf16.gmra.mxu0 %v3315
    %v3843 = vpop.f32.mrf.mxu0
    %v3844 = vadd.f32 %v3795, %v3843
    %v3845 = vpop.f32.mrf.mxu0
    %v3846 = vadd.f32 %v3797, %v3845
    %3847 = vmatmul.bf16.gmra.mxu0 %v3319
    %v3848 = vpop.f32.mrf.mxu0
    %v3849 = vadd.f32 %v3800, %v3848
    %v3850 = vpop.f32.mrf.mxu0
    %v3851 = vadd.f32 %v3802, %v3850
    %3852 = vmatmul.bf16.gmra.mxu0 %v3323
    %v3853 = vpop.f32.mrf.mxu0
    %v3854 = vadd.f32 %v3805, %v3853
    %v3855 = vpop.f32.mrf.mxu0
    %v3856 = vadd.f32 %v3807, %v3855
    %3857 = vmatmul.bf16.gmra.mxu0 %v3327
    %v3858 = vpop.f32.mrf.mxu0
    %v3859 = vadd.f32 %v3810, %v3858
    %v3860 = vpop.f32.mrf.mxu0
    %v3861 = vadd.f32 %v3812, %v3860
    %3862 = vmatmul.bf16.gmra.mxu0 %v3331
    %v3863 = vpop.f32.mrf.mxu0
    %v3864 = vadd.f32 %v3815, %v3863
    %v3865 = vpop.f32.mrf.mxu0
    %v3866 = vadd.f32 %v3817, %v3865
    %3867 = vmatmul.bf16.gmra.mxu0 %v3335
    %v3868 = vpop.f32.mrf.mxu0
    %v3869 = vadd.f32 %v3820, %v3868
    %v3870 = vpop.f32.mrf.mxu0
    %v3871 = vadd.f32 %v3822, %v3870
    %3872 = vmatmul.bf16.gmra.mxu0 %v3339
    %v3873 = vpop.f32.mrf.mxu0
    %v3874 = vadd.f32 %v3825, %v3873
    %v3875 = vpop.f32.mrf.mxu0
    %v3876 = vadd.f32 %v3827, %v3875
    %3877 = vdwg.mxu0
    %3878 = vmatpush.bf16.msra.mxu0 %v3665
    %3879 = vmatpush.bf16.msra.mxu0 %v3663
    %3880 = vmatpush.bf16.msra.mxu0 %v3661
    %3881 = vmatpush.bf16.msra.mxu0 %v3659
    %3882 = vmatpush.bf16.msra.mxu0 %v3657
    %3883 = vmatpush.bf16.msra.mxu0 %v3655
    %3884 = vmatpush.bf16.msra.mxu0 %v3653
    %3885 = vmatpush.bf16.msra.mxu0 %v3651
    %3886 = vmatmul.bf16.gmra.mxu0 %v3312
    %v3887 = vpop.f32.mrf.mxu0
    %v3888 = vadd.f32 %v3839, %v3887
    %v3889 = vpop.f32.mrf.mxu0
    %v3890 = vadd.f32 %v3841, %v3889
    %3891 = vmatmul.bf16.gmra.mxu0 %v3316
    %v3892 = vpop.f32.mrf.mxu0
    %v3893 = vadd.f32 %v3844, %v3892
    %v3894 = vpop.f32.mrf.mxu0
    %v3895 = vadd.f32 %v3846, %v3894
    %3896 = vmatmul.bf16.gmra.mxu0 %v3320
    %v3897 = vpop.f32.mrf.mxu0
    %v3898 = vadd.f32 %v3849, %v3897
    %v3899 = vpop.f32.mrf.mxu0
    %v3900 = vadd.f32 %v3851, %v3899
    %3901 = vmatmul.bf16.gmra.mxu0 %v3324
    %v3902 = vpop.f32.mrf.mxu0
    %v3903 = vadd.f32 %v3854, %v3902
    %v3904 = vpop.f32.mrf.mxu0
    %v3905 = vadd.f32 %v3856, %v3904
    %3906 = vmatmul.bf16.gmra.mxu0 %v3328
    %v3907 = vpop.f32.mrf.mxu0
    %v3908 = vadd.f32 %v3859, %v3907
    %v3909 = vpop.f32.mrf.mxu0
    %v3910 = vadd.f32 %v3861, %v3909
    %3911 = vmatmul.bf16.gmra.mxu0 %v3332
    %v3912 = vpop.f32.mrf.mxu0
    %v3913 = vadd.f32 %v3864, %v3912
    %v3914 = vpop.f32.mrf.mxu0
    %v3915 = vadd.f32 %v3866, %v3914
    %3916 = vmatmul.bf16.gmra.mxu0 %v3336
    %v3917 = vpop.f32.mrf.mxu0
    %v3918 = vadd.f32 %v3869, %v3917
    %v3919 = vpop.f32.mrf.mxu0
    %v3920 = vadd.f32 %v3871, %v3919
    %3921 = vmatmul.bf16.gmra.mxu0 %v3340
    %v3922 = vpop.f32.mrf.mxu0
    %v3923 = vadd.f32 %v3874, %v3922
    %v3924 = vpop.f32.mrf.mxu0
    %v3925 = vadd.f32 %v3876, %v3924
    %3926 = vdwg.mxu0
    %3927 = vmatpush.bf16.msra.mxu0 %v3618
    %3928 = vmatpush.bf16.msra.mxu0 %v3616
    %3929 = vmatpush.bf16.msra.mxu0 %v3614
    %3930 = vmatpush.bf16.msra.mxu0 %v3612
    %3931 = vmatpush.bf16.msra.mxu0 %v3610
    %3932 = vmatpush.bf16.msra.mxu0 %v3608
    %3933 = vmatpush.bf16.msra.mxu0 %v3606
    %3934 = vmatpush.bf16.msra.mxu0 %v3604
    %3935 = vmatmul.bf16.gmra.mxu0 %v3309
    %v3936 = vpop.f32.mrf.mxu0
    %v3937 = vadd.f32 %v3408, %v3936
    %v3938 = vpop.f32.mrf.mxu0
    %v3939 = vadd.f32 %v3408, %v3938
    %3940 = vmatmul.bf16.gmra.mxu0 %v3313
    %v3941 = vpop.f32.mrf.mxu0
    %v3942 = vadd.f32 %v3408, %v3941
    %v3943 = vpop.f32.mrf.mxu0
    %v3944 = vadd.f32 %v3408, %v3943
    %3945 = vmatmul.bf16.gmra.mxu0 %v3317
    %v3946 = vpop.f32.mrf.mxu0
    %v3947 = vadd.f32 %v3408, %v3946
    %v3948 = vpop.f32.mrf.mxu0
    %v3949 = vadd.f32 %v3408, %v3948
    %3950 = vmatmul.bf16.gmra.mxu0 %v3321
    %v3951 = vpop.f32.mrf.mxu0
    %v3952 = vadd.f32 %v3408, %v3951
    %v3953 = vpop.f32.mrf.mxu0
    %v3954 = vadd.f32 %v3408, %v3953
    %3955 = vmatmul.bf16.gmra.mxu0 %v3325
    %v3956 = vpop.f32.mrf.mxu0
    %v3957 = vadd.f32 %v3408, %v3956
    %v3958 = vpop.f32.mrf.mxu0
    %v3959 = vadd.f32 %v3408, %v3958
    %3960 = vmatmul.bf16.gmra.mxu0 %v3329
    %v3961 = vpop.f32.mrf.mxu0
    %v3962 = vadd.f32 %v3408, %v3961
    %v3963 = vpop.f32.mrf.mxu0
    %v3964 = vadd.f32 %v3408, %v3963
    %3965 = vmatmul.bf16.gmra.mxu0 %v3333
    %v3966 = vpop.f32.mrf.mxu0
    %v3967 = vadd.f32 %v3408, %v3966
    %v3968 = vpop.f32.mrf.mxu0
    %v3969 = vadd.f32 %v3408, %v3968
    %3970 = vmatmul.bf16.gmra.mxu0 %v3337
    %v3971 = vpop.f32.mrf.mxu0
    %v3972 = vadd.f32 %v3408, %v3971
    %v3973 = vpop.f32.mrf.mxu0
    %v3974 = vadd.f32 %v3408, %v3973
    %3975 = vdwg.mxu0
    %3976 = vmatpush.bf16.msra.mxu0 %v3634
    %3977 = vmatpush.bf16.msra.mxu0 %v3632
    %3978 = vmatpush.bf16.msra.mxu0 %v3630
    %3979 = vmatpush.bf16.msra.mxu0 %v3628
    %3980 = vmatpush.bf16.msra.mxu0 %v3626
    %3981 = vmatpush.bf16.msra.mxu0 %v3624
    %3982 = vmatpush.bf16.msra.mxu0 %v3622
    %3983 = vmatpush.bf16.msra.mxu0 %v3620
    %3984 = vmatmul.bf16.gmra.mxu0 %v3310
    %v3985 = vpop.f32.mrf.mxu0
    %v3986 = vadd.f32 %v3937, %v3985
    %v3987 = vpop.f32.mrf.mxu0
    %v3988 = vadd.f32 %v3939, %v3987
    %3989 = vmatmul.bf16.gmra.mxu0 %v3314
    %v3990 = vpop.f32.mrf.mxu0
    %v3991 = vadd.f32 %v3942, %v3990
    %v3992 = vpop.f32.mrf.mxu0
    %v3993 = vadd.f32 %v3944, %v3992
    %3994 = vmatmul.bf16.gmra.mxu0 %v3318
    %v3995 = vpop.f32.mrf.mxu0
    %v3996 = vadd.f32 %v3947, %v3995
    %v3997 = vpop.f32.mrf.mxu0
    %v3998 = vadd.f32 %v3949, %v3997
    %3999 = vmatmul.bf16.gmra.mxu0 %v3322
    %v4000 = vpop.f32.mrf.mxu0
    %v4001 = vadd.f32 %v3952, %v4000
    %v4002 = vpop.f32.mrf.mxu0
    %v4003 = vadd.f32 %v3954, %v4002
    %4004 = vmatmul.bf16.gmra.mxu0 %v3326
    %v4005 = vpop.f32.mrf.mxu0
    %v4006 = vadd.f32 %v3957, %v4005
    %v4007 = vpop.f32.mrf.mxu0
    %v4008 = vadd.f32 %v3959, %v4007
    %4009 = vmatmul.bf16.gmra.mxu0 %v3330
    %v4010 = vpop.f32.mrf.mxu0
    %v4011 = vadd.f32 %v3962, %v4010
    %v4012 = vpop.f32.mrf.mxu0
    %v4013 = vadd.f32 %v3964, %v4012
    %4014 = vmatmul.bf16.gmra.mxu0 %v3334
    %v4015 = vpop.f32.mrf.mxu0
    %v4016 = vadd.f32 %v3967, %v4015
    %v4017 = vpop.f32.mrf.mxu0
    %v4018 = vadd.f32 %v3969, %v4017
    %4019 = vmatmul.bf16.gmra.mxu0 %v3338
    %v4020 = vpop.f32.mrf.mxu0
    %v4021 = vadd.f32 %v3972, %v4020
    %v4022 = vpop.f32.mrf.mxu0
    %v4023 = vadd.f32 %v3974, %v4022
    %4024 = vdwg.mxu0
    %4025 = vmatpush.bf16.msra.mxu0 %v3650
    %4026 = vmatpush.bf16.msra.mxu0 %v3648
    %4027 = vmatpush.bf16.msra.mxu0 %v3646
    %4028 = vmatpush.bf16.msra.mxu0 %v3644
    %4029 = vmatpush.bf16.msra.mxu0 %v3642
    %4030 = vmatpush.bf16.msra.mxu0 %v3640
    %4031 = vmatpush.bf16.msra.mxu0 %v3638
    %4032 = vmatpush.bf16.msra.mxu0 %v3636
    %4033 = vmatmul.bf16.gmra.mxu0 %v3311
    %v4034 = vpop.f32.mrf.mxu0
    %v4035 = vadd.f32 %v3986, %v4034
    %v4036 = vpop.f32.mrf.mxu0
    %v4037 = vadd.f32 %v3988, %v4036
    %4038 = vmatmul.bf16.gmra.mxu0 %v3315
    %v4039 = vpop.f32.mrf.mxu0
    %v4040 = vadd.f32 %v3991, %v4039
    %v4041 = vpop.f32.mrf.mxu0
    %v4042 = vadd.f32 %v3993, %v4041
    %4043 = vmatmul.bf16.gmra.mxu0 %v3319
    %v4044 = vpop.f32.mrf.mxu0
    %v4045 = vadd.f32 %v3996, %v4044
    %v4046 = vpop.f32.mrf.mxu0
    %v4047 = vadd.f32 %v3998, %v4046
    %4048 = vmatmul.bf16.gmra.mxu0 %v3323
    %v4049 = vpop.f32.mrf.mxu0
    %v4050 = vadd.f32 %v4001, %v4049
    %v4051 = vpop.f32.mrf.mxu0
    %v4052 = vadd.f32 %v4003, %v4051
    %4053 = vmatmul.bf16.gmra.mxu0 %v3327
    %v4054 = vpop.f32.mrf.mxu0
    %v4055 = vadd.f32 %v4006, %v4054
    %v4056 = vpop.f32.mrf.mxu0
    %v4057 = vadd.f32 %v4008, %v4056
    %4058 = vmatmul.bf16.gmra.mxu0 %v3331
    %v4059 = vpop.f32.mrf.mxu0
    %v4060 = vadd.f32 %v4011, %v4059
    %v4061 = vpop.f32.mrf.mxu0
    %v4062 = vadd.f32 %v4013, %v4061
    %4063 = vmatmul.bf16.gmra.mxu0 %v3335
    %v4064 = vpop.f32.mrf.mxu0
    %v4065 = vadd.f32 %v4016, %v4064
    %v4066 = vpop.f32.mrf.mxu0
    %v4067 = vadd.f32 %v4018, %v4066
    %4068 = vmatmul.bf16.gmra.mxu0 %v3339
    %v4069 = vpop.f32.mrf.mxu0
    %v4070 = vadd.f32 %v4021, %v4069
    %v4071 = vpop.f32.mrf.mxu0
    %v4072 = vadd.f32 %v4023, %v4071
    %4073 = vdwg.mxu0
    %4074 = vmatpush.bf16.msra.mxu0 %v3666
    %4075 = vmatpush.bf16.msra.mxu0 %v3664
    %4076 = vmatpush.bf16.msra.mxu0 %v3662
    %4077 = vmatpush.bf16.msra.mxu0 %v3660
    %4078 = vmatpush.bf16.msra.mxu0 %v3658
    %4079 = vmatpush.bf16.msra.mxu0 %v3656
    %4080 = vmatpush.bf16.msra.mxu0 %v3654
    %4081 = vmatpush.bf16.msra.mxu0 %v3652
    %4082 = vmatmul.bf16.gmra.mxu0 %v3312
    %v4083 = vpop.f32.mrf.mxu0
    %v4084 = vadd.f32 %v4035, %v4083
    %v4085 = vpop.f32.mrf.mxu0
    %v4086 = vadd.f32 %v4037, %v4085
    %4087 = vmatmul.bf16.gmra.mxu0 %v3316
    %v4088 = vpop.f32.mrf.mxu0
    %v4089 = vadd.f32 %v4040, %v4088
    %v4090 = vpop.f32.mrf.mxu0
    %v4091 = vadd.f32 %v4042, %v4090
    %4092 = vmatmul.bf16.gmra.mxu0 %v3320
    %v4093 = vpop.f32.mrf.mxu0
    %v4094 = vadd.f32 %v4045, %v4093
    %v4095 = vpop.f32.mrf.mxu0
    %v4096 = vadd.f32 %v4047, %v4095
    %4097 = vmatmul.bf16.gmra.mxu0 %v3324
    %v4098 = vpop.f32.mrf.mxu0
    %v4099 = vadd.f32 %v4050, %v4098
    %v4100 = vpop.f32.mrf.mxu0
    %v4101 = vadd.f32 %v4052, %v4100
    %4102 = vmatmul.bf16.gmra.mxu0 %v3328
    %v4103 = vpop.f32.mrf.mxu0
    %v4104 = vadd.f32 %v4055, %v4103
    %v4105 = vpop.f32.mrf.mxu0
    %v4106 = vadd.f32 %v4057, %v4105
    %4107 = vmatmul.bf16.gmra.mxu0 %v3332
    %v4108 = vpop.f32.mrf.mxu0
    %v4109 = vadd.f32 %v4060, %v4108
    %v4110 = vpop.f32.mrf.mxu0
    %v4111 = vadd.f32 %v4062, %v4110
    %4112 = vmatmul.bf16.gmra.mxu0 %v3336
    %v4113 = vpop.f32.mrf.mxu0
    %v4114 = vadd.f32 %v4065, %v4113
    %v4115 = vpop.f32.mrf.mxu0
    %v4116 = vadd.f32 %v4067, %v4115
    %4117 = vmatmul.bf16.gmra.mxu0 %v3340
    %v4118 = vpop.f32.mrf.mxu0
    %v4119 = vadd.f32 %v4070, %v4118
    %v4120 = vpop.f32.mrf.mxu0
    %v4121 = vadd.f32 %v4072, %v4120
    %4122 = vdwg.mxu0
    %v4123 = vmul.f32 %v3888, 0.2
    %v4124 = vmul.f32 %v4084, 0.2
    %v4125 = vmul.f32 %v3890, 0.2
    %v4126 = vmul.f32 %v4086, 0.2
    %v4127 = vmul.f32 %v3893, 0.2
    %v4128 = vmul.f32 %v4089, 0.2
    %v4129 = vmul.f32 %v3895, 0.2
    %v4130 = vmul.f32 %v4091, 0.2
    %v4131 = vmul.f32 %v3898, 0.2
    %v4132 = vmul.f32 %v4094, 0.2
    %v4133 = vmul.f32 %v3900, 0.2
    %v4134 = vmul.f32 %v4096, 0.2
    %v4135 = vmul.f32 %v3903, 0.2
    %v4136 = vmul.f32 %v4099, 0.2
    %v4137 = vmul.f32 %v3905, 0.2
    %v4138 = vmul.f32 %v4101, 0.2
    %v4139 = vmul.f32 %v3908, 0.2
    %v4140 = vmul.f32 %v4104, 0.2
    %v4141 = vmul.f32 %v3910, 0.2
    %v4142 = vmul.f32 %v4106, 0.2
    %v4143 = vmul.f32 %v3913, 0.2
    %v4144 = vmul.f32 %v4109, 0.2
    %v4145 = vmul.f32 %v3915, 0.2
    %v4146 = vmul.f32 %v4111, 0.2
    %v4147 = vmul.f32 %v3918, 0.2
    %v4148 = vmul.f32 %v4114, 0.2
    %v4149 = vmul.f32 %v3920, 0.2
    %v4150 = vmul.f32 %v4116, 0.2
    %v4151 = vmul.f32 %v3923, 0.2
    %v4152 = vmul.f32 %v4119, 0.2
    %v4153 = vmul.f32 %v3925, 0.2
    %v4154 = vmul.f32 %v4121, 0.2
    %v4155 = vmax.f32 %v3888, %v4123
    %v4156 = vmax.f32 %v4084, %v4124
    %v4157 = vmax.f32 %v3890, %v4125
    %v4158 = vmax.f32 %v4086, %v4126
    %v4159 = vmax.f32 %v3893, %v4127
    %v4160 = vmax.f32 %v4089, %v4128
    %v4161 = vmax.f32 %v3895, %v4129
    %v4162 = vmax.f32 %v4091, %v4130
    %v4163 = vmax.f32 %v3898, %v4131
    %v4164 = vmax.f32 %v4094, %v4132
    %v4165 = vmax.f32 %v3900, %v4133
    %v4166 = vmax.f32 %v4096, %v4134
    %v4167 = vmax.f32 %v3903, %v4135
    %v4168 = vmax.f32 %v4099, %v4136
    %v4169 = vmax.f32 %v3905, %v4137
    %v4170 = vmax.f32 %v4101, %v4138
    %v4171 = vmax.f32 %v3908, %v4139
    %v4172 = vmax.f32 %v4104, %v4140
    %v4173 = vmax.f32 %v3910, %v4141
    %v4174 = vmax.f32 %v4106, %v4142
    %v4175 = vmax.f32 %v3913, %v4143
    %v4176 = vmax.f32 %v4109, %v4144
    %v4177 = vmax.f32 %v3915, %v4145
    %v4178 = vmax.f32 %v4111, %v4146
    %v4179 = vmax.f32 %v3918, %v4147
    %v4180 = vmax.f32 %v4114, %v4148
    %v4181 = vmax.f32 %v3920, %v4149
    %v4182 = vmax.f32 %v4116, %v4150
    %v4183 = vmax.f32 %v3923, %v4151
    %v4184 = vmax.f32 %v4119, %v4152
    %v4185 = vmax.f32 %v3925, %v4153
    %v4186 = vmax.f32 %v4121, %v4154
    %v4187 = vpack.c.bf16 %v4157, %v4155
    %v4188 = vpack.c.bf16 %v4158, %v4156
    %v4189 = vpack.c.bf16 %v4161, %v4159
    %v4190 = vpack.c.bf16 %v4162, %v4160
    %v4191 = vpack.c.bf16 %v4165, %v4163
    %v4192 = vpack.c.bf16 %v4166, %v4164
    %v4193 = vpack.c.bf16 %v4169, %v4167
    %v4194 = vpack.c.bf16 %v4170, %v4168
    %v4195 = vpack.c.bf16 %v4173, %v4171
    %v4196 = vpack.c.bf16 %v4174, %v4172
    %v4197 = vpack.c.bf16 %v4177, %v4175
    %v4198 = vpack.c.bf16 %v4178, %v4176
    %v4199 = vpack.c.bf16 %v4181, %v4179
    %v4200 = vpack.c.bf16 %v4182, %v4180
    %v4201 = vpack.c.bf16 %v4185, %v4183
    %v4202 = vpack.c.bf16 %v4186, %v4184
    %v4203 = vld [vmem:[#allocation10] sm:$0xf]
    %v4204 = vld [vmem:[#allocation10 + $0x4] sm:$0xf]
    %v4205 = vld [vmem:[#allocation10 + $0x8] sm:$0xf]
    %v4206 = vld [vmem:[#allocation10 + $0xc] sm:$0xf]
    %v4207 = vld [vmem:[#allocation10 + $0x10] sm:$0xf]
    %v4208 = vld [vmem:[#allocation10 + $0x14] sm:$0xf]
    %v4209 = vld [vmem:[#allocation10 + $0x18] sm:$0xf]
    %v4210 = vld [vmem:[#allocation10 + $0x1c] sm:$0xf]
    %v4211 = vld [vmem:[#allocation10 + $0x20] sm:$0xf]
    %v4212 = vld [vmem:[#allocation10 + $0x24] sm:$0xf]
    %v4213 = vld [vmem:[#allocation10 + $0x28] sm:$0xf]
    %v4214 = vld [vmem:[#allocation10 + $0x2c] sm:$0xf]
    %v4215 = vld [vmem:[#allocation10 + $0x30] sm:$0xf]
    %v4216 = vld [vmem:[#allocation10 + $0x34] sm:$0xf]
    %v4217 = vld [vmem:[#allocation10 + $0x38] sm:$0xf]
    %v4218 = vld [vmem:[#allocation10 + $0x3c] sm:$0xf]
    %v4219 = vld [vmem:[#allocation10 + $0x40] sm:$0xf]
    %v4220 = vld [vmem:[#allocation10 + $0x44] sm:$0xf]
    %v4221 = vld [vmem:[#allocation10 + $0x48] sm:$0xf]
    %v4222 = vld [vmem:[#allocation10 + $0x4c] sm:$0xf]
    %v4223 = vld [vmem:[#allocation10 + $0x50] sm:$0xf]
    %v4224 = vld [vmem:[#allocation10 + $0x54] sm:$0xf]
    %v4225 = vld [vmem:[#allocation10 + $0x58] sm:$0xf]
    %v4226 = vld [vmem:[#allocation10 + $0x5c] sm:$0xf]
    %v4227 = vld [vmem:[#allocation10 + $0x60] sm:$0xf]
    %v4228 = vld [vmem:[#allocation10 + $0x64] sm:$0xf]
    %v4229 = vld [vmem:[#allocation10 + $0x68] sm:$0xf]
    %v4230 = vld [vmem:[#allocation10 + $0x6c] sm:$0xf]
    %v4231 = vld [vmem:[#allocation10 + $0x70] sm:$0xf]
    %v4232 = vld [vmem:[#allocation10 + $0x74] sm:$0xf]
    %v4233 = vld [vmem:[#allocation10 + $0x78] sm:$0xf]
    %v4234 = vld [vmem:[#allocation10 + $0x7c] sm:$0xf]
    %v4235 = vld [vmem:[%s6] sm:$0x1]
    %v4237 = vperm.slane %v4235, 0
    %v4271 = vunpack.c.l.b16 %v4203
    %v4272 = vunpack.c.l.b16 %v4204
    %v4273 = vunpack.c.l.b16 %v4205
    %v4274 = vunpack.c.l.b16 %v4206
    %v4275 = vunpack.c.l.b16 %v4207
    %v4276 = vunpack.c.l.b16 %v4208
    %v4277 = vunpack.c.l.b16 %v4209
    %v4278 = vunpack.c.l.b16 %v4210
    %v4279 = vunpack.c.l.b16 %v4211
    %v4280 = vunpack.c.l.b16 %v4212
    %v4281 = vunpack.c.l.b16 %v4213
    %v4282 = vunpack.c.l.b16 %v4214
    %v4283 = vunpack.c.l.b16 %v4215
    %v4284 = vunpack.c.l.b16 %v4216
    %v4285 = vunpack.c.l.b16 %v4217
    %v4286 = vunpack.c.l.b16 %v4218
    %v4287 = vunpack.c.l.b16 %v4219
    %v4288 = vunpack.c.l.b16 %v4220
    %v4289 = vunpack.c.l.b16 %v4221
    %v4290 = vunpack.c.l.b16 %v4222
    %v4291 = vunpack.c.l.b16 %v4223
    %v4292 = vunpack.c.l.b16 %v4224
    %v4293 = vunpack.c.l.b16 %v4225
    %v4294 = vunpack.c.l.b16 %v4226
    %v4295 = vunpack.c.l.b16 %v4227
    %v4296 = vunpack.c.l.b16 %v4228
    %v4297 = vunpack.c.l.b16 %v4229
    %v4298 = vunpack.c.l.b16 %v4230
    %v4299 = vunpack.c.l.b16 %v4231
    %v4300 = vunpack.c.l.b16 %v4232
    %v4301 = vunpack.c.l.b16 %v4233
    %v4302 = vunpack.c.l.b16 %v4234
    %v4303 = vpack.c.b16 %v4272, %v4271
    %v4304 = vpack.c.b16 %v4274, %v4273
    %v4305 = vpack.c.b16 %v4276, %v4275
    %v4306 = vpack.c.b16 %v4278, %v4277
    %v4307 = vpack.c.b16 %v4280, %v4279
    %v4308 = vpack.c.b16 %v4282, %v4281
    %v4309 = vpack.c.b16 %v4284, %v4283
    %v4310 = vpack.c.b16 %v4286, %v4285
    %v4311 = vpack.c.b16 %v4288, %v4287
    %v4312 = vpack.c.b16 %v4290, %v4289
    %v4313 = vpack.c.b16 %v4292, %v4291
    %v4314 = vpack.c.b16 %v4294, %v4293
    %v4315 = vpack.c.b16 %v4296, %v4295
    %v4316 = vpack.c.b16 %v4298, %v4297
    %v4317 = vpack.c.b16 %v4300, %v4299
    %v4318 = vpack.c.b16 %v4302, %v4301
    %4335 = vmatpush.bf16.msra.mxu0 %v4310
    %4336 = vmatpush.bf16.msra.mxu0 %v4309
    %4337 = vmatpush.bf16.msra.mxu0 %v4308
    %4338 = vmatpush.bf16.msra.mxu0 %v4307
    %4339 = vmatpush.bf16.msra.mxu0 %v4306
    %4340 = vmatpush.bf16.msra.mxu0 %v4305
    %4341 = vmatpush.bf16.msra.mxu0 %v4304
    %4342 = vmatpush.bf16.msra.mxu0 %v4303
    %4343 = vmatmul.bf16.gmra.mxu0 %v4187
    %v4344 = vpop.f32.mrf.mxu0
    %v4345 = vadd.f32 %v4237, %v4344
    %v4346 = vpop.f32.mrf.mxu0
    %v4347 = vadd.f32 %v4237, %v4346
    %4348 = vmatmul.bf16.gmra.mxu0 %v4189
    %v4349 = vpop.f32.mrf.mxu0
    %v4350 = vadd.f32 %v4237, %v4349
    %v4351 = vpop.f32.mrf.mxu0
    %v4352 = vadd.f32 %v4237, %v4351
    %4353 = vmatmul.bf16.gmra.mxu0 %v4191
    %v4354 = vpop.f32.mrf.mxu0
    %v4355 = vadd.f32 %v4237, %v4354
    %v4356 = vpop.f32.mrf.mxu0
    %v4357 = vadd.f32 %v4237, %v4356
    %4358 = vmatmul.bf16.gmra.mxu0 %v4193
    %v4359 = vpop.f32.mrf.mxu0
    %v4360 = vadd.f32 %v4237, %v4359
    %v4361 = vpop.f32.mrf.mxu0
    %v4362 = vadd.f32 %v4237, %v4361
    %4363 = vmatmul.bf16.gmra.mxu0 %v4195
    %v4364 = vpop.f32.mrf.mxu0
    %v4365 = vadd.f32 %v4237, %v4364
    %v4366 = vpop.f32.mrf.mxu0
    %v4367 = vadd.f32 %v4237, %v4366
    %4368 = vmatmul.bf16.gmra.mxu0 %v4197
    %v4369 = vpop.f32.mrf.mxu0
    %v4370 = vadd.f32 %v4237, %v4369
    %v4371 = vpop.f32.mrf.mxu0
    %v4372 = vadd.f32 %v4237, %v4371
    %4373 = vmatmul.bf16.gmra.mxu0 %v4199
    %v4374 = vpop.f32.mrf.mxu0
    %v4375 = vadd.f32 %v4237, %v4374
    %v4376 = vpop.f32.mrf.mxu0
    %v4377 = vadd.f32 %v4237, %v4376
    %4378 = vmatmul.bf16.gmra.mxu0 %v4201
    %v4379 = vpop.f32.mrf.mxu0
    %v4380 = vadd.f32 %v4237, %v4379
    %v4381 = vpop.f32.mrf.mxu0
    %v4382 = vadd.f32 %v4237, %v4381
    %4383 = vdwg.mxu0
    %4384 = vmatpush.bf16.msra.mxu0 %v4318
    %4385 = vmatpush.bf16.msra.mxu0 %v4317
    %4386 = vmatpush.bf16.msra.mxu0 %v4316
    %4387 = vmatpush.bf16.msra.mxu0 %v4315
    %4388 = vmatpush.bf16.msra.mxu0 %v4314
    %4389 = vmatpush.bf16.msra.mxu0 %v4313
    %4390 = vmatpush.bf16.msra.mxu0 %v4312
    %4391 = vmatpush.bf16.msra.mxu0 %v4311
    %4392 = vmatmul.bf16.gmra.mxu0 %v4188
    %v4393 = vpop.f32.mrf.mxu0
    %v4394 = vadd.f32 %v4345, %v4393
    %v4395 = vpop.f32.mrf.mxu0
    %v4396 = vadd.f32 %v4347, %v4395
    %4397 = vmatmul.bf16.gmra.mxu0 %v4190
    %v4398 = vpop.f32.mrf.mxu0
    %v4399 = vadd.f32 %v4350, %v4398
    %v4400 = vpop.f32.mrf.mxu0
    %v4401 = vadd.f32 %v4352, %v4400
    %4402 = vmatmul.bf16.gmra.mxu0 %v4192
    %v4403 = vpop.f32.mrf.mxu0
    %v4404 = vadd.f32 %v4355, %v4403
    %v4405 = vpop.f32.mrf.mxu0
    %v4406 = vadd.f32 %v4357, %v4405
    %4407 = vmatmul.bf16.gmra.mxu0 %v4194
    %v4408 = vpop.f32.mrf.mxu0
    %v4409 = vadd.f32 %v4360, %v4408
    %v4410 = vpop.f32.mrf.mxu0
    %v4411 = vadd.f32 %v4362, %v4410
    %4412 = vmatmul.bf16.gmra.mxu0 %v4196
    %v4413 = vpop.f32.mrf.mxu0
    %v4414 = vadd.f32 %v4365, %v4413
    %v4415 = vpop.f32.mrf.mxu0
    %v4416 = vadd.f32 %v4367, %v4415
    %4417 = vmatmul.bf16.gmra.mxu0 %v4198
    %v4418 = vpop.f32.mrf.mxu0
    %v4419 = vadd.f32 %v4370, %v4418
    %v4420 = vpop.f32.mrf.mxu0
    %v4421 = vadd.f32 %v4372, %v4420
    %4422 = vmatmul.bf16.gmra.mxu0 %v4200
    %v4423 = vpop.f32.mrf.mxu0
    %v4424 = vadd.f32 %v4375, %v4423
    %v4425 = vpop.f32.mrf.mxu0
    %v4426 = vadd.f32 %v4377, %v4425
    %4427 = vmatmul.bf16.gmra.mxu0 %v4202
    %v4428 = vpop.f32.mrf.mxu0
    %v4429 = vadd.f32 %v4380, %v4428
    %v4430 = vpop.f32.mrf.mxu0
    %v4431 = vadd.f32 %v4382, %v4430
    %4432 = vdwg.mxu0
    %v4433 = vlaneseq
    %v4434 = vshrl.u32 %v4433, 7
    %v4435 = vadd.s32 %v4434, 8
    %v4436 = vadd.s32 %v4434, 16
    %v4437 = vadd.s32 %v4434, 24
    %v4438 = vadd.s32 %v4434, 32
    %v4439 = vadd.s32 %v4434, 40
    %v4440 = vadd.s32 %v4434, 48
    %v4441 = vadd.s32 %v4434, 56
    %v4442 = vadd.s32 %v4434, 64
    %v4443 = vadd.s32 %v4434, 72
    %v4444 = vadd.s32 %v4434, 80
    %v4445 = vadd.s32 %v4434, 88
    %v4446 = vadd.s32 %v4434, 96
    %v4447 = vadd.s32 %v4434, 104
    %v4448 = vadd.s32 %v4434, 112
    %v4449 = vadd.s32 %v4434, 120
    %v4450 = vlaneseq
    %v4451 = vand.u32 %v4450, 127
    %vm4452 = vcmp.eq.s32.totalorder %v4434, %v4451
    %vm4453 = vcmp.eq.s32.totalorder %v4435, %v4451
    %vm4454 = vcmp.eq.s32.totalorder %v4436, %v4451
    %vm4455 = vcmp.eq.s32.totalorder %v4437, %v4451
    %vm4456 = vcmp.eq.s32.totalorder %v4438, %v4451
    %vm4457 = vcmp.eq.s32.totalorder %v4439, %v4451
    %vm4458 = vcmp.eq.s32.totalorder %v4440, %v4451
    %vm4459 = vcmp.eq.s32.totalorder %v4441, %v4451
    %vm4460 = vcmp.eq.s32.totalorder %v4442, %v4451
    %vm4461 = vcmp.eq.s32.totalorder %v4443, %v4451
    %vm4462 = vcmp.eq.s32.totalorder %v4444, %v4451
    %vm4463 = vcmp.eq.s32.totalorder %v4445, %v4451
    %vm4464 = vcmp.eq.s32.totalorder %v4446, %v4451
    %vm4465 = vcmp.eq.s32.totalorder %v4447, %v4451
    %vm4466 = vcmp.eq.s32.totalorder %v4448, %v4451
    %vm4467 = vcmp.eq.s32.totalorder %v4449, %v4451
    %v4468 = vsel %vm4452, %v4394, 0.0
    %v4469 = vsel %vm4453, %v4396, 0.0
    %v4470 = vsel %vm4454, %v4399, 0.0
    %v4471 = vsel %vm4455, %v4401, 0.0
    %v4472 = vsel %vm4456, %v4404, 0.0
    %v4473 = vsel %vm4457, %v4406, 0.0
    %v4474 = vsel %vm4458, %v4409, 0.0
    %v4475 = vsel %vm4459, %v4411, 0.0
    %v4476 = vsel %vm4460, %v4414, 0.0
    %v4477 = vsel %vm4461, %v4416, 0.0
    %v4478 = vsel %vm4462, %v4419, 0.0
    %v4479 = vsel %vm4463, %v4421, 0.0
    %v4480 = vsel %vm4464, %v4424, 0.0
    %v4481 = vsel %vm4465, %v4426, 0.0
    %v4482 = vsel %vm4466, %v4429, 0.0
    %v4483 = vsel %vm4467, %v4431, 0.0
    %v4484 = vadd.f32 %v4468, %v4469
    %v4485 = vadd.f32 %v4484, %v4470
    %v4486 = vadd.f32 %v4485, %v4471
    %v4487 = vadd.f32 %v4486, %v4472
    %v4488 = vadd.f32 %v4487, %v4473
    %v4489 = vadd.f32 %v4488, %v4474
    %v4490 = vadd.f32 %v4489, %v4475
    %v4491 = vadd.f32 %v4490, %v4476
    %v4492 = vadd.f32 %v4491, %v4477
    %v4493 = vadd.f32 %v4492, %v4478
    %v4494 = vadd.f32 %v4493, %v4479
    %v4495 = vadd.f32 %v4494, %v4480
    %v4496 = vadd.f32 %v4495, %v4481
    %v4497 = vadd.f32 %v4496, %v4482
    %v4498 = vadd.f32 %v4497, %v4483
    %v4499 = vrot.slane %v4498, 4
    %v4500 = vadd.f32 %v4498, %v4499
    %v4501 = vrot.slane %v4500, 2
    %v4502 = vadd.f32 %v4500, %v4501
    %v4503 = vrot.slane %v4502, 1
    %v4504 = vadd.f32 %v4502, %v4503
    %v4505 = vxor.u32 %v4504, 2147483648
    %v4506 = vmul.f32 %v4505, 1.442695
    %v4507 = vpow.pop %v4506
    %v4508 = vadd.f32 %v4507, 1.0
    %v4509 = vrcp.pop %v4508
    %v4510 = vmul.f32 %v4508, %v4509
    %v4511 = vsub.f32 1.0, %v4510
    %v4512 = vmul.f32 %v4509, %v4511
    %v4513 = vadd.f32 %v4509, %v4512
    %vm4514 = vweird.f32 %v4508
    %vm4515 = vweird.f32 %v4509
    %vm4516 = vmor %vm4514, %vm4515
    %v4517 = vsel %vm4516, %v4509, %v4513
    %v4518 = vand.u32 2147483647, %v4508
    %vm4519 = vcmp.eq.f32.partialorder %v4518, 8.507059e+37
    %v4520 = vand.u32 %v4508, 2147483648
    %v4521 = vor.u32 1.1754944e-38, %v4520
    %v4522 = vsel %vm4519, %v4521, %v4517
    %v4523 = vmul.f32 1.0, %v4522
    %4524 = vst [vmem:[#allocation11] sm:$0x1] %v4523
    // Predicated region
    $region50: #{tpu_custom_call.1} parent=1 // pred_check
      _
    $region51: #{tpu_custom_call.1} parent=1 // pred_check_branch
      %4526 = sbr.rel (0) target = $region53
    $region52: #{tpu_custom_call.1} parent=1 // pred_region
      %4528 = vsyncadd [#allocation4], 0
      %s4530 = sshll.u32 [#allocation11], 4
      %s4531 = int_to_ptr.vmem [resolvable:$true] %s4530
      %s4532 = sshll.u32 %s7, 4
      %s4533 = int_to_ptr.hbm [resolvable:$true] %s4532
      %4535 = dma.vmem_to_hbm [thread:$0]  %s4531, 16, %s4533, [#allocation4]
    $region53: #{tpu_custom_call.1} parent=1 // pred_fallthru
      _
    // Predicated region
    $region54: #{tpu_custom_call.1} parent=1 // pred_check
      _
    $region55: #{tpu_custom_call.1} parent=1 // pred_check_branch
      %4537 = sbr.rel (0) target = $region57
    $region56: #{tpu_custom_call.1} parent=1 // pred_region
      %4539 = dma.done [#allocation4], 16
    $region57: #{tpu_custom_call.1} parent=1 // pred_fallthru
      _
    %4540 = vsyncpa [#allocation3], 1
    %4541 = vsyncpa [#allocation6], 1
    %4542 = vsyncpa [#allocation9], 1
    %4543 = vsyncpa [#allocation4], 1

</llo_original>
